<compile_context>
chip_gen: v5e
topology: v5e:2x2
jax: 0.10.0
libtpu: 0.0.40
codegen_flags: <defaults>
</compile_context>

<pallas_src>
import jax
import jax.numpy as jnp
from jax.experimental import pallas as pl
from jax.experimental.pallas import tpu as pltpu


_VMEM_LIMIT_BYTES = 32 * 1024 * 1024   # explicit scoped-VMEM request (v7x-safe)
_VMEM_BUDGET_BYTES = 20 * 1024 * 1024  # headroom under the limit for our blocks


# ----------------------------- kernels ------------------------------------ #

def _fused_kernel(x_ref, w1_ref, b1_ref, w2_ref, b2_ref, out_ref):
    # linear1: bf16 operands on the MXU, f32 accumulation, f32 bias+ReLU.
    h = jnp.dot(x_ref[...], w1_ref[...], preferred_element_type=jnp.float32)
    h = jnp.maximum(h + b1_ref[...], 0.0)
    # Dropout(0.1) = identity in eval mode.
    # linear2: cast the (tiny) hidden activation to bf16 for the MXU.
    y = jnp.dot(h.astype(jnp.bfloat16), w2_ref[...],
                preferred_element_type=jnp.float32)
    out_ref[...] = (y + b2_ref[...]).astype(out_ref.dtype)


def _hidden_kernel(x_ref, w1_ref, b1_ref, h_ref):
    h = jnp.dot(x_ref[...], w1_ref[...], preferred_element_type=jnp.float32)
    h = jnp.maximum(h + b1_ref[...], 0.0)       # f32 epilogue
    # Dropout(0.1) = identity in eval mode.
    h_ref[...] = h.astype(h_ref.dtype)          # bf16 for linear2's MXU


def _linear2_kernel(h_ref, w2_ref, b2_ref, out_ref):
    y = jnp.dot(h_ref[...], w2_ref[...], preferred_element_type=jnp.float32)
    out_ref[...] = (y + b2_ref[...]).astype(out_ref.dtype)


# --------------------------- VMEM budgeting -------------------------------- #

def _fused_block_bytes(B, d_in, hidden, n_out):
    # Double-buffered estimate of every block in the fused kernel.
    x = B * d_in * 2
    w1 = d_in * hidden * 2
    b1 = hidden * 4
    w2 = hidden * n_out * 2
    b2 = n_out * 4
    out = B * n_out * 4
    return 2 * (x + w1 + b1 + w2 + b2 + out)


def _linear2_block_bytes(B, hidden, tile_n):
    w2 = hidden * tile_n * 2          # bf16 tile
    b2 = tile_n * 4                   # f32 tile
    out = B * tile_n * 4              # f32 tile
    h = B * hidden * 2                # bf16, constant index -> resident
    return 2 * (w2 + b2 + out) + 2 * h


def _choose_tile_n(B, hidden, n_out, budget):
    # Largest divisor of n_out that is a multiple of 128 (or n_out itself)
    # whose linear2 block set fits the VMEM budget.
    candidates = [d for d in range(n_out, 0, -1)
                  if n_out % d == 0 and (d % 128 == 0 or d == n_out)]
    for d in candidates:
        if _linear2_block_bytes(B, hidden, d) <= budget:
            return d
    return candidates[-1]


# ------------------------------- wrapper ----------------------------------- #

def mapping_model_forward(x, w1, b1, w2, b2, *, max_length, output_dim,
                          tile_n=None):
    """x: (B, input_dim) f32; W stored as (in, out). Returns
    (B, max_length, output_dim) f32 (eval-mode forward)."""
    B, d_in = x.shape
    hidden = w1.shape[1]                 # output_dim * 2
    n_out = w2.shape[1]                  # output_dim * max_length
    assert n_out == max_length * output_dim

    # bf16 matmul operands (halves dominant HBM traffic); f32 biases/epilogue.
    x_bf = x.astype(jnp.bfloat16)
    w1_bf = w1.astype(jnp.bfloat16)
    w2_bf = w2.astype(jnp.bfloat16)
    b1_2d = b1.reshape(1, hidden).astype(jnp.float32)
    b2_2d = b2.reshape(1, n_out).astype(jnp.float32)

    compiler_params = pltpu.CompilerParams(
        dimension_semantics=("parallel",),
        vmem_limit_bytes=_VMEM_LIMIT_BYTES,
    )

    use_fused = (tile_n is None and
                 _fused_block_bytes(B, d_in, hidden, n_out) <= _VMEM_BUDGET_BYTES)

    if use_fused:
        # Single grid step: whole forward fused, lane-dense (B, n_out) store.
        flops = 2 * B * (d_in * hidden + hidden * n_out)
        bytes_accessed = (B * d_in * 2 + d_in * hidden * 2 + hidden * 4
                          + hidden * n_out * 2 + n_out * 4 + B * n_out * 4)
        out_flat = pl.pallas_call(
            _fused_kernel,
            out_shape=jax.ShapeDtypeStruct((B, n_out), jnp.float32),
            grid_spec=pltpu.PrefetchScalarGridSpec(
                num_scalar_prefetch=0,
                grid=(1,),
                in_specs=[
                    pl.BlockSpec((B, d_in), lambda j: (0, 0)),       # x
                    pl.BlockSpec((d_in, hidden), lambda j: (0, 0)),  # W1
                    pl.BlockSpec((1, hidden), lambda j: (0, 0)),     # b1
                    pl.BlockSpec((hidden, n_out), lambda j: (0, 0)), # W2
                    pl.BlockSpec((1, n_out), lambda j: (0, 0)),      # b2
                ],
                out_specs=pl.BlockSpec((B, n_out), lambda j: (0, 0)),
            ),
            compiler_params=compiler_params,
            cost_estimate=pl.CostEstimate(
                flops=flops, transcendentals=0, bytes_accessed=bytes_accessed),
        )(x_bf, w1_bf, b1_2d, w2_bf, b2_2d)
        return out_flat.reshape(B, max_length, output_dim)

    # ---- Tiled path: tiny hidden kernel + "parallel" linear2 over n_out ---- #
    if tile_n is None:
        tile_n = _choose_tile_n(B, hidden, n_out, _VMEM_BUDGET_BYTES)
    assert n_out % tile_n == 0

    h_bf = pl.pallas_call(
        _hidden_kernel,
        out_shape=jax.ShapeDtypeStruct((B, hidden), jnp.bfloat16),
        grid_spec=pltpu.PrefetchScalarGridSpec(
            num_scalar_prefetch=0,
            grid=(1,),
            in_specs=[
                pl.BlockSpec((B, d_in), lambda j: (0, 0)),
                pl.BlockSpec((d_in, hidden), lambda j: (0, 0)),
                pl.BlockSpec((1, hidden), lambda j: (0, 0)),
            ],
            out_specs=pl.BlockSpec((B, hidden), lambda j: (0, 0)),
        ),
        compiler_params=compiler_params,
        cost_estimate=pl.CostEstimate(
            flops=2 * B * d_in * hidden, transcendentals=0,
            bytes_accessed=(B * d_in * 2 + d_in * hidden * 2
                            + hidden * 4 + B * hidden * 2)),
    )(x_bf, w1_bf, b1_2d)

    # No cross-iteration dependency -> "parallel" axis (v7x dual-TC friendly).
    out_flat = pl.pallas_call(
        _linear2_kernel,
        out_shape=jax.ShapeDtypeStruct((B, n_out), jnp.float32),
        grid_spec=pltpu.PrefetchScalarGridSpec(
            num_scalar_prefetch=0,
            grid=(n_out // tile_n,),
            in_specs=[
                pl.BlockSpec((B, hidden), lambda j: (0, 0)),        # h resident
                pl.BlockSpec((hidden, tile_n), lambda j: (0, j)),   # W2 tile
                pl.BlockSpec((1, tile_n), lambda j: (0, j)),        # b2 tile
            ],
            out_specs=pl.BlockSpec((B, tile_n), lambda j: (0, j)),
        ),
        compiler_params=compiler_params,
        cost_estimate=pl.CostEstimate(
            flops=2 * B * hidden * n_out, transcendentals=0,
            bytes_accessed=(B * hidden * 2 + hidden * n_out * 2
                            + n_out * 4 + B * n_out * 4)),
    )(h_bf, w2_bf, b2_2d)

    return out_flat.reshape(B, max_length, output_dim)


# ------------------------------- test -------------------------------------- #

def _init_linear(key, fan_in, fan_out):
    # PyTorch nn.Linear default init: U(-1/sqrt(fan_in), 1/sqrt(fan_in)),
    # weight stored here as (fan_in, fan_out) (transposed vs. torch).
    kw, kb = jax.random.split(key)
    bound = 1.0 / (fan_in ** 0.5)
    w = jax.random.uniform(kw, (fan_in, fan_out), jnp.float32, -bound, bound)
    b = jax.random.uniform(kb, (fan_out,), jnp.float32, -bound, bound)
    return w, b


if __name__ == "__main__":
    # Small shapes consistent with the module's forward:
    #   linear1: input_dim -> output_dim*2
    #   linear2: output_dim*2 -> output_dim*max_length
    #   view:    (-1, max_length, output_dim)
    input_dim = 256
    output_dim = 256
    max_length = 8
    batch = 8

    key = jax.random.PRNGKey(0)
    kx, k1, k2 = jax.random.split(key, 3)

    x = jax.random.normal(kx, (batch, input_dim), jnp.float32)
    w1, b1 = _init_linear(k1, input_dim, output_dim * 2)
    w2, b2 = _init_linear(k2, output_dim * 2, output_dim * max_length)

    # References (eval-mode dropout = identity). `ref` uses the same bf16
    # operand / f32 accumulation numerics as the kernels; `ref_f32` is full f32.
    h_ref = jnp.maximum(
        jnp.dot(x.astype(jnp.bfloat16), w1.astype(jnp.bfloat16),
                preferred_element_type=jnp.float32) + b1, 0.0)
    ref = (jnp.dot(h_ref.astype(jnp.bfloat16), w2.astype(jnp.bfloat16),
                   preferred_element_type=jnp.float32) + b2
           ).reshape(batch, max_length, output_dim)
    ref_f32 = (jnp.maximum(x @ w1 + b1, 0.0) @ w2 + b2
               ).reshape(batch, max_length, output_dim)

    # Path A: fully fused single-step kernel (default for these shapes).
    out_fused = mapping_model_forward(
        x, w1, b1, w2, b2, max_length=max_length, output_dim=output_dim)
    out_fused = jax.block_until_ready(out_fused)
    assert out_fused.shape == (batch, max_length, output_dim)
    assert jnp.allclose(out_fused, ref, atol=1e-2, rtol=1e-2)
    assert jnp.allclose(out_fused, ref_f32, atol=1e-1, rtol=1e-1)

    # Path B: tiled linear2 with a "parallel" output-tile grid (used
    # automatically for large shapes; exercised here by forcing tile_n).
    out_tiled = mapping_model_forward(
        x, w1, b1, w2, b2, max_length=max_length, output_dim=output_dim,
        tile_n=512)
    out_tiled = jax.block_until_ready(out_tiled)
    assert out_tiled.shape == (batch, max_length, output_dim)
    assert jnp.allclose(out_tiled, ref, atol=1e-2, rtol=1e-2)

    print("KERNEL_OK")
</pallas_src>

<mosaic_0001>
module attributes {stable_mosaic.version = 11 : i64} {
  func.func @_fused_kernel(%arg0: i32, %arg1: memref<8x256xbf16, #tpu.memory_space<vmem>>, %arg2: memref<256x512xbf16, #tpu.memory_space<vmem>>, %arg3: memref<1x512xf32, #tpu.memory_space<vmem>>, %arg4: memref<512x2048xbf16, #tpu.memory_space<vmem>>, %arg5: memref<1x2048xf32, #tpu.memory_space<vmem>>, %arg6: memref<8x2048xf32, #tpu.memory_space<vmem>>) attributes {dimension_semantics = [#tpu.dimension_semantics<parallel>], iteration_bounds = array<i64: 1>, scalar_prefetch = 0 : i64, scratch_operands = 0 : i64, tpu.core_type = #tpu.core_type<tc>, window_params = [{pipeline_mode = #tpu.pipeline_mode<synchronous>, transform_indices = @transform_0, window_bounds = array<i64: 8, 256>}, {pipeline_mode = #tpu.pipeline_mode<synchronous>, transform_indices = @transform_1, window_bounds = array<i64: 256, 512>}, {pipeline_mode = #tpu.pipeline_mode<synchronous>, transform_indices = @transform_2, window_bounds = array<i64: 1, 512>}, {pipeline_mode = #tpu.pipeline_mode<synchronous>, transform_indices = @transform_3, window_bounds = array<i64: 512, 2048>}, {pipeline_mode = #tpu.pipeline_mode<synchronous>, transform_indices = @transform_4, window_bounds = array<i64: 1, 2048>}, {pipeline_mode = #tpu.pipeline_mode<synchronous>, transform_indices = @transform_5, window_bounds = array<i64: 8, 2048>}]} {
    %c0 = arith.constant 0 : index
    %c0_0 = arith.constant 0 : index
    %0 = vector.load %arg1[%c0, %c0_0] : memref<8x256xbf16, #tpu.memory_space<vmem>>, vector<8x256xbf16>
    %c0_1 = arith.constant 0 : index
    %c0_2 = arith.constant 0 : index
    %1 = vector.load %arg2[%c0_1, %c0_2] : memref<256x512xbf16, #tpu.memory_space<vmem>>, vector<256x512xbf16>
    %cst = arith.constant dense<0.000000e+00> : vector<8x512xf32>
    %2 = tpu.matmul %0, %1, %cst {dimension_numbers = #tpu.dot_dimension_numbers<[1], [0], [0], [1], [0, 0, 1, 1], [], []>} : vector<8x256xbf16>, vector<256x512xbf16>, vector<8x512xf32> -> vector<8x512xf32>
    %c0_3 = arith.constant 0 : index
    %c0_4 = arith.constant 0 : index
    %3 = vector.load %arg3[%c0_3, %c0_4] : memref<1x512xf32, #tpu.memory_space<vmem>>, vector<1x512xf32>
    %4 = vector.broadcast %3 : vector<1x512xf32> to vector<8x512xf32>
    %5 = arith.addf %2, %4 : vector<8x512xf32>
    %cst_5 = arith.constant 0.000000e+00 : f32
    %6 = vector.broadcast %cst_5 : f32 to vector<8x512xf32>
    %7 = arith.maximumf %5, %6 : vector<8x512xf32>
    %8 = arith.truncf %7 : vector<8x512xf32> to vector<8x512xbf16>
    %c0_6 = arith.constant 0 : index
    %c0_7 = arith.constant 0 : index
    %9 = vector.load %arg4[%c0_6, %c0_7] : memref<512x2048xbf16, #tpu.memory_space<vmem>>, vector<512x2048xbf16>
    %cst_8 = arith.constant dense<0.000000e+00> : vector<8x2048xf32>
    %10 = tpu.matmul %8, %9, %cst_8 {dimension_numbers = #tpu.dot_dimension_numbers<[1], [0], [0], [1], [0, 0, 1, 1], [], []>} : vector<8x512xbf16>, vector<512x2048xbf16>, vector<8x2048xf32> -> vector<8x2048xf32>
    %c0_9 = arith.constant 0 : index
    %c0_10 = arith.constant 0 : index
    %11 = vector.load %arg5[%c0_9, %c0_10] : memref<1x2048xf32, #tpu.memory_space<vmem>>, vector<1x2048xf32>
    %12 = vector.broadcast %11 : vector<1x2048xf32> to vector<8x2048xf32>
    %13 = arith.addf %10, %12 : vector<8x2048xf32>
    %c0_11 = arith.constant 0 : index
    %c0_12 = arith.constant 0 : index
    %14 = vector.load %arg6[%c0_11, %c0_12] : memref<8x2048xf32, #tpu.memory_space<vmem>>, vector<8x2048xf32>
    tpu.vector_store %arg6[%c0_11, %c0_12], %13 {strides = array<i32>} : memref<8x2048xf32, #tpu.memory_space<vmem>>, vector<8x2048xf32>,
    return
  }
  func.func @transform_0(%arg0: i32) -> (i32, i32) {
    %c0_i32 = arith.constant 0 : i32
    %c0_i32_0 = arith.constant 0 : i32
    %c0_i32_1 = arith.constant 0 : i32
    return %c0_i32, %c0_i32_0 : i32, i32
  }
  func.func @transform_1(%arg0: i32) -> (i32, i32) {
    %c0_i32 = arith.constant 0 : i32
    %c0_i32_0 = arith.constant 0 : i32
    %c0_i32_1 = arith.constant 0 : i32
    return %c0_i32, %c0_i32_0 : i32, i32
  }
  func.func @transform_2(%arg0: i32) -> (i32, i32) {
    %c0_i32 = arith.constant 0 : i32
    %c0_i32_0 = arith.constant 0 : i32
    %c0_i32_1 = arith.constant 0 : i32
    return %c0_i32, %c0_i32_0 : i32, i32
  }
  func.func @transform_3(%arg0: i32) -> (i32, i32) {
    %c0_i32 = arith.constant 0 : i32
    %c0_i32_0 = arith.constant 0 : i32
    %c0_i32_1 = arith.constant 0 : i32
    return %c0_i32, %c0_i32_0 : i32, i32
  }
  func.func @transform_4(%arg0: i32) -> (i32, i32) {
    %c0_i32 = arith.constant 0 : i32
    %c0_i32_0 = arith.constant 0 : i32
    %c0_i32_1 = arith.constant 0 : i32
    return %c0_i32, %c0_i32_0 : i32, i32
  }
  func.func @transform_5(%arg0: i32) -> (i32, i32) {
    %c0_i32 = arith.constant 0 : i32
    %c0_i32_0 = arith.constant 0 : i32
    %c0_i32_1 = arith.constant 0 : i32
    return %c0_i32, %c0_i32_0 : i32, i32
  }
}

</mosaic_0001>

<llo_original>
// kernel: tpu_custom_call.1
$region0: #{tpu_custom_call.1}
  #allocation0 [shape = 'u32[]', space=smem, size = 0x4, offset = 0x4, fixed_abs, tag = 'smem constant byte address 0x4 - core index']
  #allocation1 [shape = 'u32[72,128]{1,0:T(1,128)}', space=vmem, size = 0x9000, scoped, tag = 'internal scratch']
  %s0 = inlined_call_operand.hbm [shape: bf16[8,256], index: 0, kind: input, shape index: {}]
  %s1 = inlined_call_operand.hbm [shape: bf16[256,512], index: 1, kind: input, shape index: {}]
  %s2 = inlined_call_operand.hbm [shape: f32[1,512], index: 2, kind: input, shape index: {}]
  %s3 = inlined_call_operand.hbm [shape: bf16[512,2048], index: 3, kind: input, shape index: {}]
  %s4 = inlined_call_operand.hbm [shape: f32[1,2048], index: 4, kind: input, shape index: {}]
  %s5 = inlined_call_operand.hbm [shape: f32[8,2048], index: 5, kind: output, shape index: {}]
  %s6 = sld [smem:[#allocation0]]
  $region50: #{tpu_custom_call.1} parent=0
    _
  %s8 = ssub.s32 1, %s6
  %s9 = scalar_select 0, %s8, %s6
  $region1: #{tpu_custom_call.1} parent=0
    #allocation2 [shape = 'u8[4096]{0}', space=vmem, size = 0x1000, scoped, tag = 'input window, operand 0, single buffered']
    #allocation3 [shape = 's32[1]{0}', space=sflag, size = 0x4, scoped, tag = 'scoped memory for tpu_custom_call.1']
    #allocation4 [shape = 's32[1]{0}', space=sflag, size = 0x4, scoped, tag = 'scoped memory for tpu_custom_call.1']
    #allocation5 [shape = 'u8[262144]{0}', space=vmem, size = 0x40000, scoped, tag = 'input window, operand 1, single buffered']
    #allocation6 [shape = 's32[1]{0}', space=sflag, size = 0x4, scoped, tag = 'scoped memory for tpu_custom_call.1']
    #allocation7 [shape = 'u8[2048]{0}', space=vmem, size = 0x800, scoped, tag = 'input window, operand 2, single buffered']
    #allocation8 [shape = 'u8[2097152]{0}', space=vmem, size = 0x200000, scoped, tag = 'input window, operand 3, single buffered']
    #allocation9 [shape = 's32[1]{0}', space=sflag, size = 0x4, scoped, tag = 'scoped memory for tpu_custom_call.1']
    #allocation10 [shape = 'u8[8192]{0}', space=vmem, size = 0x2000, scoped, tag = 'input window, operand 4, single buffered']
    #allocation11 [shape = 'u8[65536]{0}', space=vmem, size = 0x10000, scoped, tag = 'output window, operand 0, single buffered']
    %10 = vsyncpa [#allocation3], 0
    %11 = vsyncpa [#allocation6], 0
    %12 = vsyncpa [#allocation9], 0
    %13 = vsyncpa [#allocation4], 0
    // Predicated region
    $region2: #{tpu_custom_call.1} parent=1 // pred_check
      _
    $region3: #{tpu_custom_call.1} parent=1 // pred_check_branch
      %15 = sbr.rel (0) target = $region5
    $region4: #{tpu_custom_call.1} parent=1 // pred_region
      %17 = vsyncadd [#allocation3], 0
      %s19 = sshll.u32 %s0, 4
      %s20 = int_to_ptr.hbm [resolvable:$true] %s19
      %s21 = sshll.u32 [#allocation2], 4
      %s22 = int_to_ptr.vmem [resolvable:$true] %s21
      %24 = dma.hbm_to_vmem [thread:$0]  %s20, 128, %s22, [#allocation3]
    $region5: #{tpu_custom_call.1} parent=1 // pred_fallthru
      _
    // Predicated region
    $region6: #{tpu_custom_call.1} parent=1 // pred_check
      _
    $region7: #{tpu_custom_call.1} parent=1 // pred_check_branch
      %26 = sbr.rel (0) target = $region9
    $region8: #{tpu_custom_call.1} parent=1 // pred_region
      %28 = vsyncadd [#allocation6], 0
      %s29 = sshll.u32 %s1, 4
      %s30 = int_to_ptr.hbm [resolvable:$true] %s29
      %s31 = sshll.u32 [#allocation5], 4
      %s32 = int_to_ptr.vmem [resolvable:$true] %s31
      %37 = dma.hbm_to_vmem [thread:$0]  %s30, 8192, %s32, [#allocation6], 256, 256, 16
    $region9: #{tpu_custom_call.1} parent=1 // pred_fallthru
      _
    // Predicated region
    $region10: #{tpu_custom_call.1} parent=1 // pred_check
      _
    $region11: #{tpu_custom_call.1} parent=1 // pred_check_branch
      %39 = sbr.rel (0) target = $region13
    $region12: #{tpu_custom_call.1} parent=1 // pred_region
      %41 = vsyncadd [#allocation6], 0
      %s43 = sshll.u32 %s2, 4
      %s44 = int_to_ptr.hbm [resolvable:$true] %s43
      %s45 = sshll.u32 [#allocation7], 4
      %s46 = int_to_ptr.vmem [resolvable:$true] %s45
      %48 = dma.hbm_to_vmem [thread:$0]  %s44, 64, %s46, [#allocation6]
    $region13: #{tpu_custom_call.1} parent=1 // pred_fallthru
      _
    // Predicated region
    $region14: #{tpu_custom_call.1} parent=1 // pred_check
      _
    $region15: #{tpu_custom_call.1} parent=1 // pred_check_branch
      %50 = sbr.rel (0) target = $region17
    $region16: #{tpu_custom_call.1} parent=1 // pred_region
      %52 = vsyncadd [#allocation9], 0
      %s53 = sshll.u32 %s3, 4
      %s54 = int_to_ptr.hbm [resolvable:$true] %s53
      %s55 = sshll.u32 [#allocation8], 4
      %s56 = int_to_ptr.vmem [resolvable:$true] %s55
      %61 = dma.hbm_to_vmem [thread:$0]  %s54, 65536, %s56, [#allocation9], 1024, 1024, 64
    $region17: #{tpu_custom_call.1} parent=1 // pred_fallthru
      _
    // Predicated region
    $region18: #{tpu_custom_call.1} parent=1 // pred_check
      _
    $region19: #{tpu_custom_call.1} parent=1 // pred_check_branch
      %63 = sbr.rel (0) target = $region21
    $region20: #{tpu_custom_call.1} parent=1 // pred_region
      %65 = vsyncadd [#allocation9], 0
      %s67 = sshll.u32 %s4, 4
      %s68 = int_to_ptr.hbm [resolvable:$true] %s67
      %s69 = sshll.u32 [#allocation10], 4
      %s70 = int_to_ptr.vmem [resolvable:$true] %s69
      %72 = dma.hbm_to_vmem [thread:$0]  %s68, 256, %s70, [#allocation9]
    $region21: #{tpu_custom_call.1} parent=1 // pred_fallthru
      _
    // Predicated region
    $region22: #{tpu_custom_call.1} parent=1 // pred_check
      _
    $region23: #{tpu_custom_call.1} parent=1 // pred_check_branch
      %74 = sbr.rel (0) target = $region25
    $region24: #{tpu_custom_call.1} parent=1 // pred_region
      %76 = dma.done [#allocation3], 128
    $region25: #{tpu_custom_call.1} parent=1 // pred_fallthru
      _
    // Predicated region
    $region26: #{tpu_custom_call.1} parent=1 // pred_check
      _
    $region27: #{tpu_custom_call.1} parent=1 // pred_check_branch
      %78 = sbr.rel (0) target = $region29
    $region28: #{tpu_custom_call.1} parent=1 // pred_region
      %80 = dma.done [#allocation6], 8192
    $region29: #{tpu_custom_call.1} parent=1 // pred_fallthru
      _
    // Predicated region
    $region30: #{tpu_custom_call.1} parent=1 // pred_check
      _
    $region31: #{tpu_custom_call.1} parent=1 // pred_check_branch
      %82 = sbr.rel (0) target = $region33
    $region32: #{tpu_custom_call.1} parent=1 // pred_region
      %84 = dma.done [#allocation6], 64
    $region33: #{tpu_custom_call.1} parent=1 // pred_fallthru
      _
    // Predicated region
    $region34: #{tpu_custom_call.1} parent=1 // pred_check
      _
    $region35: #{tpu_custom_call.1} parent=1 // pred_check_branch
      %86 = sbr.rel (0) target = $region37
    $region36: #{tpu_custom_call.1} parent=1 // pred_region
      %88 = dma.done [#allocation9], 65536
    $region37: #{tpu_custom_call.1} parent=1 // pred_fallthru
      _
    // Predicated region
    $region38: #{tpu_custom_call.1} parent=1 // pred_check
      _
    $region39: #{tpu_custom_call.1} parent=1 // pred_check_branch
      %90 = sbr.rel (0) target = $region41
    $region40: #{tpu_custom_call.1} parent=1 // pred_region
      %92 = dma.done [#allocation9], 256
    $region41: #{tpu_custom_call.1} parent=1 // pred_fallthru
      _
    %v93 = vld [vmem:[#allocation2] sm:$0xff]
    %v94 = vld [vmem:[#allocation5] sm:$0xff]
    %v95 = vld [vmem:[#allocation5 + $0x8] sm:$0xff]
    %v96 = vld [vmem:[#allocation5 + $0x10] sm:$0xff]
    %v97 = vld [vmem:[#allocation5 + $0x18] sm:$0xff]
    %v98 = vld [vmem:[#allocation5 + $0x20] sm:$0xff]
    %v99 = vld [vmem:[#allocation5 + $0x28] sm:$0xff]
    %v100 = vld [vmem:[#allocation5 + $0x30] sm:$0xff]
    %v101 = vld [vmem:[#allocation5 + $0x38] sm:$0xff]
    %v102 = vld [vmem:[#allocation5 + $0x40] sm:$0xff]
    %v103 = vld [vmem:[#allocation5 + $0x48] sm:$0xff]
    %v104 = vld [vmem:[#allocation5 + $0x50] sm:$0xff]
    %v105 = vld [vmem:[#allocation5 + $0x58] sm:$0xff]
    %v106 = vld [vmem:[#allocation5 + $0x60] sm:$0xff]
    %v107 = vld [vmem:[#allocation5 + $0x68] sm:$0xff]
    %v108 = vld [vmem:[#allocation5 + $0x70] sm:$0xff]
    %v109 = vld [vmem:[#allocation5 + $0x78] sm:$0xff]
    %v110 = vld [vmem:[#allocation5 + $0x80] sm:$0xff]
    %v111 = vld [vmem:[#allocation5 + $0x88] sm:$0xff]
    %v112 = vld [vmem:[#allocation5 + $0x90] sm:$0xff]
    %v113 = vld [vmem:[#allocation5 + $0x98] sm:$0xff]
    %v114 = vld [vmem:[#allocation5 + $0xa0] sm:$0xff]
    %v115 = vld [vmem:[#allocation5 + $0xa8] sm:$0xff]
    %v116 = vld [vmem:[#allocation5 + $0xb0] sm:$0xff]
    %v117 = vld [vmem:[#allocation5 + $0xb8] sm:$0xff]
    %v118 = vld [vmem:[#allocation5 + $0xc0] sm:$0xff]
    %v119 = vld [vmem:[#allocation5 + $0xc8] sm:$0xff]
    %v120 = vld [vmem:[#allocation5 + $0xd0] sm:$0xff]
    %v121 = vld [vmem:[#allocation5 + $0xd8] sm:$0xff]
    %v122 = vld [vmem:[#allocation5 + $0xe0] sm:$0xff]
    %v123 = vld [vmem:[#allocation5 + $0xe8] sm:$0xff]
    %v124 = vld [vmem:[#allocation5 + $0xf0] sm:$0xff]
    %v125 = vld [vmem:[#allocation5 + $0xf8] sm:$0xff]
    %v126 = vld [vmem:[#allocation5 + $0x100] sm:$0xff]
    %v127 = vld [vmem:[#allocation5 + $0x108] sm:$0xff]
    %v128 = vld [vmem:[#allocation5 + $0x110] sm:$0xff]
    %v129 = vld [vmem:[#allocation5 + $0x118] sm:$0xff]
    %v130 = vld [vmem:[#allocation5 + $0x120] sm:$0xff]
    %v131 = vld [vmem:[#allocation5 + $0x128] sm:$0xff]
    %v132 = vld [vmem:[#allocation5 + $0x130] sm:$0xff]
    %v133 = vld [vmem:[#allocation5 + $0x138] sm:$0xff]
    %v134 = vld [vmem:[#allocation5 + $0x140] sm:$0xff]
    %v135 = vld [vmem:[#allocation5 + $0x148] sm:$0xff]
    %v136 = vld [vmem:[#allocation5 + $0x150] sm:$0xff]
    %v137 = vld [vmem:[#allocation5 + $0x158] sm:$0xff]
    %v138 = vld [vmem:[#allocation5 + $0x160] sm:$0xff]
    %v139 = vld [vmem:[#allocation5 + $0x168] sm:$0xff]
    %v140 = vld [vmem:[#allocation5 + $0x170] sm:$0xff]
    %v141 = vld [vmem:[#allocation5 + $0x178] sm:$0xff]
    %v142 = vld [vmem:[#allocation5 + $0x180] sm:$0xff]
    %v143 = vld [vmem:[#allocation5 + $0x188] sm:$0xff]
    %v144 = vld [vmem:[#allocation5 + $0x190] sm:$0xff]
    %v145 = vld [vmem:[#allocation5 + $0x198] sm:$0xff]
    %v146 = vld [vmem:[#allocation5 + $0x1a0] sm:$0xff]
    %v147 = vld [vmem:[#allocation5 + $0x1a8] sm:$0xff]
    %v148 = vld [vmem:[#allocation5 + $0x1b0] sm:$0xff]
    %v149 = vld [vmem:[#allocation5 + $0x1b8] sm:$0xff]
    %v150 = vld [vmem:[#allocation5 + $0x1c0] sm:$0xff]
    %v151 = vld [vmem:[#allocation5 + $0x1c8] sm:$0xff]
    %v152 = vld [vmem:[#allocation5 + $0x1d0] sm:$0xff]
    %v153 = vld [vmem:[#allocation5 + $0x1d8] sm:$0xff]
    %v154 = vld [vmem:[#allocation5 + $0x1e0] sm:$0xff]
    %v155 = vld [vmem:[#allocation5 + $0x1e8] sm:$0xff]
    %v156 = vld [vmem:[#allocation5 + $0x1f0] sm:$0xff]
    %v157 = vld [vmem:[#allocation5 + $0x1f8] sm:$0xff]
    %v158 = vld [vmem:[#allocation7] sm:$0xf]
    %v160 = vperm.slane %v158, 0
    %v161 = vperm.slane %v158, 1
    %v162 = vperm.slane %v158, 2
    %v163 = vperm.slane %v158, 3
    %v169 = vunpack.c.l.b16 %v93
    %v170 = vunpack.c.h.b16 %v93
    %v171 = vpack.c.b16 %v169, %v169
    %v172 = vpack.c.b16 %v170, %v170
    %v239 = vunpack.c.l.b16 %v94
    %v240 = vunpack.c.h.b16 %v94
    %v241 = vunpack.c.l.b16 %v95
    %v242 = vunpack.c.h.b16 %v95
    %v243 = vunpack.c.l.b16 %v96
    %v244 = vunpack.c.h.b16 %v96
    %v245 = vunpack.c.l.b16 %v97
    %v246 = vunpack.c.h.b16 %v97
    %v247 = vunpack.c.l.b16 %v98
    %v248 = vunpack.c.h.b16 %v98
    %v249 = vunpack.c.l.b16 %v99
    %v250 = vunpack.c.h.b16 %v99
    %v251 = vunpack.c.l.b16 %v100
    %v252 = vunpack.c.h.b16 %v100
    %v253 = vunpack.c.l.b16 %v101
    %v254 = vunpack.c.h.b16 %v101
    %v255 = vunpack.c.l.b16 %v102
    %v256 = vunpack.c.h.b16 %v102
    %v257 = vunpack.c.l.b16 %v103
    %v258 = vunpack.c.h.b16 %v103
    %v259 = vunpack.c.l.b16 %v104
    %v260 = vunpack.c.h.b16 %v104
    %v261 = vunpack.c.l.b16 %v105
    %v262 = vunpack.c.h.b16 %v105
    %v263 = vunpack.c.l.b16 %v106
    %v264 = vunpack.c.h.b16 %v106
    %v265 = vunpack.c.l.b16 %v107
    %v266 = vunpack.c.h.b16 %v107
    %v267 = vunpack.c.l.b16 %v108
    %v268 = vunpack.c.h.b16 %v108
    %v269 = vunpack.c.l.b16 %v109
    %v270 = vunpack.c.h.b16 %v109
    %v271 = vunpack.c.l.b16 %v110
    %v272 = vunpack.c.h.b16 %v110
    %v273 = vunpack.c.l.b16 %v111
    %v274 = vunpack.c.h.b16 %v111
    %v275 = vunpack.c.l.b16 %v112
    %v276 = vunpack.c.h.b16 %v112
    %v277 = vunpack.c.l.b16 %v113
    %v278 = vunpack.c.h.b16 %v113
    %v279 = vunpack.c.l.b16 %v114
    %v280 = vunpack.c.h.b16 %v114
    %v281 = vunpack.c.l.b16 %v115
    %v282 = vunpack.c.h.b16 %v115
    %v283 = vunpack.c.l.b16 %v116
    %v284 = vunpack.c.h.b16 %v116
    %v285 = vunpack.c.l.b16 %v117
    %v286 = vunpack.c.h.b16 %v117
    %v287 = vunpack.c.l.b16 %v118
    %v288 = vunpack.c.h.b16 %v118
    %v289 = vunpack.c.l.b16 %v119
    %v290 = vunpack.c.h.b16 %v119
    %v291 = vunpack.c.l.b16 %v120
    %v292 = vunpack.c.h.b16 %v120
    %v293 = vunpack.c.l.b16 %v121
    %v294 = vunpack.c.h.b16 %v121
    %v295 = vunpack.c.l.b16 %v122
    %v296 = vunpack.c.h.b16 %v122
    %v297 = vunpack.c.l.b16 %v123
    %v298 = vunpack.c.h.b16 %v123
    %v299 = vunpack.c.l.b16 %v124
    %v300 = vunpack.c.h.b16 %v124
    %v301 = vunpack.c.l.b16 %v125
    %v302 = vunpack.c.h.b16 %v125
    %v303 = vunpack.c.l.b16 %v126
    %v304 = vunpack.c.h.b16 %v126
    %v305 = vunpack.c.l.b16 %v127
    %v306 = vunpack.c.h.b16 %v127
    %v307 = vunpack.c.l.b16 %v128
    %v308 = vunpack.c.h.b16 %v128
    %v309 = vunpack.c.l.b16 %v129
    %v310 = vunpack.c.h.b16 %v129
    %v311 = vunpack.c.l.b16 %v130
    %v312 = vunpack.c.h.b16 %v130
    %v313 = vunpack.c.l.b16 %v131
    %v314 = vunpack.c.h.b16 %v131
    %v315 = vunpack.c.l.b16 %v132
    %v316 = vunpack.c.h.b16 %v132
    %v317 = vunpack.c.l.b16 %v133
    %v318 = vunpack.c.h.b16 %v133
    %v319 = vunpack.c.l.b16 %v134
    %v320 = vunpack.c.h.b16 %v134
    %v321 = vunpack.c.l.b16 %v135
    %v322 = vunpack.c.h.b16 %v135
    %v323 = vunpack.c.l.b16 %v136
    %v324 = vunpack.c.h.b16 %v136
    %v325 = vunpack.c.l.b16 %v137
    %v326 = vunpack.c.h.b16 %v137
    %v327 = vunpack.c.l.b16 %v138
    %v328 = vunpack.c.h.b16 %v138
    %v329 = vunpack.c.l.b16 %v139
    %v330 = vunpack.c.h.b16 %v139
    %v331 = vunpack.c.l.b16 %v140
    %v332 = vunpack.c.h.b16 %v140
    %v333 = vunpack.c.l.b16 %v141
    %v334 = vunpack.c.h.b16 %v141
    %v335 = vunpack.c.l.b16 %v142
    %v336 = vunpack.c.h.b16 %v142
    %v337 = vunpack.c.l.b16 %v143
    %v338 = vunpack.c.h.b16 %v143
    %v339 = vunpack.c.l.b16 %v144
    %v340 = vunpack.c.h.b16 %v144
    %v341 = vunpack.c.l.b16 %v145
    %v342 = vunpack.c.h.b16 %v145
    %v343 = vunpack.c.l.b16 %v146
    %v344 = vunpack.c.h.b16 %v146
    %v345 = vunpack.c.l.b16 %v147
    %v346 = vunpack.c.h.b16 %v147
    %v347 = vunpack.c.l.b16 %v148
    %v348 = vunpack.c.h.b16 %v148
    %v349 = vunpack.c.l.b16 %v149
    %v350 = vunpack.c.h.b16 %v149
    %v351 = vunpack.c.l.b16 %v150
    %v352 = vunpack.c.h.b16 %v150
    %v353 = vunpack.c.l.b16 %v151
    %v354 = vunpack.c.h.b16 %v151
    %v355 = vunpack.c.l.b16 %v152
    %v356 = vunpack.c.h.b16 %v152
    %v357 = vunpack.c.l.b16 %v153
    %v358 = vunpack.c.h.b16 %v153
    %v359 = vunpack.c.l.b16 %v154
    %v360 = vunpack.c.h.b16 %v154
    %v361 = vunpack.c.l.b16 %v155
    %v362 = vunpack.c.h.b16 %v155
    %v363 = vunpack.c.l.b16 %v156
    %v364 = vunpack.c.h.b16 %v156
    %v365 = vunpack.c.l.b16 %v157
    %v366 = vunpack.c.h.b16 %v157
    %v367 = vpack.c.b16 %v243, %v239
    %v368 = vpack.c.b16 %v244, %v240
    %v369 = vpack.c.b16 %v245, %v241
    %v370 = vpack.c.b16 %v246, %v242
    %v371 = vpack.c.b16 %v251, %v247
    %v372 = vpack.c.b16 %v252, %v248
    %v373 = vpack.c.b16 %v253, %v249
    %v374 = vpack.c.b16 %v254, %v250
    %v375 = vpack.c.b16 %v259, %v255
    %v376 = vpack.c.b16 %v260, %v256
    %v377 = vpack.c.b16 %v261, %v257
    %v378 = vpack.c.b16 %v262, %v258
    %v379 = vpack.c.b16 %v267, %v263
    %v380 = vpack.c.b16 %v268, %v264
    %v381 = vpack.c.b16 %v269, %v265
    %v382 = vpack.c.b16 %v270, %v266
    %v383 = vpack.c.b16 %v275, %v271
    %v384 = vpack.c.b16 %v276, %v272
    %v385 = vpack.c.b16 %v277, %v273
    %v386 = vpack.c.b16 %v278, %v274
    %v387 = vpack.c.b16 %v283, %v279
    %v388 = vpack.c.b16 %v284, %v280
    %v389 = vpack.c.b16 %v285, %v281
    %v390 = vpack.c.b16 %v286, %v282
    %v391 = vpack.c.b16 %v291, %v287
    %v392 = vpack.c.b16 %v292, %v288
    %v393 = vpack.c.b16 %v293, %v289
    %v394 = vpack.c.b16 %v294, %v290
    %v395 = vpack.c.b16 %v299, %v295
    %v396 = vpack.c.b16 %v300, %v296
    %v397 = vpack.c.b16 %v301, %v297
    %v398 = vpack.c.b16 %v302, %v298
    %v399 = vpack.c.b16 %v307, %v303
    %v400 = vpack.c.b16 %v308, %v304
    %v401 = vpack.c.b16 %v309, %v305
    %v402 = vpack.c.b16 %v310, %v306
    %v403 = vpack.c.b16 %v315, %v311
    %v404 = vpack.c.b16 %v316, %v312
    %v405 = vpack.c.b16 %v317, %v313
    %v406 = vpack.c.b16 %v318, %v314
    %v407 = vpack.c.b16 %v323, %v319
    %v408 = vpack.c.b16 %v324, %v320
    %v409 = vpack.c.b16 %v325, %v321
    %v410 = vpack.c.b16 %v326, %v322
    %v411 = vpack.c.b16 %v331, %v327
    %v412 = vpack.c.b16 %v332, %v328
    %v413 = vpack.c.b16 %v333, %v329
    %v414 = vpack.c.b16 %v334, %v330
    %v415 = vpack.c.b16 %v339, %v335
    %v416 = vpack.c.b16 %v340, %v336
    %v417 = vpack.c.b16 %v341, %v337
    %v418 = vpack.c.b16 %v342, %v338
    %v419 = vpack.c.b16 %v347, %v343
    %v420 = vpack.c.b16 %v348, %v344
    %v421 = vpack.c.b16 %v349, %v345
    %v422 = vpack.c.b16 %v350, %v346
    %v423 = vpack.c.b16 %v355, %v351
    %v424 = vpack.c.b16 %v356, %v352
    %v425 = vpack.c.b16 %v357, %v353
    %v426 = vpack.c.b16 %v358, %v354
    %v427 = vpack.c.b16 %v363, %v359
    %v428 = vpack.c.b16 %v364, %v360
    %v429 = vpack.c.b16 %v365, %v361
    %v430 = vpack.c.b16 %v366, %v362
    %495 = vmatpush.bf16.msra.mxu0 %v395
    %496 = vmatpush.bf16.msra.mxu0 %v391
    %497 = vmatpush.bf16.msra.mxu0 %v387
    %498 = vmatpush.bf16.msra.mxu0 %v383
    %499 = vmatpush.bf16.msra.mxu0 %v379
    %500 = vmatpush.bf16.msra.mxu0 %v375
    %501 = vmatpush.bf16.msra.mxu0 %v371
    %502 = vmatpush.bf16.msra.mxu0 %v367
    %503 = vmatmul.bf16.gmra.mxu0 %v171
    %v504 = vpop.f32.mrf.mxu0
    %v505 = vadd.f32 %v160, %v504
    %v506 = vpop.f32.mrf.mxu0
    %507 = vdwg.mxu0
    %508 = vmatpush.bf16.msra.mxu0 %v427
    %509 = vmatpush.bf16.msra.mxu0 %v423
    %510 = vmatpush.bf16.msra.mxu0 %v419
    %511 = vmatpush.bf16.msra.mxu0 %v415
    %512 = vmatpush.bf16.msra.mxu0 %v411
    %513 = vmatpush.bf16.msra.mxu0 %v407
    %514 = vmatpush.bf16.msra.mxu0 %v403
    %515 = vmatpush.bf16.msra.mxu0 %v399
    %516 = vmatmul.bf16.gmra.mxu0 %v172
    %v517 = vpop.f32.mrf.mxu0
    %v518 = vadd.f32 %v505, %v517
    %v519 = vpop.f32.mrf.mxu0
    %520 = vdwg.mxu0
    %521 = vmatpush.bf16.msra.mxu0 %v396
    %522 = vmatpush.bf16.msra.mxu0 %v392
    %523 = vmatpush.bf16.msra.mxu0 %v388
    %524 = vmatpush.bf16.msra.mxu0 %v384
    %525 = vmatpush.bf16.msra.mxu0 %v380
    %526 = vmatpush.bf16.msra.mxu0 %v376
    %527 = vmatpush.bf16.msra.mxu0 %v372
    %528 = vmatpush.bf16.msra.mxu0 %v368
    %529 = vmatmul.bf16.gmra.mxu0 %v171
    %v530 = vpop.f32.mrf.mxu0
    %v531 = vadd.f32 %v161, %v530
    %v532 = vpop.f32.mrf.mxu0
    %533 = vdwg.mxu0
    %534 = vmatpush.bf16.msra.mxu0 %v428
    %535 = vmatpush.bf16.msra.mxu0 %v424
    %536 = vmatpush.bf16.msra.mxu0 %v420
    %537 = vmatpush.bf16.msra.mxu0 %v416
    %538 = vmatpush.bf16.msra.mxu0 %v412
    %539 = vmatpush.bf16.msra.mxu0 %v408
    %540 = vmatpush.bf16.msra.mxu0 %v404
    %541 = vmatpush.bf16.msra.mxu0 %v400
    %542 = vmatmul.bf16.gmra.mxu0 %v172
    %v543 = vpop.f32.mrf.mxu0
    %v544 = vadd.f32 %v531, %v543
    %v545 = vpop.f32.mrf.mxu0
    %546 = vdwg.mxu0
    %547 = vmatpush.bf16.msra.mxu0 %v397
    %548 = vmatpush.bf16.msra.mxu0 %v393
    %549 = vmatpush.bf16.msra.mxu0 %v389
    %550 = vmatpush.bf16.msra.mxu0 %v385
    %551 = vmatpush.bf16.msra.mxu0 %v381
    %552 = vmatpush.bf16.msra.mxu0 %v377
    %553 = vmatpush.bf16.msra.mxu0 %v373
    %554 = vmatpush.bf16.msra.mxu0 %v369
    %555 = vmatmul.bf16.gmra.mxu0 %v171
    %v556 = vpop.f32.mrf.mxu0
    %v557 = vadd.f32 %v162, %v556
    %v558 = vpop.f32.mrf.mxu0
    %559 = vdwg.mxu0
    %560 = vmatpush.bf16.msra.mxu0 %v429
    %561 = vmatpush.bf16.msra.mxu0 %v425
    %562 = vmatpush.bf16.msra.mxu0 %v421
    %563 = vmatpush.bf16.msra.mxu0 %v417
    %564 = vmatpush.bf16.msra.mxu0 %v413
    %565 = vmatpush.bf16.msra.mxu0 %v409
    %566 = vmatpush.bf16.msra.mxu0 %v405
    %567 = vmatpush.bf16.msra.mxu0 %v401
    %568 = vmatmul.bf16.gmra.mxu0 %v172
    %v569 = vpop.f32.mrf.mxu0
    %v570 = vadd.f32 %v557, %v569
    %v571 = vpop.f32.mrf.mxu0
    %572 = vdwg.mxu0
    %573 = vmatpush.bf16.msra.mxu0 %v398
    %574 = vmatpush.bf16.msra.mxu0 %v394
    %575 = vmatpush.bf16.msra.mxu0 %v390
    %576 = vmatpush.bf16.msra.mxu0 %v386
    %577 = vmatpush.bf16.msra.mxu0 %v382
    %578 = vmatpush.bf16.msra.mxu0 %v378
    %579 = vmatpush.bf16.msra.mxu0 %v374
    %580 = vmatpush.bf16.msra.mxu0 %v370
    %581 = vmatmul.bf16.gmra.mxu0 %v171
    %v582 = vpop.f32.mrf.mxu0
    %v583 = vadd.f32 %v163, %v582
    %v584 = vpop.f32.mrf.mxu0
    %585 = vdwg.mxu0
    %586 = vmatpush.bf16.msra.mxu0 %v430
    %587 = vmatpush.bf16.msra.mxu0 %v426
    %588 = vmatpush.bf16.msra.mxu0 %v422
    %589 = vmatpush.bf16.msra.mxu0 %v418
    %590 = vmatpush.bf16.msra.mxu0 %v414
    %591 = vmatpush.bf16.msra.mxu0 %v410
    %592 = vmatpush.bf16.msra.mxu0 %v406
    %593 = vmatpush.bf16.msra.mxu0 %v402
    %594 = vmatmul.bf16.gmra.mxu0 %v172
    %v595 = vpop.f32.mrf.mxu0
    %v596 = vadd.f32 %v583, %v595
    %v597 = vpop.f32.mrf.mxu0
    %598 = vdwg.mxu0
    %v599 = vmax.f32 %v518, 0.0
    %v600 = vmax.f32 %v544, 0.0
    %v601 = vmax.f32 %v570, 0.0
    %v602 = vmax.f32 %v596, 0.0
    %v603 = vpack.c.bf16 %v599, %v599
    %v604 = vpack.c.bf16 %v600, %v600
    %v605 = vpack.c.bf16 %v601, %v601
    %v606 = vpack.c.bf16 %v602, %v602
    %v607 = vld [vmem:[#allocation8] sm:$0xff]
    %v608 = vld [vmem:[#allocation8 + $0x8] sm:$0xff]
    %v609 = vld [vmem:[#allocation8 + $0x10] sm:$0xff]
    %v610 = vld [vmem:[#allocation8 + $0x18] sm:$0xff]
    %v611 = vld [vmem:[#allocation8 + $0x20] sm:$0xff]
    %v612 = vld [vmem:[#allocation8 + $0x28] sm:$0xff]
    %v613 = vld [vmem:[#allocation8 + $0x30] sm:$0xff]
    %v614 = vld [vmem:[#allocation8 + $0x38] sm:$0xff]
    %v615 = vld [vmem:[#allocation8 + $0x40] sm:$0xff]
    %v616 = vld [vmem:[#allocation8 + $0x48] sm:$0xff]
    %v617 = vld [vmem:[#allocation8 + $0x50] sm:$0xff]
    %v618 = vld [vmem:[#allocation8 + $0x58] sm:$0xff]
    %v619 = vld [vmem:[#allocation8 + $0x60] sm:$0xff]
    %v620 = vld [vmem:[#allocation8 + $0x68] sm:$0xff]
    %v621 = vld [vmem:[#allocation8 + $0x70] sm:$0xff]
    %v622 = vld [vmem:[#allocation8 + $0x78] sm:$0xff]
    %v623 = vld [vmem:[#allocation8 + $0x80] sm:$0xff]
    %v624 = vld [vmem:[#allocation8 + $0x88] sm:$0xff]
    %v625 = vld [vmem:[#allocation8 + $0x90] sm:$0xff]
    %v626 = vld [vmem:[#allocation8 + $0x98] sm:$0xff]
    %v627 = vld [vmem:[#allocation8 + $0xa0] sm:$0xff]
    %v628 = vld [vmem:[#allocation8 + $0xa8] sm:$0xff]
    %v629 = vld [vmem:[#allocation8 + $0xb0] sm:$0xff]
    %v630 = vld [vmem:[#allocation8 + $0xb8] sm:$0xff]
    %v631 = vld [vmem:[#allocation8 + $0xc0] sm:$0xff]
    %v632 = vld [vmem:[#allocation8 + $0xc8] sm:$0xff]
    %v633 = vld [vmem:[#allocation8 + $0xd0] sm:$0xff]
    %v634 = vld [vmem:[#allocation8 + $0xd8] sm:$0xff]
    %v635 = vld [vmem:[#allocation8 + $0xe0] sm:$0xff]
    %v636 = vld [vmem:[#allocation8 + $0xe8] sm:$0xff]
    %v637 = vld [vmem:[#allocation8 + $0xf0] sm:$0xff]
    %v638 = vld [vmem:[#allocation8 + $0xf8] sm:$0xff]
    %v639 = vld [vmem:[#allocation8 + $0x100] sm:$0xff]
    %v640 = vld [vmem:[#allocation8 + $0x108] sm:$0xff]
    %v641 = vld [vmem:[#allocation8 + $0x110] sm:$0xff]
    %v642 = vld [vmem:[#allocation8 + $0x118] sm:$0xff]
    %v643 = vld [vmem:[#allocation8 + $0x120] sm:$0xff]
    %v644 = vld [vmem:[#allocation8 + $0x128] sm:$0xff]
    %v645 = vld [vmem:[#allocation8 + $0x130] sm:$0xff]
    %v646 = vld [vmem:[#allocation8 + $0x138] sm:$0xff]
    %v647 = vld [vmem:[#allocation8 + $0x140] sm:$0xff]
    %v648 = vld [vmem:[#allocation8 + $0x148] sm:$0xff]
    %v649 = vld [vmem:[#allocation8 + $0x150] sm:$0xff]
    %v650 = vld [vmem:[#allocation8 + $0x158] sm:$0xff]
    %v651 = vld [vmem:[#allocation8 + $0x160] sm:$0xff]
    %v652 = vld [vmem:[#allocation8 + $0x168] sm:$0xff]
    %v653 = vld [vmem:[#allocation8 + $0x170] sm:$0xff]
    %v654 = vld [vmem:[#allocation8 + $0x178] sm:$0xff]
    %v655 = vld [vmem:[#allocation8 + $0x180] sm:$0xff]
    %v656 = vld [vmem:[#allocation8 + $0x188] sm:$0xff]
    %v657 = vld [vmem:[#allocation8 + $0x190] sm:$0xff]
    %v658 = vld [vmem:[#allocation8 + $0x198] sm:$0xff]
    %v659 = vld [vmem:[#allocation8 + $0x1a0] sm:$0xff]
    %v660 = vld [vmem:[#allocation8 + $0x1a8] sm:$0xff]
    %v661 = vld [vmem:[#allocation8 + $0x1b0] sm:$0xff]
    %v662 = vld [vmem:[#allocation8 + $0x1b8] sm:$0xff]
    %v663 = vld [vmem:[#allocation8 + $0x1c0] sm:$0xff]
    %v664 = vld [vmem:[#allocation8 + $0x1c8] sm:$0xff]
    %v665 = vld [vmem:[#allocation8 + $0x1d0] sm:$0xff]
    %v666 = vld [vmem:[#allocation8 + $0x1d8] sm:$0xff]
    %v667 = vld [vmem:[#allocation8 + $0x1e0] sm:$0xff]
    %v668 = vld [vmem:[#allocation8 + $0x1e8] sm:$0xff]
    %v669 = vld [vmem:[#allocation8 + $0x1f0] sm:$0xff]
    %v670 = vld [vmem:[#allocation8 + $0x1f8] sm:$0xff]
    %v671 = vld [vmem:[#allocation8 + $0x200] sm:$0xff]
    %v672 = vld [vmem:[#allocation8 + $0x208] sm:$0xff]
    %v673 = vld [vmem:[#allocation8 + $0x210] sm:$0xff]
    %v674 = vld [vmem:[#allocation8 + $0x218] sm:$0xff]
    %v675 = vld [vmem:[#allocation8 + $0x220] sm:$0xff]
    %v676 = vld [vmem:[#allocation8 + $0x228] sm:$0xff]
    %v677 = vld [vmem:[#allocation8 + $0x230] sm:$0xff]
    %v678 = vld [vmem:[#allocation8 + $0x238] sm:$0xff]
    %v679 = vld [vmem:[#allocation8 + $0x240] sm:$0xff]
    %v680 = vld [vmem:[#allocation8 + $0x248] sm:$0xff]
    %v681 = vld [vmem:[#allocation8 + $0x250] sm:$0xff]
    %v682 = vld [vmem:[#allocation8 + $0x258] sm:$0xff]
    %v683 = vld [vmem:[#allocation8 + $0x260] sm:$0xff]
    %v684 = vld [vmem:[#allocation8 + $0x268] sm:$0xff]
    %v685 = vld [vmem:[#allocation8 + $0x270] sm:$0xff]
    %v686 = vld [vmem:[#allocation8 + $0x278] sm:$0xff]
    %v687 = vld [vmem:[#allocation8 + $0x280] sm:$0xff]
    %v688 = vld [vmem:[#allocation8 + $0x288] sm:$0xff]
    %v689 = vld [vmem:[#allocation8 + $0x290] sm:$0xff]
    %v690 = vld [vmem:[#allocation8 + $0x298] sm:$0xff]
    %v691 = vld [vmem:[#allocation8 + $0x2a0] sm:$0xff]
    %v692 = vld [vmem:[#allocation8 + $0x2a8] sm:$0xff]
    %v693 = vld [vmem:[#allocation8 + $0x2b0] sm:$0xff]
    %v694 = vld [vmem:[#allocation8 + $0x2b8] sm:$0xff]
    %v695 = vld [vmem:[#allocation8 + $0x2c0] sm:$0xff]
    %v696 = vld [vmem:[#allocation8 + $0x2c8] sm:$0xff]
    %v697 = vld [vmem:[#allocation8 + $0x2d0] sm:$0xff]
    %v698 = vld [vmem:[#allocation8 + $0x2d8] sm:$0xff]
    %v699 = vld [vmem:[#allocation8 + $0x2e0] sm:$0xff]
    %v700 = vld [vmem:[#allocation8 + $0x2e8] sm:$0xff]
    %v701 = vld [vmem:[#allocation8 + $0x2f0] sm:$0xff]
    %v702 = vld [vmem:[#allocation8 + $0x2f8] sm:$0xff]
    %v703 = vld [vmem:[#allocation8 + $0x300] sm:$0xff]
    %v704 = vld [vmem:[#allocation8 + $0x308] sm:$0xff]
    %v705 = vld [vmem:[#allocation8 + $0x310] sm:$0xff]
    %v706 = vld [vmem:[#allocation8 + $0x318] sm:$0xff]
    %v707 = vld [vmem:[#allocation8 + $0x320] sm:$0xff]
    %v708 = vld [vmem:[#allocation8 + $0x328] sm:$0xff]
    %v709 = vld [vmem:[#allocation8 + $0x330] sm:$0xff]
    %v710 = vld [vmem:[#allocation8 + $0x338] sm:$0xff]
    %v711 = vld [vmem:[#allocation8 + $0x340] sm:$0xff]
    %v712 = vld [vmem:[#allocation8 + $0x348] sm:$0xff]
    %v713 = vld [vmem:[#allocation8 + $0x350] sm:$0xff]
    %v714 = vld [vmem:[#allocation8 + $0x358] sm:$0xff]
    %v715 = vld [vmem:[#allocation8 + $0x360] sm:$0xff]
    %v716 = vld [vmem:[#allocation8 + $0x368] sm:$0xff]
    %v717 = vld [vmem:[#allocation8 + $0x370] sm:$0xff]
    %v718 = vld [vmem:[#allocation8 + $0x378] sm:$0xff]
    %v719 = vld [vmem:[#allocation8 + $0x380] sm:$0xff]
    %v720 = vld [vmem:[#allocation8 + $0x388] sm:$0xff]
    %v721 = vld [vmem:[#allocation8 + $0x390] sm:$0xff]
    %v722 = vld [vmem:[#allocation8 + $0x398] sm:$0xff]
    %v723 = vld [vmem:[#allocation8 + $0x3a0] sm:$0xff]
    %v724 = vld [vmem:[#allocation8 + $0x3a8] sm:$0xff]
    %v725 = vld [vmem:[#allocation8 + $0x3b0] sm:$0xff]
    %v726 = vld [vmem:[#allocation8 + $0x3b8] sm:$0xff]
    %v727 = vld [vmem:[#allocation8 + $0x3c0] sm:$0xff]
    %v728 = vld [vmem:[#allocation8 + $0x3c8] sm:$0xff]
    %v729 = vld [vmem:[#allocation8 + $0x3d0] sm:$0xff]
    %v730 = vld [vmem:[#allocation8 + $0x3d8] sm:$0xff]
    %v731 = vld [vmem:[#allocation8 + $0x3e0] sm:$0xff]
    %v732 = vld [vmem:[#allocation8 + $0x3e8] sm:$0xff]
    %v733 = vld [vmem:[#allocation8 + $0x3f0] sm:$0xff]
    %v734 = vld [vmem:[#allocation8 + $0x3f8] sm:$0xff]
    %v735 = vld [vmem:[#allocation8 + $0x400] sm:$0xff]
    %v736 = vld [vmem:[#allocation8 + $0x408] sm:$0xff]
    %v737 = vld [vmem:[#allocation8 + $0x410] sm:$0xff]
    %v738 = vld [vmem:[#allocation8 + $0x418] sm:$0xff]
    %v739 = vld [vmem:[#allocation8 + $0x420] sm:$0xff]
    %v740 = vld [vmem:[#allocation8 + $0x428] sm:$0xff]
    %v741 = vld [vmem:[#allocation8 + $0x430] sm:$0xff]
    %v742 = vld [vmem:[#allocation8 + $0x438] sm:$0xff]
    %v743 = vld [vmem:[#allocation8 + $0x440] sm:$0xff]
    %v744 = vld [vmem:[#allocation8 + $0x448] sm:$0xff]
    %v745 = vld [vmem:[#allocation8 + $0x450] sm:$0xff]
    %v746 = vld [vmem:[#allocation8 + $0x458] sm:$0xff]
    %v747 = vld [vmem:[#allocation8 + $0x460] sm:$0xff]
    %v748 = vld [vmem:[#allocation8 + $0x468] sm:$0xff]
    %v749 = vld [vmem:[#allocation8 + $0x470] sm:$0xff]
    %v750 = vld [vmem:[#allocation8 + $0x478] sm:$0xff]
    %v751 = vld [vmem:[#allocation8 + $0x480] sm:$0xff]
    %v752 = vld [vmem:[#allocation8 + $0x488] sm:$0xff]
    %v753 = vld [vmem:[#allocation8 + $0x490] sm:$0xff]
    %v754 = vld [vmem:[#allocation8 + $0x498] sm:$0xff]
    %v755 = vld [vmem:[#allocation8 + $0x4a0] sm:$0xff]
    %v756 = vld [vmem:[#allocation8 + $0x4a8] sm:$0xff]
    %v757 = vld [vmem:[#allocation8 + $0x4b0] sm:$0xff]
    %v758 = vld [vmem:[#allocation8 + $0x4b8] sm:$0xff]
    %v759 = vld [vmem:[#allocation8 + $0x4c0] sm:$0xff]
    %v760 = vld [vmem:[#allocation8 + $0x4c8] sm:$0xff]
    %v761 = vld [vmem:[#allocation8 + $0x4d0] sm:$0xff]
    %v762 = vld [vmem:[#allocation8 + $0x4d8] sm:$0xff]
    %v763 = vld [vmem:[#allocation8 + $0x4e0] sm:$0xff]
    %v764 = vld [vmem:[#allocation8 + $0x4e8] sm:$0xff]
    %v765 = vld [vmem:[#allocation8 + $0x4f0] sm:$0xff]
    %v766 = vld [vmem:[#allocation8 + $0x4f8] sm:$0xff]
    %v767 = vld [vmem:[#allocation8 + $0x500] sm:$0xff]
    %v768 = vld [vmem:[#allocation8 + $0x508] sm:$0xff]
    %v769 = vld [vmem:[#allocation8 + $0x510] sm:$0xff]
    %v770 = vld [vmem:[#allocation8 + $0x518] sm:$0xff]
    %v771 = vld [vmem:[#allocation8 + $0x520] sm:$0xff]
    %v772 = vld [vmem:[#allocation8 + $0x528] sm:$0xff]
    %v773 = vld [vmem:[#allocation8 + $0x530] sm:$0xff]
    %v774 = vld [vmem:[#allocation8 + $0x538] sm:$0xff]
    %v775 = vld [vmem:[#allocation8 + $0x540] sm:$0xff]
    %v776 = vld [vmem:[#allocation8 + $0x548] sm:$0xff]
    %v777 = vld [vmem:[#allocation8 + $0x550] sm:$0xff]
    %v778 = vld [vmem:[#allocation8 + $0x558] sm:$0xff]
    %v779 = vld [vmem:[#allocation8 + $0x560] sm:$0xff]
    %v780 = vld [vmem:[#allocation8 + $0x568] sm:$0xff]
    %v781 = vld [vmem:[#allocation8 + $0x570] sm:$0xff]
    %v782 = vld [vmem:[#allocation8 + $0x578] sm:$0xff]
    %v783 = vld [vmem:[#allocation8 + $0x580] sm:$0xff]
    %v784 = vld [vmem:[#allocation8 + $0x588] sm:$0xff]
    %v785 = vld [vmem:[#allocation8 + $0x590] sm:$0xff]
    %v786 = vld [vmem:[#allocation8 + $0x598] sm:$0xff]
    %v787 = vld [vmem:[#allocation8 + $0x5a0] sm:$0xff]
    %v788 = vld [vmem:[#allocation8 + $0x5a8] sm:$0xff]
    %v789 = vld [vmem:[#allocation8 + $0x5b0] sm:$0xff]
    %v790 = vld [vmem:[#allocation8 + $0x5b8] sm:$0xff]
    %v791 = vld [vmem:[#allocation8 + $0x5c0] sm:$0xff]
    %v792 = vld [vmem:[#allocation8 + $0x5c8] sm:$0xff]
    %v793 = vld [vmem:[#allocation8 + $0x5d0] sm:$0xff]
    %v794 = vld [vmem:[#allocation8 + $0x5d8] sm:$0xff]
    %v795 = vld [vmem:[#allocation8 + $0x5e0] sm:$0xff]
    %v796 = vld [vmem:[#allocation8 + $0x5e8] sm:$0xff]
    %v797 = vld [vmem:[#allocation8 + $0x5f0] sm:$0xff]
    %v798 = vld [vmem:[#allocation8 + $0x5f8] sm:$0xff]
    %v799 = vld [vmem:[#allocation8 + $0x600] sm:$0xff]
    %v800 = vld [vmem:[#allocation8 + $0x608] sm:$0xff]
    %v801 = vld [vmem:[#allocation8 + $0x610] sm:$0xff]
    %v802 = vld [vmem:[#allocation8 + $0x618] sm:$0xff]
    %v803 = vld [vmem:[#allocation8 + $0x620] sm:$0xff]
    %v804 = vld [vmem:[#allocation8 + $0x628] sm:$0xff]
    %v805 = vld [vmem:[#allocation8 + $0x630] sm:$0xff]
    %v806 = vld [vmem:[#allocation8 + $0x638] sm:$0xff]
    %v807 = vld [vmem:[#allocation8 + $0x640] sm:$0xff]
    %v808 = vld [vmem:[#allocation8 + $0x648] sm:$0xff]
    %v809 = vld [vmem:[#allocation8 + $0x650] sm:$0xff]
    %v810 = vld [vmem:[#allocation8 + $0x658] sm:$0xff]
    %v811 = vld [vmem:[#allocation8 + $0x660] sm:$0xff]
    %v812 = vld [vmem:[#allocation8 + $0x668] sm:$0xff]
    %v813 = vld [vmem:[#allocation8 + $0x670] sm:$0xff]
    %v814 = vld [vmem:[#allocation8 + $0x678] sm:$0xff]
    %v815 = vld [vmem:[#allocation8 + $0x680] sm:$0xff]
    %v816 = vld [vmem:[#allocation8 + $0x688] sm:$0xff]
    %v817 = vld [vmem:[#allocation8 + $0x690] sm:$0xff]
    %v818 = vld [vmem:[#allocation8 + $0x698] sm:$0xff]
    %v819 = vld [vmem:[#allocation8 + $0x6a0] sm:$0xff]
    %v820 = vld [vmem:[#allocation8 + $0x6a8] sm:$0xff]
    %v821 = vld [vmem:[#allocation8 + $0x6b0] sm:$0xff]
    %v822 = vld [vmem:[#allocation8 + $0x6b8] sm:$0xff]
    %v823 = vld [vmem:[#allocation8 + $0x6c0] sm:$0xff]
    %v824 = vld [vmem:[#allocation8 + $0x6c8] sm:$0xff]
    %v825 = vld [vmem:[#allocation8 + $0x6d0] sm:$0xff]
    %v826 = vld [vmem:[#allocation8 + $0x6d8] sm:$0xff]
    %v827 = vld [vmem:[#allocation8 + $0x6e0] sm:$0xff]
    %v828 = vld [vmem:[#allocation8 + $0x6e8] sm:$0xff]
    %v829 = vld [vmem:[#allocation8 + $0x6f0] sm:$0xff]
    %v830 = vld [vmem:[#allocation8 + $0x6f8] sm:$0xff]
    %v831 = vld [vmem:[#allocation8 + $0x700] sm:$0xff]
    %v832 = vld [vmem:[#allocation8 + $0x708] sm:$0xff]
    %v833 = vld [vmem:[#allocation8 + $0x710] sm:$0xff]
    %v834 = vld [vmem:[#allocation8 + $0x718] sm:$0xff]
    %v835 = vld [vmem:[#allocation8 + $0x720] sm:$0xff]
    %v836 = vld [vmem:[#allocation8 + $0x728] sm:$0xff]
    %v837 = vld [vmem:[#allocation8 + $0x730] sm:$0xff]
    %v838 = vld [vmem:[#allocation8 + $0x738] sm:$0xff]
    %v839 = vld [vmem:[#allocation8 + $0x740] sm:$0xff]
    %v840 = vld [vmem:[#allocation8 + $0x748] sm:$0xff]
    %v841 = vld [vmem:[#allocation8 + $0x750] sm:$0xff]
    %v842 = vld [vmem:[#allocation8 + $0x758] sm:$0xff]
    %v843 = vld [vmem:[#allocation8 + $0x760] sm:$0xff]
    %v844 = vld [vmem:[#allocation8 + $0x768] sm:$0xff]
    %v845 = vld [vmem:[#allocation8 + $0x770] sm:$0xff]
    %v846 = vld [vmem:[#allocation8 + $0x778] sm:$0xff]
    %v847 = vld [vmem:[#allocation8 + $0x780] sm:$0xff]
    %v848 = vld [vmem:[#allocation8 + $0x788] sm:$0xff]
    %v849 = vld [vmem:[#allocation8 + $0x790] sm:$0xff]
    %v850 = vld [vmem:[#allocation8 + $0x798] sm:$0xff]
    %v851 = vld [vmem:[#allocation8 + $0x7a0] sm:$0xff]
    %v852 = vld [vmem:[#allocation8 + $0x7a8] sm:$0xff]
    %v853 = vld [vmem:[#allocation8 + $0x7b0] sm:$0xff]
    %v854 = vld [vmem:[#allocation8 + $0x7b8] sm:$0xff]
    %v855 = vld [vmem:[#allocation8 + $0x7c0] sm:$0xff]
    %v856 = vld [vmem:[#allocation8 + $0x7c8] sm:$0xff]
    %v857 = vld [vmem:[#allocation8 + $0x7d0] sm:$0xff]
    %v858 = vld [vmem:[#allocation8 + $0x7d8] sm:$0xff]
    %v859 = vld [vmem:[#allocation8 + $0x7e0] sm:$0xff]
    %v860 = vld [vmem:[#allocation8 + $0x7e8] sm:$0xff]
    %v861 = vld [vmem:[#allocation8 + $0x7f0] sm:$0xff]
    %v862 = vld [vmem:[#allocation8 + $0x7f8] sm:$0xff]
    %v863 = vld [vmem:[#allocation8 + $0x800] sm:$0xff]
    %v864 = vld [vmem:[#allocation8 + $0x808] sm:$0xff]
    %v865 = vld [vmem:[#allocation8 + $0x810] sm:$0xff]
    %v866 = vld [vmem:[#allocation8 + $0x818] sm:$0xff]
    %v867 = vld [vmem:[#allocation8 + $0x820] sm:$0xff]
    %v868 = vld [vmem:[#allocation8 + $0x828] sm:$0xff]
    %v869 = vld [vmem:[#allocation8 + $0x830] sm:$0xff]
    %v870 = vld [vmem:[#allocation8 + $0x838] sm:$0xff]
    %v871 = vld [vmem:[#allocation8 + $0x840] sm:$0xff]
    %v872 = vld [vmem:[#allocation8 + $0x848] sm:$0xff]
    %v873 = vld [vmem:[#allocation8 + $0x850] sm:$0xff]
    %v874 = vld [vmem:[#allocation8 + $0x858] sm:$0xff]
    %v875 = vld [vmem:[#allocation8 + $0x860] sm:$0xff]
    %v876 = vld [vmem:[#allocation8 + $0x868] sm:$0xff]
    %v877 = vld [vmem:[#allocation8 + $0x870] sm:$0xff]
    %v878 = vld [vmem:[#allocation8 + $0x878] sm:$0xff]
    %v879 = vld [vmem:[#allocation8 + $0x880] sm:$0xff]
    %v880 = vld [vmem:[#allocation8 + $0x888] sm:$0xff]
    %v881 = vld [vmem:[#allocation8 + $0x890] sm:$0xff]
    %v882 = vld [vmem:[#allocation8 + $0x898] sm:$0xff]
    %v883 = vld [vmem:[#allocation8 + $0x8a0] sm:$0xff]
    %v884 = vld [vmem:[#allocation8 + $0x8a8] sm:$0xff]
    %v885 = vld [vmem:[#allocation8 + $0x8b0] sm:$0xff]
    %v886 = vld [vmem:[#allocation8 + $0x8b8] sm:$0xff]
    %v887 = vld [vmem:[#allocation8 + $0x8c0] sm:$0xff]
    %v888 = vld [vmem:[#allocation8 + $0x8c8] sm:$0xff]
    %v889 = vld [vmem:[#allocation8 + $0x8d0] sm:$0xff]
    %v890 = vld [vmem:[#allocation8 + $0x8d8] sm:$0xff]
    %v891 = vld [vmem:[#allocation8 + $0x8e0] sm:$0xff]
    %v892 = vld [vmem:[#allocation8 + $0x8e8] sm:$0xff]
    %v893 = vld [vmem:[#allocation8 + $0x8f0] sm:$0xff]
    %v894 = vld [vmem:[#allocation8 + $0x8f8] sm:$0xff]
    %v895 = vld [vmem:[#allocation8 + $0x900] sm:$0xff]
    %v896 = vld [vmem:[#allocation8 + $0x908] sm:$0xff]
    %v897 = vld [vmem:[#allocation8 + $0x910] sm:$0xff]
    %v898 = vld [vmem:[#allocation8 + $0x918] sm:$0xff]
    %v899 = vld [vmem:[#allocation8 + $0x920] sm:$0xff]
    %v900 = vld [vmem:[#allocation8 + $0x928] sm:$0xff]
    %v901 = vld [vmem:[#allocation8 + $0x930] sm:$0xff]
    %v902 = vld [vmem:[#allocation8 + $0x938] sm:$0xff]
    %v903 = vld [vmem:[#allocation8 + $0x940] sm:$0xff]
    %v904 = vld [vmem:[#allocation8 + $0x948] sm:$0xff]
    %v905 = vld [vmem:[#allocation8 + $0x950] sm:$0xff]
    %v906 = vld [vmem:[#allocation8 + $0x958] sm:$0xff]
    %v907 = vld [vmem:[#allocation8 + $0x960] sm:$0xff]
    %v908 = vld [vmem:[#allocation8 + $0x968] sm:$0xff]
    %v909 = vld [vmem:[#allocation8 + $0x970] sm:$0xff]
    %v910 = vld [vmem:[#allocation8 + $0x978] sm:$0xff]
    %v911 = vld [vmem:[#allocation8 + $0x980] sm:$0xff]
    %v912 = vld [vmem:[#allocation8 + $0x988] sm:$0xff]
    %v913 = vld [vmem:[#allocation8 + $0x990] sm:$0xff]
    %v914 = vld [vmem:[#allocation8 + $0x998] sm:$0xff]
    %v915 = vld [vmem:[#allocation8 + $0x9a0] sm:$0xff]
    %v916 = vld [vmem:[#allocation8 + $0x9a8] sm:$0xff]
    %v917 = vld [vmem:[#allocation8 + $0x9b0] sm:$0xff]
    %v918 = vld [vmem:[#allocation8 + $0x9b8] sm:$0xff]
    %v919 = vld [vmem:[#allocation8 + $0x9c0] sm:$0xff]
    %v920 = vld [vmem:[#allocation8 + $0x9c8] sm:$0xff]
    %v921 = vld [vmem:[#allocation8 + $0x9d0] sm:$0xff]
    %v922 = vld [vmem:[#allocation8 + $0x9d8] sm:$0xff]
    %v923 = vld [vmem:[#allocation8 + $0x9e0] sm:$0xff]
    %v924 = vld [vmem:[#allocation8 + $0x9e8] sm:$0xff]
    %v925 = vld [vmem:[#allocation8 + $0x9f0] sm:$0xff]
    %v926 = vld [vmem:[#allocation8 + $0x9f8] sm:$0xff]
    %v927 = vld [vmem:[#allocation8 + $0xa00] sm:$0xff]
    %v928 = vld [vmem:[#allocation8 + $0xa08] sm:$0xff]
    %v929 = vld [vmem:[#allocation8 + $0xa10] sm:$0xff]
    %v930 = vld [vmem:[#allocation8 + $0xa18] sm:$0xff]
    %v931 = vld [vmem:[#allocation8 + $0xa20] sm:$0xff]
    %v932 = vld [vmem:[#allocation8 + $0xa28] sm:$0xff]
    %v933 = vld [vmem:[#allocation8 + $0xa30] sm:$0xff]
    %v934 = vld [vmem:[#allocation8 + $0xa38] sm:$0xff]
    %v935 = vld [vmem:[#allocation8 + $0xa40] sm:$0xff]
    %v936 = vld [vmem:[#allocation8 + $0xa48] sm:$0xff]
    %v937 = vld [vmem:[#allocation8 + $0xa50] sm:$0xff]
    %v938 = vld [vmem:[#allocation8 + $0xa58] sm:$0xff]
    %v939 = vld [vmem:[#allocation8 + $0xa60] sm:$0xff]
    %v940 = vld [vmem:[#allocation8 + $0xa68] sm:$0xff]
    %v941 = vld [vmem:[#allocation8 + $0xa70] sm:$0xff]
    %v942 = vld [vmem:[#allocation8 + $0xa78] sm:$0xff]
    %v943 = vld [vmem:[#allocation8 + $0xa80] sm:$0xff]
    %v944 = vld [vmem:[#allocation8 + $0xa88] sm:$0xff]
    %v945 = vld [vmem:[#allocation8 + $0xa90] sm:$0xff]
    %v946 = vld [vmem:[#allocation8 + $0xa98] sm:$0xff]
    %v947 = vld [vmem:[#allocation8 + $0xaa0] sm:$0xff]
    %v948 = vld [vmem:[#allocation8 + $0xaa8] sm:$0xff]
    %v949 = vld [vmem:[#allocation8 + $0xab0] sm:$0xff]
    %v950 = vld [vmem:[#allocation8 + $0xab8] sm:$0xff]
    %v951 = vld [vmem:[#allocation8 + $0xac0] sm:$0xff]
    %v952 = vld [vmem:[#allocation8 + $0xac8] sm:$0xff]
    %v953 = vld [vmem:[#allocation8 + $0xad0] sm:$0xff]
    %v954 = vld [vmem:[#allocation8 + $0xad8] sm:$0xff]
    %v955 = vld [vmem:[#allocation8 + $0xae0] sm:$0xff]
    %v956 = vld [vmem:[#allocation8 + $0xae8] sm:$0xff]
    %v957 = vld [vmem:[#allocation8 + $0xaf0] sm:$0xff]
    %v958 = vld [vmem:[#allocation8 + $0xaf8] sm:$0xff]
    %v959 = vld [vmem:[#allocation8 + $0xb00] sm:$0xff]
    %v960 = vld [vmem:[#allocation8 + $0xb08] sm:$0xff]
    %v961 = vld [vmem:[#allocation8 + $0xb10] sm:$0xff]
    %v962 = vld [vmem:[#allocation8 + $0xb18] sm:$0xff]
    %v963 = vld [vmem:[#allocation8 + $0xb20] sm:$0xff]
    %v964 = vld [vmem:[#allocation8 + $0xb28] sm:$0xff]
    %v965 = vld [vmem:[#allocation8 + $0xb30] sm:$0xff]
    %v966 = vld [vmem:[#allocation8 + $0xb38] sm:$0xff]
    %v967 = vld [vmem:[#allocation8 + $0xb40] sm:$0xff]
    %v968 = vld [vmem:[#allocation8 + $0xb48] sm:$0xff]
    %v969 = vld [vmem:[#allocation8 + $0xb50] sm:$0xff]
    %v970 = vld [vmem:[#allocation8 + $0xb58] sm:$0xff]
    %v971 = vld [vmem:[#allocation8 + $0xb60] sm:$0xff]
    %v972 = vld [vmem:[#allocation8 + $0xb68] sm:$0xff]
    %v973 = vld [vmem:[#allocation8 + $0xb70] sm:$0xff]
    %v974 = vld [vmem:[#allocation8 + $0xb78] sm:$0xff]
    %v975 = vld [vmem:[#allocation8 + $0xb80] sm:$0xff]
    %v976 = vld [vmem:[#allocation8 + $0xb88] sm:$0xff]
    %v977 = vld [vmem:[#allocation8 + $0xb90] sm:$0xff]
    %v978 = vld [vmem:[#allocation8 + $0xb98] sm:$0xff]
    %v979 = vld [vmem:[#allocation8 + $0xba0] sm:$0xff]
    %v980 = vld [vmem:[#allocation8 + $0xba8] sm:$0xff]
    %v981 = vld [vmem:[#allocation8 + $0xbb0] sm:$0xff]
    %v982 = vld [vmem:[#allocation8 + $0xbb8] sm:$0xff]
    %v983 = vld [vmem:[#allocation8 + $0xbc0] sm:$0xff]
    %v984 = vld [vmem:[#allocation8 + $0xbc8] sm:$0xff]
    %v985 = vld [vmem:[#allocation8 + $0xbd0] sm:$0xff]
    %v986 = vld [vmem:[#allocation8 + $0xbd8] sm:$0xff]
    %v987 = vld [vmem:[#allocation8 + $0xbe0] sm:$0xff]
    %v988 = vld [vmem:[#allocation8 + $0xbe8] sm:$0xff]
    %v989 = vld [vmem:[#allocation8 + $0xbf0] sm:$0xff]
    %v990 = vld [vmem:[#allocation8 + $0xbf8] sm:$0xff]
    %v991 = vld [vmem:[#allocation8 + $0xc00] sm:$0xff]
    %v992 = vld [vmem:[#allocation8 + $0xc08] sm:$0xff]
    %v993 = vld [vmem:[#allocation8 + $0xc10] sm:$0xff]
    %v994 = vld [vmem:[#allocation8 + $0xc18] sm:$0xff]
    %v995 = vld [vmem:[#allocation8 + $0xc20] sm:$0xff]
    %v996 = vld [vmem:[#allocation8 + $0xc28] sm:$0xff]
    %v997 = vld [vmem:[#allocation8 + $0xc30] sm:$0xff]
    %v998 = vld [vmem:[#allocation8 + $0xc38] sm:$0xff]
    %v999 = vld [vmem:[#allocation8 + $0xc40] sm:$0xff]
    %v1000 = vld [vmem:[#allocation8 + $0xc48] sm:$0xff]
    %v1001 = vld [vmem:[#allocation8 + $0xc50] sm:$0xff]
    %v1002 = vld [vmem:[#allocation8 + $0xc58] sm:$0xff]
    %v1003 = vld [vmem:[#allocation8 + $0xc60] sm:$0xff]
    %v1004 = vld [vmem:[#allocation8 + $0xc68] sm:$0xff]
    %v1005 = vld [vmem:[#allocation8 + $0xc70] sm:$0xff]
    %v1006 = vld [vmem:[#allocation8 + $0xc78] sm:$0xff]
    %v1007 = vld [vmem:[#allocation8 + $0xc80] sm:$0xff]
    %v1008 = vld [vmem:[#allocation8 + $0xc88] sm:$0xff]
    %v1009 = vld [vmem:[#allocation8 + $0xc90] sm:$0xff]
    %v1010 = vld [vmem:[#allocation8 + $0xc98] sm:$0xff]
    %v1011 = vld [vmem:[#allocation8 + $0xca0] sm:$0xff]
    %v1012 = vld [vmem:[#allocation8 + $0xca8] sm:$0xff]
    %v1013 = vld [vmem:[#allocation8 + $0xcb0] sm:$0xff]
    %v1014 = vld [vmem:[#allocation8 + $0xcb8] sm:$0xff]
    %v1015 = vld [vmem:[#allocation8 + $0xcc0] sm:$0xff]
    %v1016 = vld [vmem:[#allocation8 + $0xcc8] sm:$0xff]
    %v1017 = vld [vmem:[#allocation8 + $0xcd0] sm:$0xff]
    %v1018 = vld [vmem:[#allocation8 + $0xcd8] sm:$0xff]
    %v1019 = vld [vmem:[#allocation8 + $0xce0] sm:$0xff]
    %v1020 = vld [vmem:[#allocation8 + $0xce8] sm:$0xff]
    %v1021 = vld [vmem:[#allocation8 + $0xcf0] sm:$0xff]
    %v1022 = vld [vmem:[#allocation8 + $0xcf8] sm:$0xff]
    %v1023 = vld [vmem:[#allocation8 + $0xd00] sm:$0xff]
    %v1024 = vld [vmem:[#allocation8 + $0xd08] sm:$0xff]
    %v1025 = vld [vmem:[#allocation8 + $0xd10] sm:$0xff]
    %v1026 = vld [vmem:[#allocation8 + $0xd18] sm:$0xff]
    %v1027 = vld [vmem:[#allocation8 + $0xd20] sm:$0xff]
    %v1028 = vld [vmem:[#allocation8 + $0xd28] sm:$0xff]
    %v1029 = vld [vmem:[#allocation8 + $0xd30] sm:$0xff]
    %v1030 = vld [vmem:[#allocation8 + $0xd38] sm:$0xff]
    %v1031 = vld [vmem:[#allocation8 + $0xd40] sm:$0xff]
    %v1032 = vld [vmem:[#allocation8 + $0xd48] sm:$0xff]
    %v1033 = vld [vmem:[#allocation8 + $0xd50] sm:$0xff]
    %v1034 = vld [vmem:[#allocation8 + $0xd58] sm:$0xff]
    %v1035 = vld [vmem:[#allocation8 + $0xd60] sm:$0xff]
    %v1036 = vld [vmem:[#allocation8 + $0xd68] sm:$0xff]
    %v1037 = vld [vmem:[#allocation8 + $0xd70] sm:$0xff]
    %v1038 = vld [vmem:[#allocation8 + $0xd78] sm:$0xff]
    %v1039 = vld [vmem:[#allocation8 + $0xd80] sm:$0xff]
    %v1040 = vld [vmem:[#allocation8 + $0xd88] sm:$0xff]
    %v1041 = vld [vmem:[#allocation8 + $0xd90] sm:$0xff]
    %v1042 = vld [vmem:[#allocation8 + $0xd98] sm:$0xff]
    %v1043 = vld [vmem:[#allocation8 + $0xda0] sm:$0xff]
    %v1044 = vld [vmem:[#allocation8 + $0xda8] sm:$0xff]
    %v1045 = vld [vmem:[#allocation8 + $0xdb0] sm:$0xff]
    %v1046 = vld [vmem:[#allocation8 + $0xdb8] sm:$0xff]
    %v1047 = vld [vmem:[#allocation8 + $0xdc0] sm:$0xff]
    %v1048 = vld [vmem:[#allocation8 + $0xdc8] sm:$0xff]
    %v1049 = vld [vmem:[#allocation8 + $0xdd0] sm:$0xff]
    %v1050 = vld [vmem:[#allocation8 + $0xdd8] sm:$0xff]
    %v1051 = vld [vmem:[#allocation8 + $0xde0] sm:$0xff]
    %v1052 = vld [vmem:[#allocation8 + $0xde8] sm:$0xff]
    %v1053 = vld [vmem:[#allocation8 + $0xdf0] sm:$0xff]
    %v1054 = vld [vmem:[#allocation8 + $0xdf8] sm:$0xff]
    %v1055 = vld [vmem:[#allocation8 + $0xe00] sm:$0xff]
    %v1056 = vld [vmem:[#allocation8 + $0xe08] sm:$0xff]
    %v1057 = vld [vmem:[#allocation8 + $0xe10] sm:$0xff]
    %v1058 = vld [vmem:[#allocation8 + $0xe18] sm:$0xff]
    %v1059 = vld [vmem:[#allocation8 + $0xe20] sm:$0xff]
    %v1060 = vld [vmem:[#allocation8 + $0xe28] sm:$0xff]
    %v1061 = vld [vmem:[#allocation8 + $0xe30] sm:$0xff]
    %v1062 = vld [vmem:[#allocation8 + $0xe38] sm:$0xff]
    %v1063 = vld [vmem:[#allocation8 + $0xe40] sm:$0xff]
    %v1064 = vld [vmem:[#allocation8 + $0xe48] sm:$0xff]
    %v1065 = vld [vmem:[#allocation8 + $0xe50] sm:$0xff]
    %v1066 = vld [vmem:[#allocation8 + $0xe58] sm:$0xff]
    %v1067 = vld [vmem:[#allocation8 + $0xe60] sm:$0xff]
    %v1068 = vld [vmem:[#allocation8 + $0xe68] sm:$0xff]
    %v1069 = vld [vmem:[#allocation8 + $0xe70] sm:$0xff]
    %v1070 = vld [vmem:[#allocation8 + $0xe78] sm:$0xff]
    %v1071 = vld [vmem:[#allocation8 + $0xe80] sm:$0xff]
    %v1072 = vld [vmem:[#allocation8 + $0xe88] sm:$0xff]
    %v1073 = vld [vmem:[#allocation8 + $0xe90] sm:$0xff]
    %v1074 = vld [vmem:[#allocation8 + $0xe98] sm:$0xff]
    %v1075 = vld [vmem:[#allocation8 + $0xea0] sm:$0xff]
    %v1076 = vld [vmem:[#allocation8 + $0xea8] sm:$0xff]
    %v1077 = vld [vmem:[#allocation8 + $0xeb0] sm:$0xff]
    %v1078 = vld [vmem:[#allocation8 + $0xeb8] sm:$0xff]
    %v1079 = vld [vmem:[#allocation8 + $0xec0] sm:$0xff]
    %v1080 = vld [vmem:[#allocation8 + $0xec8] sm:$0xff]
    %v1081 = vld [vmem:[#allocation8 + $0xed0] sm:$0xff]
    %v1082 = vld [vmem:[#allocation8 + $0xed8] sm:$0xff]
    %v1083 = vld [vmem:[#allocation8 + $0xee0] sm:$0xff]
    %v1084 = vld [vmem:[#allocation8 + $0xee8] sm:$0xff]
    %v1085 = vld [vmem:[#allocation8 + $0xef0] sm:$0xff]
    %v1086 = vld [vmem:[#allocation8 + $0xef8] sm:$0xff]
    %v1087 = vld [vmem:[#allocation8 + $0xf00] sm:$0xff]
    %v1088 = vld [vmem:[#allocation8 + $0xf08] sm:$0xff]
    %v1089 = vld [vmem:[#allocation8 + $0xf10] sm:$0xff]
    %v1090 = vld [vmem:[#allocation8 + $0xf18] sm:$0xff]
    %v1091 = vld [vmem:[#allocation8 + $0xf20] sm:$0xff]
    %v1092 = vld [vmem:[#allocation8 + $0xf28] sm:$0xff]
    %v1093 = vld [vmem:[#allocation8 + $0xf30] sm:$0xff]
    %v1094 = vld [vmem:[#allocation8 + $0xf38] sm:$0xff]
    %v1095 = vld [vmem:[#allocation8 + $0xf40] sm:$0xff]
    %v1096 = vld [vmem:[#allocation8 + $0xf48] sm:$0xff]
    %v1097 = vld [vmem:[#allocation8 + $0xf50] sm:$0xff]
    %v1098 = vld [vmem:[#allocation8 + $0xf58] sm:$0xff]
    %v1099 = vld [vmem:[#allocation8 + $0xf60] sm:$0xff]
    %v1100 = vld [vmem:[#allocation8 + $0xf68] sm:$0xff]
    %v1101 = vld [vmem:[#allocation8 + $0xf70] sm:$0xff]
    %v1102 = vld [vmem:[#allocation8 + $0xf78] sm:$0xff]
    %v1103 = vld [vmem:[#allocation8 + $0xf80] sm:$0xff]
    %v1104 = vld [vmem:[#allocation8 + $0xf88] sm:$0xff]
    %v1105 = vld [vmem:[#allocation8 + $0xf90] sm:$0xff]
    %v1106 = vld [vmem:[#allocation8 + $0xf98] sm:$0xff]
    %v1107 = vld [vmem:[#allocation8 + $0xfa0] sm:$0xff]
    %v1108 = vld [vmem:[#allocation8 + $0xfa8] sm:$0xff]
    %v1109 = vld [vmem:[#allocation8 + $0xfb0] sm:$0xff]
    %v1110 = vld [vmem:[#allocation8 + $0xfb8] sm:$0xff]
    %v1111 = vld [vmem:[#allocation8 + $0xfc0] sm:$0xff]
    %v1112 = vld [vmem:[#allocation8 + $0xfc8] sm:$0xff]
    %v1113 = vld [vmem:[#allocation8 + $0xfd0] sm:$0xff]
    %v1114 = vld [vmem:[#allocation8 + $0xfd8] sm:$0xff]
    %v1115 = vld [vmem:[#allocation8 + $0xfe0] sm:$0xff]
    %v1116 = vld [vmem:[#allocation8 + $0xfe8] sm:$0xff]
    %v1117 = vld [vmem:[#allocation8 + $0xff0] sm:$0xff]
    %v1118 = vld [vmem:[#allocation8 + $0xff8] sm:$0xff]
    %v1119 = vld [vmem:[#allocation10] sm:$0xff]
    %v1120 = vld [vmem:[#allocation10 + $0x8] sm:$0xff]
    %v1123 = vperm.slane %v1119, 0
    %v1124 = vperm.slane %v1119, 1
    %v1125 = vperm.slane %v1119, 2
    %v1126 = vperm.slane %v1119, 3
    %v1127 = vperm.slane %v1119, 4
    %v1128 = vperm.slane %v1119, 5
    %v1129 = vperm.slane %v1119, 6
    %v1130 = vperm.slane %v1119, 7
    %v1131 = vperm.slane %v1120, 0
    %v1132 = vperm.slane %v1120, 1
    %v1133 = vperm.slane %v1120, 2
    %v1134 = vperm.slane %v1120, 3
    %v1135 = vperm.slane %v1120, 4
    %v1136 = vperm.slane %v1120, 5
    %v1137 = vperm.slane %v1120, 6
    %v1138 = vperm.slane %v1120, 7
    %v1667 = vunpack.c.l.b16 %v607
    %v1668 = vunpack.c.h.b16 %v607
    %v1669 = vunpack.c.l.b16 %v608
    %v1670 = vunpack.c.h.b16 %v608
    %v1671 = vunpack.c.l.b16 %v609
    %v1672 = vunpack.c.h.b16 %v609
    %v1673 = vunpack.c.l.b16 %v610
    %v1674 = vunpack.c.h.b16 %v610
    %v1675 = vunpack.c.l.b16 %v611
    %v1676 = vunpack.c.h.b16 %v611
    %v1677 = vunpack.c.l.b16 %v612
    %v1678 = vunpack.c.h.b16 %v612
    %v1679 = vunpack.c.l.b16 %v613
    %v1680 = vunpack.c.h.b16 %v613
    %v1681 = vunpack.c.l.b16 %v614
    %v1682 = vunpack.c.h.b16 %v614
    %v1683 = vunpack.c.l.b16 %v615
    %v1684 = vunpack.c.h.b16 %v615
    %v1685 = vunpack.c.l.b16 %v616
    %v1686 = vunpack.c.h.b16 %v616
    %v1687 = vunpack.c.l.b16 %v617
    %v1688 = vunpack.c.h.b16 %v617
    %v1689 = vunpack.c.l.b16 %v618
    %v1690 = vunpack.c.h.b16 %v618
    %v1691 = vunpack.c.l.b16 %v619
    %v1692 = vunpack.c.h.b16 %v619
    %v1693 = vunpack.c.l.b16 %v620
    %v1694 = vunpack.c.h.b16 %v620
    %v1695 = vunpack.c.l.b16 %v621
    %v1696 = vunpack.c.h.b16 %v621
    %v1697 = vunpack.c.l.b16 %v622
    %v1698 = vunpack.c.h.b16 %v622
    %v1699 = vunpack.c.l.b16 %v623
    %v1700 = vunpack.c.h.b16 %v623
    %v1701 = vunpack.c.l.b16 %v624
    %v1702 = vunpack.c.h.b16 %v624
    %v1703 = vunpack.c.l.b16 %v625
    %v1704 = vunpack.c.h.b16 %v625
    %v1705 = vunpack.c.l.b16 %v626
    %v1706 = vunpack.c.h.b16 %v626
    %v1707 = vunpack.c.l.b16 %v627
    %v1708 = vunpack.c.h.b16 %v627
    %v1709 = vunpack.c.l.b16 %v628
    %v1710 = vunpack.c.h.b16 %v628
    %v1711 = vunpack.c.l.b16 %v629
    %v1712 = vunpack.c.h.b16 %v629
    %v1713 = vunpack.c.l.b16 %v630
    %v1714 = vunpack.c.h.b16 %v630
    %v1715 = vunpack.c.l.b16 %v631
    %v1716 = vunpack.c.h.b16 %v631
    %v1717 = vunpack.c.l.b16 %v632
    %v1718 = vunpack.c.h.b16 %v632
    %v1719 = vunpack.c.l.b16 %v633
    %v1720 = vunpack.c.h.b16 %v633
    %v1721 = vunpack.c.l.b16 %v634
    %v1722 = vunpack.c.h.b16 %v634
    %v1723 = vunpack.c.l.b16 %v635
    %v1724 = vunpack.c.h.b16 %v635
    %v1725 = vunpack.c.l.b16 %v636
    %v1726 = vunpack.c.h.b16 %v636
    %v1727 = vunpack.c.l.b16 %v637
    %v1728 = vunpack.c.h.b16 %v637
    %v1729 = vunpack.c.l.b16 %v638
    %v1730 = vunpack.c.h.b16 %v638
    %v1731 = vunpack.c.l.b16 %v639
    %v1732 = vunpack.c.h.b16 %v639
    %v1733 = vunpack.c.l.b16 %v640
    %v1734 = vunpack.c.h.b16 %v640
    %v1735 = vunpack.c.l.b16 %v641
    %v1736 = vunpack.c.h.b16 %v641
    %v1737 = vunpack.c.l.b16 %v642
    %v1738 = vunpack.c.h.b16 %v642
    %v1739 = vunpack.c.l.b16 %v643
    %v1740 = vunpack.c.h.b16 %v643
    %v1741 = vunpack.c.l.b16 %v644
    %v1742 = vunpack.c.h.b16 %v644
    %v1743 = vunpack.c.l.b16 %v645
    %v1744 = vunpack.c.h.b16 %v645
    %v1745 = vunpack.c.l.b16 %v646
    %v1746 = vunpack.c.h.b16 %v646
    %v1747 = vunpack.c.l.b16 %v647
    %v1748 = vunpack.c.h.b16 %v647
    %v1749 = vunpack.c.l.b16 %v648
    %v1750 = vunpack.c.h.b16 %v648
    %v1751 = vunpack.c.l.b16 %v649
    %v1752 = vunpack.c.h.b16 %v649
    %v1753 = vunpack.c.l.b16 %v650
    %v1754 = vunpack.c.h.b16 %v650
    %v1755 = vunpack.c.l.b16 %v651
    %v1756 = vunpack.c.h.b16 %v651
    %v1757 = vunpack.c.l.b16 %v652
    %v1758 = vunpack.c.h.b16 %v652
    %v1759 = vunpack.c.l.b16 %v653
    %v1760 = vunpack.c.h.b16 %v653
    %v1761 = vunpack.c.l.b16 %v654
    %v1762 = vunpack.c.h.b16 %v654
    %v1763 = vunpack.c.l.b16 %v655
    %v1764 = vunpack.c.h.b16 %v655
    %v1765 = vunpack.c.l.b16 %v656
    %v1766 = vunpack.c.h.b16 %v656
    %v1767 = vunpack.c.l.b16 %v657
    %v1768 = vunpack.c.h.b16 %v657
    %v1769 = vunpack.c.l.b16 %v658
    %v1770 = vunpack.c.h.b16 %v658
    %v1771 = vunpack.c.l.b16 %v659
    %v1772 = vunpack.c.h.b16 %v659
    %v1773 = vunpack.c.l.b16 %v660
    %v1774 = vunpack.c.h.b16 %v660
    %v1775 = vunpack.c.l.b16 %v661
    %v1776 = vunpack.c.h.b16 %v661
    %v1777 = vunpack.c.l.b16 %v662
    %v1778 = vunpack.c.h.b16 %v662
    %v1779 = vunpack.c.l.b16 %v663
    %v1780 = vunpack.c.h.b16 %v663
    %v1781 = vunpack.c.l.b16 %v664
    %v1782 = vunpack.c.h.b16 %v664
    %v1783 = vunpack.c.l.b16 %v665
    %v1784 = vunpack.c.h.b16 %v665
    %v1785 = vunpack.c.l.b16 %v666
    %v1786 = vunpack.c.h.b16 %v666
    %v1787 = vunpack.c.l.b16 %v667
    %v1788 = vunpack.c.h.b16 %v667
    %v1789 = vunpack.c.l.b16 %v668
    %v1790 = vunpack.c.h.b16 %v668
    %v1791 = vunpack.c.l.b16 %v669
    %v1792 = vunpack.c.h.b16 %v669
    %v1793 = vunpack.c.l.b16 %v670
    %v1794 = vunpack.c.h.b16 %v670
    %v1795 = vunpack.c.l.b16 %v671
    %v1796 = vunpack.c.h.b16 %v671
    %v1797 = vunpack.c.l.b16 %v672
    %v1798 = vunpack.c.h.b16 %v672
    %v1799 = vunpack.c.l.b16 %v673
    %v1800 = vunpack.c.h.b16 %v673
    %v1801 = vunpack.c.l.b16 %v674
    %v1802 = vunpack.c.h.b16 %v674
    %v1803 = vunpack.c.l.b16 %v675
    %v1804 = vunpack.c.h.b16 %v675
    %v1805 = vunpack.c.l.b16 %v676
    %v1806 = vunpack.c.h.b16 %v676
    %v1807 = vunpack.c.l.b16 %v677
    %v1808 = vunpack.c.h.b16 %v677
    %v1809 = vunpack.c.l.b16 %v678
    %v1810 = vunpack.c.h.b16 %v678
    %v1811 = vunpack.c.l.b16 %v679
    %v1812 = vunpack.c.h.b16 %v679
    %v1813 = vunpack.c.l.b16 %v680
    %v1814 = vunpack.c.h.b16 %v680
    %v1815 = vunpack.c.l.b16 %v681
    %v1816 = vunpack.c.h.b16 %v681
    %v1817 = vunpack.c.l.b16 %v682
    %v1818 = vunpack.c.h.b16 %v682
    %v1819 = vunpack.c.l.b16 %v683
    %v1820 = vunpack.c.h.b16 %v683
    %v1821 = vunpack.c.l.b16 %v684
    %v1822 = vunpack.c.h.b16 %v684
    %v1823 = vunpack.c.l.b16 %v685
    %v1824 = vunpack.c.h.b16 %v685
    %v1825 = vunpack.c.l.b16 %v686
    %v1826 = vunpack.c.h.b16 %v686
    %v1827 = vunpack.c.l.b16 %v687
    %v1828 = vunpack.c.h.b16 %v687
    %v1829 = vunpack.c.l.b16 %v688
    %v1830 = vunpack.c.h.b16 %v688
    %v1831 = vunpack.c.l.b16 %v689
    %v1832 = vunpack.c.h.b16 %v689
    %v1833 = vunpack.c.l.b16 %v690
    %v1834 = vunpack.c.h.b16 %v690
    %v1835 = vunpack.c.l.b16 %v691
    %v1836 = vunpack.c.h.b16 %v691
    %v1837 = vunpack.c.l.b16 %v692
    %v1838 = vunpack.c.h.b16 %v692
    %v1839 = vunpack.c.l.b16 %v693
    %v1840 = vunpack.c.h.b16 %v693
    %v1841 = vunpack.c.l.b16 %v694
    %v1842 = vunpack.c.h.b16 %v694
    %v1843 = vunpack.c.l.b16 %v695
    %v1844 = vunpack.c.h.b16 %v695
    %v1845 = vunpack.c.l.b16 %v696
    %v1846 = vunpack.c.h.b16 %v696
    %v1847 = vunpack.c.l.b16 %v697
    %v1848 = vunpack.c.h.b16 %v697
    %v1849 = vunpack.c.l.b16 %v698
    %v1850 = vunpack.c.h.b16 %v698
    %v1851 = vunpack.c.l.b16 %v699
    %v1852 = vunpack.c.h.b16 %v699
    %v1853 = vunpack.c.l.b16 %v700
    %v1854 = vunpack.c.h.b16 %v700
    %v1855 = vunpack.c.l.b16 %v701
    %v1856 = vunpack.c.h.b16 %v701
    %v1857 = vunpack.c.l.b16 %v702
    %v1858 = vunpack.c.h.b16 %v702
    %v1859 = vunpack.c.l.b16 %v703
    %v1860 = vunpack.c.h.b16 %v703
    %v1861 = vunpack.c.l.b16 %v704
    %v1862 = vunpack.c.h.b16 %v704
    %v1863 = vunpack.c.l.b16 %v705
    %v1864 = vunpack.c.h.b16 %v705
    %v1865 = vunpack.c.l.b16 %v706
    %v1866 = vunpack.c.h.b16 %v706
    %v1867 = vunpack.c.l.b16 %v707
    %v1868 = vunpack.c.h.b16 %v707
    %v1869 = vunpack.c.l.b16 %v708
    %v1870 = vunpack.c.h.b16 %v708
    %v1871 = vunpack.c.l.b16 %v709
    %v1872 = vunpack.c.h.b16 %v709
    %v1873 = vunpack.c.l.b16 %v710
    %v1874 = vunpack.c.h.b16 %v710
    %v1875 = vunpack.c.l.b16 %v711
    %v1876 = vunpack.c.h.b16 %v711
    %v1877 = vunpack.c.l.b16 %v712
    %v1878 = vunpack.c.h.b16 %v712
    %v1879 = vunpack.c.l.b16 %v713
    %v1880 = vunpack.c.h.b16 %v713
    %v1881 = vunpack.c.l.b16 %v714
    %v1882 = vunpack.c.h.b16 %v714
    %v1883 = vunpack.c.l.b16 %v715
    %v1884 = vunpack.c.h.b16 %v715
    %v1885 = vunpack.c.l.b16 %v716
    %v1886 = vunpack.c.h.b16 %v716
    %v1887 = vunpack.c.l.b16 %v717
    %v1888 = vunpack.c.h.b16 %v717
    %v1889 = vunpack.c.l.b16 %v718
    %v1890 = vunpack.c.h.b16 %v718
    %v1891 = vunpack.c.l.b16 %v719
    %v1892 = vunpack.c.h.b16 %v719
    %v1893 = vunpack.c.l.b16 %v720
    %v1894 = vunpack.c.h.b16 %v720
    %v1895 = vunpack.c.l.b16 %v721
    %v1896 = vunpack.c.h.b16 %v721
    %v1897 = vunpack.c.l.b16 %v722
    %v1898 = vunpack.c.h.b16 %v722
    %v1899 = vunpack.c.l.b16 %v723
    %v1900 = vunpack.c.h.b16 %v723
    %v1901 = vunpack.c.l.b16 %v724
    %v1902 = vunpack.c.h.b16 %v724
    %v1903 = vunpack.c.l.b16 %v725
    %v1904 = vunpack.c.h.b16 %v725
    %v1905 = vunpack.c.l.b16 %v726
    %v1906 = vunpack.c.h.b16 %v726
    %v1907 = vunpack.c.l.b16 %v727
    %v1908 = vunpack.c.h.b16 %v727
    %v1909 = vunpack.c.l.b16 %v728
    %v1910 = vunpack.c.h.b16 %v728
    %v1911 = vunpack.c.l.b16 %v729
    %v1912 = vunpack.c.h.b16 %v729
    %v1913 = vunpack.c.l.b16 %v730
    %v1914 = vunpack.c.h.b16 %v730
    %v1915 = vunpack.c.l.b16 %v731
    %v1916 = vunpack.c.h.b16 %v731
    %v1917 = vunpack.c.l.b16 %v732
    %v1918 = vunpack.c.h.b16 %v732
    %v1919 = vunpack.c.l.b16 %v733
    %v1920 = vunpack.c.h.b16 %v733
    %v1921 = vunpack.c.l.b16 %v734
    %v1922 = vunpack.c.h.b16 %v734
    %v1923 = vunpack.c.l.b16 %v735
    %v1924 = vunpack.c.h.b16 %v735
    %v1925 = vunpack.c.l.b16 %v736
    %v1926 = vunpack.c.h.b16 %v736
    %v1927 = vunpack.c.l.b16 %v737
    %v1928 = vunpack.c.h.b16 %v737
    %v1929 = vunpack.c.l.b16 %v738
    %v1930 = vunpack.c.h.b16 %v738
    %v1931 = vunpack.c.l.b16 %v739
    %v1932 = vunpack.c.h.b16 %v739
    %v1933 = vunpack.c.l.b16 %v740
    %v1934 = vunpack.c.h.b16 %v740
    %v1935 = vunpack.c.l.b16 %v741
    %v1936 = vunpack.c.h.b16 %v741
    %v1937 = vunpack.c.l.b16 %v742
    %v1938 = vunpack.c.h.b16 %v742
    %v1939 = vunpack.c.l.b16 %v743
    %v1940 = vunpack.c.h.b16 %v743
    %v1941 = vunpack.c.l.b16 %v744
    %v1942 = vunpack.c.h.b16 %v744
    %v1943 = vunpack.c.l.b16 %v745
    %v1944 = vunpack.c.h.b16 %v745
    %v1945 = vunpack.c.l.b16 %v746
    %v1946 = vunpack.c.h.b16 %v746
    %v1947 = vunpack.c.l.b16 %v747
    %v1948 = vunpack.c.h.b16 %v747
    %v1949 = vunpack.c.l.b16 %v748
    %v1950 = vunpack.c.h.b16 %v748
    %v1951 = vunpack.c.l.b16 %v749
    %v1952 = vunpack.c.h.b16 %v749
    %v1953 = vunpack.c.l.b16 %v750
    %v1954 = vunpack.c.h.b16 %v750
    %v1955 = vunpack.c.l.b16 %v751
    %v1956 = vunpack.c.h.b16 %v751
    %v1957 = vunpack.c.l.b16 %v752
    %v1958 = vunpack.c.h.b16 %v752
    %v1959 = vunpack.c.l.b16 %v753
    %v1960 = vunpack.c.h.b16 %v753
    %v1961 = vunpack.c.l.b16 %v754
    %v1962 = vunpack.c.h.b16 %v754
    %v1963 = vunpack.c.l.b16 %v755
    %v1964 = vunpack.c.h.b16 %v755
    %v1965 = vunpack.c.l.b16 %v756
    %v1966 = vunpack.c.h.b16 %v756
    %v1967 = vunpack.c.l.b16 %v757
    %v1968 = vunpack.c.h.b16 %v757
    %v1969 = vunpack.c.l.b16 %v758
    %v1970 = vunpack.c.h.b16 %v758
    %v1971 = vunpack.c.l.b16 %v759
    %v1972 = vunpack.c.h.b16 %v759
    %v1973 = vunpack.c.l.b16 %v760
    %v1974 = vunpack.c.h.b16 %v760
    %v1975 = vunpack.c.l.b16 %v761
    %v1976 = vunpack.c.h.b16 %v761
    %v1977 = vunpack.c.l.b16 %v762
    %v1978 = vunpack.c.h.b16 %v762
    %v1979 = vunpack.c.l.b16 %v763
    %v1980 = vunpack.c.h.b16 %v763
    %v1981 = vunpack.c.l.b16 %v764
    %v1982 = vunpack.c.h.b16 %v764
    %v1983 = vunpack.c.l.b16 %v765
    %v1984 = vunpack.c.h.b16 %v765
    %v1985 = vunpack.c.l.b16 %v766
    %v1986 = vunpack.c.h.b16 %v766
    %v1987 = vunpack.c.l.b16 %v767
    %v1988 = vunpack.c.h.b16 %v767
    %v1989 = vunpack.c.l.b16 %v768
    %v1990 = vunpack.c.h.b16 %v768
    %v1991 = vunpack.c.l.b16 %v769
    %v1992 = vunpack.c.h.b16 %v769
    %v1993 = vunpack.c.l.b16 %v770
    %v1994 = vunpack.c.h.b16 %v770
    %v1995 = vunpack.c.l.b16 %v771
    %v1996 = vunpack.c.h.b16 %v771
    %v1997 = vunpack.c.l.b16 %v772
    %v1998 = vunpack.c.h.b16 %v772
    %v1999 = vunpack.c.l.b16 %v773
    %v2000 = vunpack.c.h.b16 %v773
    %v2001 = vunpack.c.l.b16 %v774
    %v2002 = vunpack.c.h.b16 %v774
    %v2003 = vunpack.c.l.b16 %v775
    %v2004 = vunpack.c.h.b16 %v775
    %v2005 = vunpack.c.l.b16 %v776
    %v2006 = vunpack.c.h.b16 %v776
    %v2007 = vunpack.c.l.b16 %v777
    %v2008 = vunpack.c.h.b16 %v777
    %v2009 = vunpack.c.l.b16 %v778
    %v2010 = vunpack.c.h.b16 %v778
    %v2011 = vunpack.c.l.b16 %v779
    %v2012 = vunpack.c.h.b16 %v779
    %v2013 = vunpack.c.l.b16 %v780
    %v2014 = vunpack.c.h.b16 %v780
    %v2015 = vunpack.c.l.b16 %v781
    %v2016 = vunpack.c.h.b16 %v781
    %v2017 = vunpack.c.l.b16 %v782
    %v2018 = vunpack.c.h.b16 %v782
    %v2019 = vunpack.c.l.b16 %v783
    %v2020 = vunpack.c.h.b16 %v783
    %v2021 = vunpack.c.l.b16 %v784
    %v2022 = vunpack.c.h.b16 %v784
    %v2023 = vunpack.c.l.b16 %v785
    %v2024 = vunpack.c.h.b16 %v785
    %v2025 = vunpack.c.l.b16 %v786
    %v2026 = vunpack.c.h.b16 %v786
    %v2027 = vunpack.c.l.b16 %v787
    %v2028 = vunpack.c.h.b16 %v787
    %v2029 = vunpack.c.l.b16 %v788
    %v2030 = vunpack.c.h.b16 %v788
    %v2031 = vunpack.c.l.b16 %v789
    %v2032 = vunpack.c.h.b16 %v789
    %v2033 = vunpack.c.l.b16 %v790
    %v2034 = vunpack.c.h.b16 %v790
    %v2035 = vunpack.c.l.b16 %v791
    %v2036 = vunpack.c.h.b16 %v791
    %v2037 = vunpack.c.l.b16 %v792
    %v2038 = vunpack.c.h.b16 %v792
    %v2039 = vunpack.c.l.b16 %v793
    %v2040 = vunpack.c.h.b16 %v793
    %v2041 = vunpack.c.l.b16 %v794
    %v2042 = vunpack.c.h.b16 %v794
    %v2043 = vunpack.c.l.b16 %v795
    %v2044 = vunpack.c.h.b16 %v795
    %v2045 = vunpack.c.l.b16 %v796
    %v2046 = vunpack.c.h.b16 %v796
    %v2047 = vunpack.c.l.b16 %v797
    %v2048 = vunpack.c.h.b16 %v797
    %v2049 = vunpack.c.l.b16 %v798
    %v2050 = vunpack.c.h.b16 %v798
    %v2051 = vunpack.c.l.b16 %v799
    %v2052 = vunpack.c.h.b16 %v799
    %v2053 = vunpack.c.l.b16 %v800
    %v2054 = vunpack.c.h.b16 %v800
    %v2055 = vunpack.c.l.b16 %v801
    %v2056 = vunpack.c.h.b16 %v801
    %v2057 = vunpack.c.l.b16 %v802
    %v2058 = vunpack.c.h.b16 %v802
    %v2059 = vunpack.c.l.b16 %v803
    %v2060 = vunpack.c.h.b16 %v803
    %v2061 = vunpack.c.l.b16 %v804
    %v2062 = vunpack.c.h.b16 %v804
    %v2063 = vunpack.c.l.b16 %v805
    %v2064 = vunpack.c.h.b16 %v805
    %v2065 = vunpack.c.l.b16 %v806
    %v2066 = vunpack.c.h.b16 %v806
    %v2067 = vunpack.c.l.b16 %v807
    %v2068 = vunpack.c.h.b16 %v807
    %v2069 = vunpack.c.l.b16 %v808
    %v2070 = vunpack.c.h.b16 %v808
    %v2071 = vunpack.c.l.b16 %v809
    %v2072 = vunpack.c.h.b16 %v809
    %v2073 = vunpack.c.l.b16 %v810
    %v2074 = vunpack.c.h.b16 %v810
    %v2075 = vunpack.c.l.b16 %v811
    %v2076 = vunpack.c.h.b16 %v811
    %v2077 = vunpack.c.l.b16 %v812
    %v2078 = vunpack.c.h.b16 %v812
    %v2079 = vunpack.c.l.b16 %v813
    %v2080 = vunpack.c.h.b16 %v813
    %v2081 = vunpack.c.l.b16 %v814
    %v2082 = vunpack.c.h.b16 %v814
    %v2083 = vunpack.c.l.b16 %v815
    %v2084 = vunpack.c.h.b16 %v815
    %v2085 = vunpack.c.l.b16 %v816
    %v2086 = vunpack.c.h.b16 %v816
    %v2087 = vunpack.c.l.b16 %v817
    %v2088 = vunpack.c.h.b16 %v817
    %v2089 = vunpack.c.l.b16 %v818
    %v2090 = vunpack.c.h.b16 %v818
    %v2091 = vunpack.c.l.b16 %v819
    %v2092 = vunpack.c.h.b16 %v819
    %v2093 = vunpack.c.l.b16 %v820
    %v2094 = vunpack.c.h.b16 %v820
    %v2095 = vunpack.c.l.b16 %v821
    %v2096 = vunpack.c.h.b16 %v821
    %v2097 = vunpack.c.l.b16 %v822
    %v2098 = vunpack.c.h.b16 %v822
    %v2099 = vunpack.c.l.b16 %v823
    %v2100 = vunpack.c.h.b16 %v823
    %v2101 = vunpack.c.l.b16 %v824
    %v2102 = vunpack.c.h.b16 %v824
    %v2103 = vunpack.c.l.b16 %v825
    %v2104 = vunpack.c.h.b16 %v825
    %v2105 = vunpack.c.l.b16 %v826
    %v2106 = vunpack.c.h.b16 %v826
    %v2107 = vunpack.c.l.b16 %v827
    %v2108 = vunpack.c.h.b16 %v827
    %v2109 = vunpack.c.l.b16 %v828
    %v2110 = vunpack.c.h.b16 %v828
    %v2111 = vunpack.c.l.b16 %v829
    %v2112 = vunpack.c.h.b16 %v829
    %v2113 = vunpack.c.l.b16 %v830
    %v2114 = vunpack.c.h.b16 %v830
    %v2115 = vunpack.c.l.b16 %v831
    %v2116 = vunpack.c.h.b16 %v831
    %v2117 = vunpack.c.l.b16 %v832
    %v2118 = vunpack.c.h.b16 %v832
    %v2119 = vunpack.c.l.b16 %v833
    %v2120 = vunpack.c.h.b16 %v833
    %v2121 = vunpack.c.l.b16 %v834
    %v2122 = vunpack.c.h.b16 %v834
    %v2123 = vunpack.c.l.b16 %v835
    %v2124 = vunpack.c.h.b16 %v835
    %v2125 = vunpack.c.l.b16 %v836
    %v2126 = vunpack.c.h.b16 %v836
    %v2127 = vunpack.c.l.b16 %v837
    %v2128 = vunpack.c.h.b16 %v837
    %v2129 = vunpack.c.l.b16 %v838
    %v2130 = vunpack.c.h.b16 %v838
    %v2131 = vunpack.c.l.b16 %v839
    %v2132 = vunpack.c.h.b16 %v839
    %v2133 = vunpack.c.l.b16 %v840
    %v2134 = vunpack.c.h.b16 %v840
    %v2135 = vunpack.c.l.b16 %v841
    %v2136 = vunpack.c.h.b16 %v841
    %v2137 = vunpack.c.l.b16 %v842
    %v2138 = vunpack.c.h.b16 %v842
    %v2139 = vunpack.c.l.b16 %v843
    %v2140 = vunpack.c.h.b16 %v843
    %v2141 = vunpack.c.l.b16 %v844
    %v2142 = vunpack.c.h.b16 %v844
    %v2143 = vunpack.c.l.b16 %v845
    %v2144 = vunpack.c.h.b16 %v845
    %v2145 = vunpack.c.l.b16 %v846
    %v2146 = vunpack.c.h.b16 %v846
    %v2147 = vunpack.c.l.b16 %v847
    %v2148 = vunpack.c.h.b16 %v847
    %v2149 = vunpack.c.l.b16 %v848
    %v2150 = vunpack.c.h.b16 %v848
    %v2151 = vunpack.c.l.b16 %v849
    %v2152 = vunpack.c.h.b16 %v849
    %v2153 = vunpack.c.l.b16 %v850
    %v2154 = vunpack.c.h.b16 %v850
    %v2155 = vunpack.c.l.b16 %v851
    %v2156 = vunpack.c.h.b16 %v851
    %v2157 = vunpack.c.l.b16 %v852
    %v2158 = vunpack.c.h.b16 %v852
    %v2159 = vunpack.c.l.b16 %v853
    %v2160 = vunpack.c.h.b16 %v853
    %v2161 = vunpack.c.l.b16 %v854
    %v2162 = vunpack.c.h.b16 %v854
    %v2163 = vunpack.c.l.b16 %v855
    %v2164 = vunpack.c.h.b16 %v855
    %v2165 = vunpack.c.l.b16 %v856
    %v2166 = vunpack.c.h.b16 %v856
    %v2167 = vunpack.c.l.b16 %v857
    %v2168 = vunpack.c.h.b16 %v857
    %v2169 = vunpack.c.l.b16 %v858
    %v2170 = vunpack.c.h.b16 %v858
    %v2171 = vunpack.c.l.b16 %v859
    %v2172 = vunpack.c.h.b16 %v859
    %v2173 = vunpack.c.l.b16 %v860
    %v2174 = vunpack.c.h.b16 %v860
    %v2175 = vunpack.c.l.b16 %v861
    %v2176 = vunpack.c.h.b16 %v861
    %v2177 = vunpack.c.l.b16 %v862
    %v2178 = vunpack.c.h.b16 %v862
    %v2179 = vunpack.c.l.b16 %v863
    %v2180 = vunpack.c.h.b16 %v863
    %v2181 = vunpack.c.l.b16 %v864
    %v2182 = vunpack.c.h.b16 %v864
    %v2183 = vunpack.c.l.b16 %v865
    %v2184 = vunpack.c.h.b16 %v865
    %v2185 = vunpack.c.l.b16 %v866
    %v2186 = vunpack.c.h.b16 %v866
    %v2187 = vunpack.c.l.b16 %v867
    %v2188 = vunpack.c.h.b16 %v867
    %v2189 = vunpack.c.l.b16 %v868
    %v2190 = vunpack.c.h.b16 %v868
    %v2191 = vunpack.c.l.b16 %v869
    %v2192 = vunpack.c.h.b16 %v869
    %v2193 = vunpack.c.l.b16 %v870
    %v2194 = vunpack.c.h.b16 %v870
    %v2195 = vunpack.c.l.b16 %v871
    %v2196 = vunpack.c.h.b16 %v871
    %v2197 = vunpack.c.l.b16 %v872
    %v2198 = vunpack.c.h.b16 %v872
    %v2199 = vunpack.c.l.b16 %v873
    %v2200 = vunpack.c.h.b16 %v873
    %v2201 = vunpack.c.l.b16 %v874
    %v2202 = vunpack.c.h.b16 %v874
    %v2203 = vunpack.c.l.b16 %v875
    %v2204 = vunpack.c.h.b16 %v875
    %v2205 = vunpack.c.l.b16 %v876
    %v2206 = vunpack.c.h.b16 %v876
    %v2207 = vunpack.c.l.b16 %v877
    %v2208 = vunpack.c.h.b16 %v877
    %v2209 = vunpack.c.l.b16 %v878
    %v2210 = vunpack.c.h.b16 %v878
    %v2211 = vunpack.c.l.b16 %v879
    %v2212 = vunpack.c.h.b16 %v879
    %v2213 = vunpack.c.l.b16 %v880
    %v2214 = vunpack.c.h.b16 %v880
    %v2215 = vunpack.c.l.b16 %v881
    %v2216 = vunpack.c.h.b16 %v881
    %v2217 = vunpack.c.l.b16 %v882
    %v2218 = vunpack.c.h.b16 %v882
    %v2219 = vunpack.c.l.b16 %v883
    %v2220 = vunpack.c.h.b16 %v883
    %v2221 = vunpack.c.l.b16 %v884
    %v2222 = vunpack.c.h.b16 %v884
    %v2223 = vunpack.c.l.b16 %v885
    %v2224 = vunpack.c.h.b16 %v885
    %v2225 = vunpack.c.l.b16 %v886
    %v2226 = vunpack.c.h.b16 %v886
    %v2227 = vunpack.c.l.b16 %v887
    %v2228 = vunpack.c.h.b16 %v887
    %v2229 = vunpack.c.l.b16 %v888
    %v2230 = vunpack.c.h.b16 %v888
    %v2231 = vunpack.c.l.b16 %v889
    %v2232 = vunpack.c.h.b16 %v889
    %v2233 = vunpack.c.l.b16 %v890
    %v2234 = vunpack.c.h.b16 %v890
    %v2235 = vunpack.c.l.b16 %v891
    %v2236 = vunpack.c.h.b16 %v891
    %v2237 = vunpack.c.l.b16 %v892
    %v2238 = vunpack.c.h.b16 %v892
    %v2239 = vunpack.c.l.b16 %v893
    %v2240 = vunpack.c.h.b16 %v893
    %v2241 = vunpack.c.l.b16 %v894
    %v2242 = vunpack.c.h.b16 %v894
    %v2243 = vunpack.c.l.b16 %v895
    %v2244 = vunpack.c.h.b16 %v895
    %v2245 = vunpack.c.l.b16 %v896
    %v2246 = vunpack.c.h.b16 %v896
    %v2247 = vunpack.c.l.b16 %v897
    %v2248 = vunpack.c.h.b16 %v897
    %v2249 = vunpack.c.l.b16 %v898
    %v2250 = vunpack.c.h.b16 %v898
    %v2251 = vunpack.c.l.b16 %v899
    %v2252 = vunpack.c.h.b16 %v899
    %v2253 = vunpack.c.l.b16 %v900
    %v2254 = vunpack.c.h.b16 %v900
    %v2255 = vunpack.c.l.b16 %v901
    %v2256 = vunpack.c.h.b16 %v901
    %v2257 = vunpack.c.l.b16 %v902
    %v2258 = vunpack.c.h.b16 %v902
    %v2259 = vunpack.c.l.b16 %v903
    %v2260 = vunpack.c.h.b16 %v903
    %v2261 = vunpack.c.l.b16 %v904
    %v2262 = vunpack.c.h.b16 %v904
    %v2263 = vunpack.c.l.b16 %v905
    %v2264 = vunpack.c.h.b16 %v905
    %v2265 = vunpack.c.l.b16 %v906
    %v2266 = vunpack.c.h.b16 %v906
    %v2267 = vunpack.c.l.b16 %v907
    %v2268 = vunpack.c.h.b16 %v907
    %v2269 = vunpack.c.l.b16 %v908
    %v2270 = vunpack.c.h.b16 %v908
    %v2271 = vunpack.c.l.b16 %v909
    %v2272 = vunpack.c.h.b16 %v909
    %v2273 = vunpack.c.l.b16 %v910
    %v2274 = vunpack.c.h.b16 %v910
    %v2275 = vunpack.c.l.b16 %v911
    %v2276 = vunpack.c.h.b16 %v911
    %v2277 = vunpack.c.l.b16 %v912
    %v2278 = vunpack.c.h.b16 %v912
    %v2279 = vunpack.c.l.b16 %v913
    %v2280 = vunpack.c.h.b16 %v913
    %v2281 = vunpack.c.l.b16 %v914
    %v2282 = vunpack.c.h.b16 %v914
    %v2283 = vunpack.c.l.b16 %v915
    %v2284 = vunpack.c.h.b16 %v915
    %v2285 = vunpack.c.l.b16 %v916
    %v2286 = vunpack.c.h.b16 %v916
    %v2287 = vunpack.c.l.b16 %v917
    %v2288 = vunpack.c.h.b16 %v917
    %v2289 = vunpack.c.l.b16 %v918
    %v2290 = vunpack.c.h.b16 %v918
    %v2291 = vunpack.c.l.b16 %v919
    %v2292 = vunpack.c.h.b16 %v919
    %v2293 = vunpack.c.l.b16 %v920
    %v2294 = vunpack.c.h.b16 %v920
    %v2295 = vunpack.c.l.b16 %v921
    %v2296 = vunpack.c.h.b16 %v921
    %v2297 = vunpack.c.l.b16 %v922
    %v2298 = vunpack.c.h.b16 %v922
    %v2299 = vunpack.c.l.b16 %v923
    %v2300 = vunpack.c.h.b16 %v923
    %v2301 = vunpack.c.l.b16 %v924
    %v2302 = vunpack.c.h.b16 %v924
    %v2303 = vunpack.c.l.b16 %v925
    %v2304 = vunpack.c.h.b16 %v925
    %v2305 = vunpack.c.l.b16 %v926
    %v2306 = vunpack.c.h.b16 %v926
    %v2307 = vunpack.c.l.b16 %v927
    %v2308 = vunpack.c.h.b16 %v927
    %v2309 = vunpack.c.l.b16 %v928
    %v2310 = vunpack.c.h.b16 %v928
    %v2311 = vunpack.c.l.b16 %v929
    %v2312 = vunpack.c.h.b16 %v929
    %v2313 = vunpack.c.l.b16 %v930
    %v2314 = vunpack.c.h.b16 %v930
    %v2315 = vunpack.c.l.b16 %v931
    %v2316 = vunpack.c.h.b16 %v931
    %v2317 = vunpack.c.l.b16 %v932
    %v2318 = vunpack.c.h.b16 %v932
    %v2319 = vunpack.c.l.b16 %v933
    %v2320 = vunpack.c.h.b16 %v933
    %v2321 = vunpack.c.l.b16 %v934
    %v2322 = vunpack.c.h.b16 %v934
    %v2323 = vunpack.c.l.b16 %v935
    %v2324 = vunpack.c.h.b16 %v935
    %v2325 = vunpack.c.l.b16 %v936
    %v2326 = vunpack.c.h.b16 %v936
    %v2327 = vunpack.c.l.b16 %v937
    %v2328 = vunpack.c.h.b16 %v937
    %v2329 = vunpack.c.l.b16 %v938
    %v2330 = vunpack.c.h.b16 %v938
    %v2331 = vunpack.c.l.b16 %v939
    %v2332 = vunpack.c.h.b16 %v939
    %v2333 = vunpack.c.l.b16 %v940
    %v2334 = vunpack.c.h.b16 %v940
    %v2335 = vunpack.c.l.b16 %v941
    %v2336 = vunpack.c.h.b16 %v941
    %v2337 = vunpack.c.l.b16 %v942
    %v2338 = vunpack.c.h.b16 %v942
    %v2339 = vunpack.c.l.b16 %v943
    %v2340 = vunpack.c.h.b16 %v943
    %v2341 = vunpack.c.l.b16 %v944
    %v2342 = vunpack.c.h.b16 %v944
    %v2343 = vunpack.c.l.b16 %v945
    %v2344 = vunpack.c.h.b16 %v945
    %v2345 = vunpack.c.l.b16 %v946
    %v2346 = vunpack.c.h.b16 %v946
    %v2347 = vunpack.c.l.b16 %v947
    %v2348 = vunpack.c.h.b16 %v947
    %v2349 = vunpack.c.l.b16 %v948
    %v2350 = vunpack.c.h.b16 %v948
    %v2351 = vunpack.c.l.b16 %v949
    %v2352 = vunpack.c.h.b16 %v949
    %v2353 = vunpack.c.l.b16 %v950
    %v2354 = vunpack.c.h.b16 %v950
    %v2355 = vunpack.c.l.b16 %v951
    %v2356 = vunpack.c.h.b16 %v951
    %v2357 = vunpack.c.l.b16 %v952
    %v2358 = vunpack.c.h.b16 %v952
    %v2359 = vunpack.c.l.b16 %v953
    %v2360 = vunpack.c.h.b16 %v953
    %v2361 = vunpack.c.l.b16 %v954
    %v2362 = vunpack.c.h.b16 %v954
    %v2363 = vunpack.c.l.b16 %v955
    %v2364 = vunpack.c.h.b16 %v955
    %v2365 = vunpack.c.l.b16 %v956
    %v2366 = vunpack.c.h.b16 %v956
    %v2367 = vunpack.c.l.b16 %v957
    %v2368 = vunpack.c.h.b16 %v957
    %v2369 = vunpack.c.l.b16 %v958
    %v2370 = vunpack.c.h.b16 %v958
    %v2371 = vunpack.c.l.b16 %v959
    %v2372 = vunpack.c.h.b16 %v959
    %v2373 = vunpack.c.l.b16 %v960
    %v2374 = vunpack.c.h.b16 %v960
    %v2375 = vunpack.c.l.b16 %v961
    %v2376 = vunpack.c.h.b16 %v961
    %v2377 = vunpack.c.l.b16 %v962
    %v2378 = vunpack.c.h.b16 %v962
    %v2379 = vunpack.c.l.b16 %v963
    %v2380 = vunpack.c.h.b16 %v963
    %v2381 = vunpack.c.l.b16 %v964
    %v2382 = vunpack.c.h.b16 %v964
    %v2383 = vunpack.c.l.b16 %v965
    %v2384 = vunpack.c.h.b16 %v965
    %v2385 = vunpack.c.l.b16 %v966
    %v2386 = vunpack.c.h.b16 %v966
    %v2387 = vunpack.c.l.b16 %v967
    %v2388 = vunpack.c.h.b16 %v967
    %v2389 = vunpack.c.l.b16 %v968
    %v2390 = vunpack.c.h.b16 %v968
    %v2391 = vunpack.c.l.b16 %v969
    %v2392 = vunpack.c.h.b16 %v969
    %v2393 = vunpack.c.l.b16 %v970
    %v2394 = vunpack.c.h.b16 %v970
    %v2395 = vunpack.c.l.b16 %v971
    %v2396 = vunpack.c.h.b16 %v971
    %v2397 = vunpack.c.l.b16 %v972
    %v2398 = vunpack.c.h.b16 %v972
    %v2399 = vunpack.c.l.b16 %v973
    %v2400 = vunpack.c.h.b16 %v973
    %v2401 = vunpack.c.l.b16 %v974
    %v2402 = vunpack.c.h.b16 %v974
    %v2403 = vunpack.c.l.b16 %v975
    %v2404 = vunpack.c.h.b16 %v975
    %v2405 = vunpack.c.l.b16 %v976
    %v2406 = vunpack.c.h.b16 %v976
    %v2407 = vunpack.c.l.b16 %v977
    %v2408 = vunpack.c.h.b16 %v977
    %v2409 = vunpack.c.l.b16 %v978
    %v2410 = vunpack.c.h.b16 %v978
    %v2411 = vunpack.c.l.b16 %v979
    %v2412 = vunpack.c.h.b16 %v979
    %v2413 = vunpack.c.l.b16 %v980
    %v2414 = vunpack.c.h.b16 %v980
    %v2415 = vunpack.c.l.b16 %v981
    %v2416 = vunpack.c.h.b16 %v981
    %v2417 = vunpack.c.l.b16 %v982
    %v2418 = vunpack.c.h.b16 %v982
    %v2419 = vunpack.c.l.b16 %v983
    %v2420 = vunpack.c.h.b16 %v983
    %v2421 = vunpack.c.l.b16 %v984
    %v2422 = vunpack.c.h.b16 %v984
    %v2423 = vunpack.c.l.b16 %v985
    %v2424 = vunpack.c.h.b16 %v985
    %v2425 = vunpack.c.l.b16 %v986
    %v2426 = vunpack.c.h.b16 %v986
    %v2427 = vunpack.c.l.b16 %v987
    %v2428 = vunpack.c.h.b16 %v987
    %v2429 = vunpack.c.l.b16 %v988
    %v2430 = vunpack.c.h.b16 %v988
    %v2431 = vunpack.c.l.b16 %v989
    %v2432 = vunpack.c.h.b16 %v989
    %v2433 = vunpack.c.l.b16 %v990
    %v2434 = vunpack.c.h.b16 %v990
    %v2435 = vunpack.c.l.b16 %v991
    %v2436 = vunpack.c.h.b16 %v991
    %v2437 = vunpack.c.l.b16 %v992
    %v2438 = vunpack.c.h.b16 %v992
    %v2439 = vunpack.c.l.b16 %v993
    %v2440 = vunpack.c.h.b16 %v993
    %v2441 = vunpack.c.l.b16 %v994
    %v2442 = vunpack.c.h.b16 %v994
    %v2443 = vunpack.c.l.b16 %v995
    %v2444 = vunpack.c.h.b16 %v995
    %v2445 = vunpack.c.l.b16 %v996
    %v2446 = vunpack.c.h.b16 %v996
    %v2447 = vunpack.c.l.b16 %v997
    %v2448 = vunpack.c.h.b16 %v997
    %v2449 = vunpack.c.l.b16 %v998
    %v2450 = vunpack.c.h.b16 %v998
    %v2451 = vunpack.c.l.b16 %v999
    %v2452 = vunpack.c.h.b16 %v999
    %v2453 = vunpack.c.l.b16 %v1000
    %v2454 = vunpack.c.h.b16 %v1000
    %v2455 = vunpack.c.l.b16 %v1001
    %v2456 = vunpack.c.h.b16 %v1001
    %v2457 = vunpack.c.l.b16 %v1002
    %v2458 = vunpack.c.h.b16 %v1002
    %v2459 = vunpack.c.l.b16 %v1003
    %v2460 = vunpack.c.h.b16 %v1003
    %v2461 = vunpack.c.l.b16 %v1004
    %v2462 = vunpack.c.h.b16 %v1004
    %v2463 = vunpack.c.l.b16 %v1005
    %v2464 = vunpack.c.h.b16 %v1005
    %v2465 = vunpack.c.l.b16 %v1006
    %v2466 = vunpack.c.h.b16 %v1006
    %v2467 = vunpack.c.l.b16 %v1007
    %v2468 = vunpack.c.h.b16 %v1007
    %v2469 = vunpack.c.l.b16 %v1008
    %v2470 = vunpack.c.h.b16 %v1008
    %v2471 = vunpack.c.l.b16 %v1009
    %v2472 = vunpack.c.h.b16 %v1009
    %v2473 = vunpack.c.l.b16 %v1010
    %v2474 = vunpack.c.h.b16 %v1010
    %v2475 = vunpack.c.l.b16 %v1011
    %v2476 = vunpack.c.h.b16 %v1011
    %v2477 = vunpack.c.l.b16 %v1012
    %v2478 = vunpack.c.h.b16 %v1012
    %v2479 = vunpack.c.l.b16 %v1013
    %v2480 = vunpack.c.h.b16 %v1013
    %v2481 = vunpack.c.l.b16 %v1014
    %v2482 = vunpack.c.h.b16 %v1014
    %v2483 = vunpack.c.l.b16 %v1015
    %v2484 = vunpack.c.h.b16 %v1015
    %v2485 = vunpack.c.l.b16 %v1016
    %v2486 = vunpack.c.h.b16 %v1016
    %v2487 = vunpack.c.l.b16 %v1017
    %v2488 = vunpack.c.h.b16 %v1017
    %v2489 = vunpack.c.l.b16 %v1018
    %v2490 = vunpack.c.h.b16 %v1018
    %v2491 = vunpack.c.l.b16 %v1019
    %v2492 = vunpack.c.h.b16 %v1019
    %v2493 = vunpack.c.l.b16 %v1020
    %v2494 = vunpack.c.h.b16 %v1020
    %v2495 = vunpack.c.l.b16 %v1021
    %v2496 = vunpack.c.h.b16 %v1021
    %v2497 = vunpack.c.l.b16 %v1022
    %v2498 = vunpack.c.h.b16 %v1022
    %v2499 = vunpack.c.l.b16 %v1023
    %v2500 = vunpack.c.h.b16 %v1023
    %v2501 = vunpack.c.l.b16 %v1024
    %v2502 = vunpack.c.h.b16 %v1024
    %v2503 = vunpack.c.l.b16 %v1025
    %v2504 = vunpack.c.h.b16 %v1025
    %v2505 = vunpack.c.l.b16 %v1026
    %v2506 = vunpack.c.h.b16 %v1026
    %v2507 = vunpack.c.l.b16 %v1027
    %v2508 = vunpack.c.h.b16 %v1027
    %v2509 = vunpack.c.l.b16 %v1028
    %v2510 = vunpack.c.h.b16 %v1028
    %v2511 = vunpack.c.l.b16 %v1029
    %v2512 = vunpack.c.h.b16 %v1029
    %v2513 = vunpack.c.l.b16 %v1030
    %v2514 = vunpack.c.h.b16 %v1030
    %v2515 = vunpack.c.l.b16 %v1031
    %v2516 = vunpack.c.h.b16 %v1031
    %v2517 = vunpack.c.l.b16 %v1032
    %v2518 = vunpack.c.h.b16 %v1032
    %v2519 = vunpack.c.l.b16 %v1033
    %v2520 = vunpack.c.h.b16 %v1033
    %v2521 = vunpack.c.l.b16 %v1034
    %v2522 = vunpack.c.h.b16 %v1034
    %v2523 = vunpack.c.l.b16 %v1035
    %v2524 = vunpack.c.h.b16 %v1035
    %v2525 = vunpack.c.l.b16 %v1036
    %v2526 = vunpack.c.h.b16 %v1036
    %v2527 = vunpack.c.l.b16 %v1037
    %v2528 = vunpack.c.h.b16 %v1037
    %v2529 = vunpack.c.l.b16 %v1038
    %v2530 = vunpack.c.h.b16 %v1038
    %v2531 = vunpack.c.l.b16 %v1039
    %v2532 = vunpack.c.h.b16 %v1039
    %v2533 = vunpack.c.l.b16 %v1040
    %v2534 = vunpack.c.h.b16 %v1040
    %v2535 = vunpack.c.l.b16 %v1041
    %v2536 = vunpack.c.h.b16 %v1041
    %v2537 = vunpack.c.l.b16 %v1042
    %v2538 = vunpack.c.h.b16 %v1042
    %v2539 = vunpack.c.l.b16 %v1043
    %v2540 = vunpack.c.h.b16 %v1043
    %v2541 = vunpack.c.l.b16 %v1044
    %v2542 = vunpack.c.h.b16 %v1044
    %v2543 = vunpack.c.l.b16 %v1045
    %v2544 = vunpack.c.h.b16 %v1045
    %v2545 = vunpack.c.l.b16 %v1046
    %v2546 = vunpack.c.h.b16 %v1046
    %v2547 = vunpack.c.l.b16 %v1047
    %v2548 = vunpack.c.h.b16 %v1047
    %v2549 = vunpack.c.l.b16 %v1048
    %v2550 = vunpack.c.h.b16 %v1048
    %v2551 = vunpack.c.l.b16 %v1049
    %v2552 = vunpack.c.h.b16 %v1049
    %v2553 = vunpack.c.l.b16 %v1050
    %v2554 = vunpack.c.h.b16 %v1050
    %v2555 = vunpack.c.l.b16 %v1051
    %v2556 = vunpack.c.h.b16 %v1051
    %v2557 = vunpack.c.l.b16 %v1052
    %v2558 = vunpack.c.h.b16 %v1052
    %v2559 = vunpack.c.l.b16 %v1053
    %v2560 = vunpack.c.h.b16 %v1053
    %v2561 = vunpack.c.l.b16 %v1054
    %v2562 = vunpack.c.h.b16 %v1054
    %v2563 = vunpack.c.l.b16 %v1055
    %v2564 = vunpack.c.h.b16 %v1055
    %v2565 = vunpack.c.l.b16 %v1056
    %v2566 = vunpack.c.h.b16 %v1056
    %v2567 = vunpack.c.l.b16 %v1057
    %v2568 = vunpack.c.h.b16 %v1057
    %v2569 = vunpack.c.l.b16 %v1058
    %v2570 = vunpack.c.h.b16 %v1058
    %v2571 = vunpack.c.l.b16 %v1059
    %v2572 = vunpack.c.h.b16 %v1059
    %v2573 = vunpack.c.l.b16 %v1060
    %v2574 = vunpack.c.h.b16 %v1060
    %v2575 = vunpack.c.l.b16 %v1061
    %v2576 = vunpack.c.h.b16 %v1061
    %v2577 = vunpack.c.l.b16 %v1062
    %v2578 = vunpack.c.h.b16 %v1062
    %v2579 = vunpack.c.l.b16 %v1063
    %v2580 = vunpack.c.h.b16 %v1063
    %v2581 = vunpack.c.l.b16 %v1064
    %v2582 = vunpack.c.h.b16 %v1064
    %v2583 = vunpack.c.l.b16 %v1065
    %v2584 = vunpack.c.h.b16 %v1065
    %v2585 = vunpack.c.l.b16 %v1066
    %v2586 = vunpack.c.h.b16 %v1066
    %v2587 = vunpack.c.l.b16 %v1067
    %v2588 = vunpack.c.h.b16 %v1067
    %v2589 = vunpack.c.l.b16 %v1068
    %v2590 = vunpack.c.h.b16 %v1068
    %v2591 = vunpack.c.l.b16 %v1069
    %v2592 = vunpack.c.h.b16 %v1069
    %v2593 = vunpack.c.l.b16 %v1070
    %v2594 = vunpack.c.h.b16 %v1070
    %v2595 = vunpack.c.l.b16 %v1071
    %v2596 = vunpack.c.h.b16 %v1071
    %v2597 = vunpack.c.l.b16 %v1072
    %v2598 = vunpack.c.h.b16 %v1072
    %v2599 = vunpack.c.l.b16 %v1073
    %v2600 = vunpack.c.h.b16 %v1073
    %v2601 = vunpack.c.l.b16 %v1074
    %v2602 = vunpack.c.h.b16 %v1074
    %v2603 = vunpack.c.l.b16 %v1075
    %v2604 = vunpack.c.h.b16 %v1075
    %v2605 = vunpack.c.l.b16 %v1076
    %v2606 = vunpack.c.h.b16 %v1076
    %v2607 = vunpack.c.l.b16 %v1077
    %v2608 = vunpack.c.h.b16 %v1077
    %v2609 = vunpack.c.l.b16 %v1078
    %v2610 = vunpack.c.h.b16 %v1078
    %v2611 = vunpack.c.l.b16 %v1079
    %v2612 = vunpack.c.h.b16 %v1079
    %v2613 = vunpack.c.l.b16 %v1080
    %v2614 = vunpack.c.h.b16 %v1080
    %v2615 = vunpack.c.l.b16 %v1081
    %v2616 = vunpack.c.h.b16 %v1081
    %v2617 = vunpack.c.l.b16 %v1082
    %v2618 = vunpack.c.h.b16 %v1082
    %v2619 = vunpack.c.l.b16 %v1083
    %v2620 = vunpack.c.h.b16 %v1083
    %v2621 = vunpack.c.l.b16 %v1084
    %v2622 = vunpack.c.h.b16 %v1084
    %v2623 = vunpack.c.l.b16 %v1085
    %v2624 = vunpack.c.h.b16 %v1085
    %v2625 = vunpack.c.l.b16 %v1086
    %v2626 = vunpack.c.h.b16 %v1086
    %v2627 = vunpack.c.l.b16 %v1087
    %v2628 = vunpack.c.h.b16 %v1087
    %v2629 = vunpack.c.l.b16 %v1088
    %v2630 = vunpack.c.h.b16 %v1088
    %v2631 = vunpack.c.l.b16 %v1089
    %v2632 = vunpack.c.h.b16 %v1089
    %v2633 = vunpack.c.l.b16 %v1090
    %v2634 = vunpack.c.h.b16 %v1090
    %v2635 = vunpack.c.l.b16 %v1091
    %v2636 = vunpack.c.h.b16 %v1091
    %v2637 = vunpack.c.l.b16 %v1092
    %v2638 = vunpack.c.h.b16 %v1092
    %v2639 = vunpack.c.l.b16 %v1093
    %v2640 = vunpack.c.h.b16 %v1093
    %v2641 = vunpack.c.l.b16 %v1094
    %v2642 = vunpack.c.h.b16 %v1094
    %v2643 = vunpack.c.l.b16 %v1095
    %v2644 = vunpack.c.h.b16 %v1095
    %v2645 = vunpack.c.l.b16 %v1096
    %v2646 = vunpack.c.h.b16 %v1096
    %v2647 = vunpack.c.l.b16 %v1097
    %v2648 = vunpack.c.h.b16 %v1097
    %v2649 = vunpack.c.l.b16 %v1098
    %v2650 = vunpack.c.h.b16 %v1098
    %v2651 = vunpack.c.l.b16 %v1099
    %v2652 = vunpack.c.h.b16 %v1099
    %v2653 = vunpack.c.l.b16 %v1100
    %v2654 = vunpack.c.h.b16 %v1100
    %v2655 = vunpack.c.l.b16 %v1101
    %v2656 = vunpack.c.h.b16 %v1101
    %v2657 = vunpack.c.l.b16 %v1102
    %v2658 = vunpack.c.h.b16 %v1102
    %v2659 = vunpack.c.l.b16 %v1103
    %v2660 = vunpack.c.h.b16 %v1103
    %v2661 = vunpack.c.l.b16 %v1104
    %v2662 = vunpack.c.h.b16 %v1104
    %v2663 = vunpack.c.l.b16 %v1105
    %v2664 = vunpack.c.h.b16 %v1105
    %v2665 = vunpack.c.l.b16 %v1106
    %v2666 = vunpack.c.h.b16 %v1106
    %v2667 = vunpack.c.l.b16 %v1107
    %v2668 = vunpack.c.h.b16 %v1107
    %v2669 = vunpack.c.l.b16 %v1108
    %v2670 = vunpack.c.h.b16 %v1108
    %v2671 = vunpack.c.l.b16 %v1109
    %v2672 = vunpack.c.h.b16 %v1109
    %v2673 = vunpack.c.l.b16 %v1110
    %v2674 = vunpack.c.h.b16 %v1110
    %v2675 = vunpack.c.l.b16 %v1111
    %v2676 = vunpack.c.h.b16 %v1111
    %v2677 = vunpack.c.l.b16 %v1112
    %v2678 = vunpack.c.h.b16 %v1112
    %v2679 = vunpack.c.l.b16 %v1113
    %v2680 = vunpack.c.h.b16 %v1113
    %v2681 = vunpack.c.l.b16 %v1114
    %v2682 = vunpack.c.h.b16 %v1114
    %v2683 = vunpack.c.l.b16 %v1115
    %v2684 = vunpack.c.h.b16 %v1115
    %v2685 = vunpack.c.l.b16 %v1116
    %v2686 = vunpack.c.h.b16 %v1116
    %v2687 = vunpack.c.l.b16 %v1117
    %v2688 = vunpack.c.h.b16 %v1117
    %v2689 = vunpack.c.l.b16 %v1118
    %v2690 = vunpack.c.h.b16 %v1118
    %v2691 = vpack.c.b16 %v1683, %v1667
    %v2692 = vpack.c.b16 %v1684, %v1668
    %v2693 = vpack.c.b16 %v1685, %v1669
    %v2694 = vpack.c.b16 %v1686, %v1670
    %v2695 = vpack.c.b16 %v1687, %v1671
    %v2696 = vpack.c.b16 %v1688, %v1672
    %v2697 = vpack.c.b16 %v1689, %v1673
    %v2698 = vpack.c.b16 %v1690, %v1674
    %v2699 = vpack.c.b16 %v1691, %v1675
    %v2700 = vpack.c.b16 %v1692, %v1676
    %v2701 = vpack.c.b16 %v1693, %v1677
    %v2702 = vpack.c.b16 %v1694, %v1678
    %v2703 = vpack.c.b16 %v1695, %v1679
    %v2704 = vpack.c.b16 %v1696, %v1680
    %v2705 = vpack.c.b16 %v1697, %v1681
    %v2706 = vpack.c.b16 %v1698, %v1682
    %v2707 = vpack.c.b16 %v1715, %v1699
    %v2708 = vpack.c.b16 %v1716, %v1700
    %v2709 = vpack.c.b16 %v1717, %v1701
    %v2710 = vpack.c.b16 %v1718, %v1702
    %v2711 = vpack.c.b16 %v1719, %v1703
    %v2712 = vpack.c.b16 %v1720, %v1704
    %v2713 = vpack.c.b16 %v1721, %v1705
    %v2714 = vpack.c.b16 %v1722, %v1706
    %v2715 = vpack.c.b16 %v1723, %v1707
    %v2716 = vpack.c.b16 %v1724, %v1708
    %v2717 = vpack.c.b16 %v1725, %v1709
    %v2718 = vpack.c.b16 %v1726, %v1710
    %v2719 = vpack.c.b16 %v1727, %v1711
    %v2720 = vpack.c.b16 %v1728, %v1712
    %v2721 = vpack.c.b16 %v1729, %v1713
    %v2722 = vpack.c.b16 %v1730, %v1714
    %v2723 = vpack.c.b16 %v1747, %v1731
    %v2724 = vpack.c.b16 %v1748, %v1732
    %v2725 = vpack.c.b16 %v1749, %v1733
    %v2726 = vpack.c.b16 %v1750, %v1734
    %v2727 = vpack.c.b16 %v1751, %v1735
    %v2728 = vpack.c.b16 %v1752, %v1736
    %v2729 = vpack.c.b16 %v1753, %v1737
    %v2730 = vpack.c.b16 %v1754, %v1738
    %v2731 = vpack.c.b16 %v1755, %v1739
    %v2732 = vpack.c.b16 %v1756, %v1740
    %v2733 = vpack.c.b16 %v1757, %v1741
    %v2734 = vpack.c.b16 %v1758, %v1742
    %v2735 = vpack.c.b16 %v1759, %v1743
    %v2736 = vpack.c.b16 %v1760, %v1744
    %v2737 = vpack.c.b16 %v1761, %v1745
    %v2738 = vpack.c.b16 %v1762, %v1746
    %v2739 = vpack.c.b16 %v1779, %v1763
    %v2740 = vpack.c.b16 %v1780, %v1764
    %v2741 = vpack.c.b16 %v1781, %v1765
    %v2742 = vpack.c.b16 %v1782, %v1766
    %v2743 = vpack.c.b16 %v1783, %v1767
    %v2744 = vpack.c.b16 %v1784, %v1768
    %v2745 = vpack.c.b16 %v1785, %v1769
    %v2746 = vpack.c.b16 %v1786, %v1770
    %v2747 = vpack.c.b16 %v1787, %v1771
    %v2748 = vpack.c.b16 %v1788, %v1772
    %v2749 = vpack.c.b16 %v1789, %v1773
    %v2750 = vpack.c.b16 %v1790, %v1774
    %v2751 = vpack.c.b16 %v1791, %v1775
    %v2752 = vpack.c.b16 %v1792, %v1776
    %v2753 = vpack.c.b16 %v1793, %v1777
    %v2754 = vpack.c.b16 %v1794, %v1778
    %v2755 = vpack.c.b16 %v1811, %v1795
    %v2756 = vpack.c.b16 %v1812, %v1796
    %v2757 = vpack.c.b16 %v1813, %v1797
    %v2758 = vpack.c.b16 %v1814, %v1798
    %v2759 = vpack.c.b16 %v1815, %v1799
    %v2760 = vpack.c.b16 %v1816, %v1800
    %v2761 = vpack.c.b16 %v1817, %v1801
    %v2762 = vpack.c.b16 %v1818, %v1802
    %v2763 = vpack.c.b16 %v1819, %v1803
    %v2764 = vpack.c.b16 %v1820, %v1804
    %v2765 = vpack.c.b16 %v1821, %v1805
    %v2766 = vpack.c.b16 %v1822, %v1806
    %v2767 = vpack.c.b16 %v1823, %v1807
    %v2768 = vpack.c.b16 %v1824, %v1808
    %v2769 = vpack.c.b16 %v1825, %v1809
    %v2770 = vpack.c.b16 %v1826, %v1810
    %v2771 = vpack.c.b16 %v1843, %v1827
    %v2772 = vpack.c.b16 %v1844, %v1828
    %v2773 = vpack.c.b16 %v1845, %v1829
    %v2774 = vpack.c.b16 %v1846, %v1830
    %v2775 = vpack.c.b16 %v1847, %v1831
    %v2776 = vpack.c.b16 %v1848, %v1832
    %v2777 = vpack.c.b16 %v1849, %v1833
    %v2778 = vpack.c.b16 %v1850, %v1834
    %v2779 = vpack.c.b16 %v1851, %v1835
    %v2780 = vpack.c.b16 %v1852, %v1836
    %v2781 = vpack.c.b16 %v1853, %v1837
    %v2782 = vpack.c.b16 %v1854, %v1838
    %v2783 = vpack.c.b16 %v1855, %v1839
    %v2784 = vpack.c.b16 %v1856, %v1840
    %v2785 = vpack.c.b16 %v1857, %v1841
    %v2786 = vpack.c.b16 %v1858, %v1842
    %v2787 = vpack.c.b16 %v1875, %v1859
    %v2788 = vpack.c.b16 %v1876, %v1860
    %v2789 = vpack.c.b16 %v1877, %v1861
    %v2790 = vpack.c.b16 %v1878, %v1862
    %v2791 = vpack.c.b16 %v1879, %v1863
    %v2792 = vpack.c.b16 %v1880, %v1864
    %v2793 = vpack.c.b16 %v1881, %v1865
    %v2794 = vpack.c.b16 %v1882, %v1866
    %v2795 = vpack.c.b16 %v1883, %v1867
    %v2796 = vpack.c.b16 %v1884, %v1868
    %v2797 = vpack.c.b16 %v1885, %v1869
    %v2798 = vpack.c.b16 %v1886, %v1870
    %v2799 = vpack.c.b16 %v1887, %v1871
    %v2800 = vpack.c.b16 %v1888, %v1872
    %v2801 = vpack.c.b16 %v1889, %v1873
    %v2802 = vpack.c.b16 %v1890, %v1874
    %v2803 = vpack.c.b16 %v1907, %v1891
    %v2804 = vpack.c.b16 %v1908, %v1892
    %v2805 = vpack.c.b16 %v1909, %v1893
    %v2806 = vpack.c.b16 %v1910, %v1894
    %v2807 = vpack.c.b16 %v1911, %v1895
    %v2808 = vpack.c.b16 %v1912, %v1896
    %v2809 = vpack.c.b16 %v1913, %v1897
    %v2810 = vpack.c.b16 %v1914, %v1898
    %v2811 = vpack.c.b16 %v1915, %v1899
    %v2812 = vpack.c.b16 %v1916, %v1900
    %v2813 = vpack.c.b16 %v1917, %v1901
    %v2814 = vpack.c.b16 %v1918, %v1902
    %v2815 = vpack.c.b16 %v1919, %v1903
    %v2816 = vpack.c.b16 %v1920, %v1904
    %v2817 = vpack.c.b16 %v1921, %v1905
    %v2818 = vpack.c.b16 %v1922, %v1906
    %v2819 = vpack.c.b16 %v1939, %v1923
    %v2820 = vpack.c.b16 %v1940, %v1924
    %v2821 = vpack.c.b16 %v1941, %v1925
    %v2822 = vpack.c.b16 %v1942, %v1926
    %v2823 = vpack.c.b16 %v1943, %v1927
    %v2824 = vpack.c.b16 %v1944, %v1928
    %v2825 = vpack.c.b16 %v1945, %v1929
    %v2826 = vpack.c.b16 %v1946, %v1930
    %v2827 = vpack.c.b16 %v1947, %v1931
    %v2828 = vpack.c.b16 %v1948, %v1932
    %v2829 = vpack.c.b16 %v1949, %v1933
    %v2830 = vpack.c.b16 %v1950, %v1934
    %v2831 = vpack.c.b16 %v1951, %v1935
    %v2832 = vpack.c.b16 %v1952, %v1936
    %v2833 = vpack.c.b16 %v1953, %v1937
    %v2834 = vpack.c.b16 %v1954, %v1938
    %v2835 = vpack.c.b16 %v1971, %v1955
    %v2836 = vpack.c.b16 %v1972, %v1956
    %v2837 = vpack.c.b16 %v1973, %v1957
    %v2838 = vpack.c.b16 %v1974, %v1958
    %v2839 = vpack.c.b16 %v1975, %v1959
    %v2840 = vpack.c.b16 %v1976, %v1960
    %v2841 = vpack.c.b16 %v1977, %v1961
    %v2842 = vpack.c.b16 %v1978, %v1962
    %v2843 = vpack.c.b16 %v1979, %v1963
    %v2844 = vpack.c.b16 %v1980, %v1964
    %v2845 = vpack.c.b16 %v1981, %v1965
    %v2846 = vpack.c.b16 %v1982, %v1966
    %v2847 = vpack.c.b16 %v1983, %v1967
    %v2848 = vpack.c.b16 %v1984, %v1968
    %v2849 = vpack.c.b16 %v1985, %v1969
    %v2850 = vpack.c.b16 %v1986, %v1970
    %v2851 = vpack.c.b16 %v2003, %v1987
    %v2852 = vpack.c.b16 %v2004, %v1988
    %v2853 = vpack.c.b16 %v2005, %v1989
    %v2854 = vpack.c.b16 %v2006, %v1990
    %v2855 = vpack.c.b16 %v2007, %v1991
    %v2856 = vpack.c.b16 %v2008, %v1992
    %v2857 = vpack.c.b16 %v2009, %v1993
    %v2858 = vpack.c.b16 %v2010, %v1994
    %v2859 = vpack.c.b16 %v2011, %v1995
    %v2860 = vpack.c.b16 %v2012, %v1996
    %v2861 = vpack.c.b16 %v2013, %v1997
    %v2862 = vpack.c.b16 %v2014, %v1998
    %v2863 = vpack.c.b16 %v2015, %v1999
    %v2864 = vpack.c.b16 %v2016, %v2000
    %v2865 = vpack.c.b16 %v2017, %v2001
    %v2866 = vpack.c.b16 %v2018, %v2002
    %v2867 = vpack.c.b16 %v2035, %v2019
    %v2868 = vpack.c.b16 %v2036, %v2020
    %v2869 = vpack.c.b16 %v2037, %v2021
    %v2870 = vpack.c.b16 %v2038, %v2022
    %v2871 = vpack.c.b16 %v2039, %v2023
    %v2872 = vpack.c.b16 %v2040, %v2024
    %v2873 = vpack.c.b16 %v2041, %v2025
    %v2874 = vpack.c.b16 %v2042, %v2026
    %v2875 = vpack.c.b16 %v2043, %v2027
    %v2876 = vpack.c.b16 %v2044, %v2028
    %v2877 = vpack.c.b16 %v2045, %v2029
    %v2878 = vpack.c.b16 %v2046, %v2030
    %v2879 = vpack.c.b16 %v2047, %v2031
    %v2880 = vpack.c.b16 %v2048, %v2032
    %v2881 = vpack.c.b16 %v2049, %v2033
    %v2882 = vpack.c.b16 %v2050, %v2034
    %v2883 = vpack.c.b16 %v2067, %v2051
    %v2884 = vpack.c.b16 %v2068, %v2052
    %v2885 = vpack.c.b16 %v2069, %v2053
    %v2886 = vpack.c.b16 %v2070, %v2054
    %v2887 = vpack.c.b16 %v2071, %v2055
    %v2888 = vpack.c.b16 %v2072, %v2056
    %v2889 = vpack.c.b16 %v2073, %v2057
    %v2890 = vpack.c.b16 %v2074, %v2058
    %v2891 = vpack.c.b16 %v2075, %v2059
    %v2892 = vpack.c.b16 %v2076, %v2060
    %v2893 = vpack.c.b16 %v2077, %v2061
    %v2894 = vpack.c.b16 %v2078, %v2062
    %v2895 = vpack.c.b16 %v2079, %v2063
    %v2896 = vpack.c.b16 %v2080, %v2064
    %v2897 = vpack.c.b16 %v2081, %v2065
    %v2898 = vpack.c.b16 %v2082, %v2066
    %v2899 = vpack.c.b16 %v2099, %v2083
    %v2900 = vpack.c.b16 %v2100, %v2084
    %v2901 = vpack.c.b16 %v2101, %v2085
    %v2902 = vpack.c.b16 %v2102, %v2086
    %v2903 = vpack.c.b16 %v2103, %v2087
    %v2904 = vpack.c.b16 %v2104, %v2088
    %v2905 = vpack.c.b16 %v2105, %v2089
    %v2906 = vpack.c.b16 %v2106, %v2090
    %v2907 = vpack.c.b16 %v2107, %v2091
    %v2908 = vpack.c.b16 %v2108, %v2092
    %v2909 = vpack.c.b16 %v2109, %v2093
    %v2910 = vpack.c.b16 %v2110, %v2094
    %v2911 = vpack.c.b16 %v2111, %v2095
    %v2912 = vpack.c.b16 %v2112, %v2096
    %v2913 = vpack.c.b16 %v2113, %v2097
    %v2914 = vpack.c.b16 %v2114, %v2098
    %v2915 = vpack.c.b16 %v2131, %v2115
    %v2916 = vpack.c.b16 %v2132, %v2116
    %v2917 = vpack.c.b16 %v2133, %v2117
    %v2918 = vpack.c.b16 %v2134, %v2118
    %v2919 = vpack.c.b16 %v2135, %v2119
    %v2920 = vpack.c.b16 %v2136, %v2120
    %v2921 = vpack.c.b16 %v2137, %v2121
    %v2922 = vpack.c.b16 %v2138, %v2122
    %v2923 = vpack.c.b16 %v2139, %v2123
    %v2924 = vpack.c.b16 %v2140, %v2124
    %v2925 = vpack.c.b16 %v2141, %v2125
    %v2926 = vpack.c.b16 %v2142, %v2126
    %v2927 = vpack.c.b16 %v2143, %v2127
    %v2928 = vpack.c.b16 %v2144, %v2128
    %v2929 = vpack.c.b16 %v2145, %v2129
    %v2930 = vpack.c.b16 %v2146, %v2130
    %v2931 = vpack.c.b16 %v2163, %v2147
    %v2932 = vpack.c.b16 %v2164, %v2148
    %v2933 = vpack.c.b16 %v2165, %v2149
    %v2934 = vpack.c.b16 %v2166, %v2150
    %v2935 = vpack.c.b16 %v2167, %v2151
    %v2936 = vpack.c.b16 %v2168, %v2152
    %v2937 = vpack.c.b16 %v2169, %v2153
    %v2938 = vpack.c.b16 %v2170, %v2154
    %v2939 = vpack.c.b16 %v2171, %v2155
    %v2940 = vpack.c.b16 %v2172, %v2156
    %v2941 = vpack.c.b16 %v2173, %v2157
    %v2942 = vpack.c.b16 %v2174, %v2158
    %v2943 = vpack.c.b16 %v2175, %v2159
    %v2944 = vpack.c.b16 %v2176, %v2160
    %v2945 = vpack.c.b16 %v2177, %v2161
    %v2946 = vpack.c.b16 %v2178, %v2162
    %v2947 = vpack.c.b16 %v2195, %v2179
    %v2948 = vpack.c.b16 %v2196, %v2180
    %v2949 = vpack.c.b16 %v2197, %v2181
    %v2950 = vpack.c.b16 %v2198, %v2182
    %v2951 = vpack.c.b16 %v2199, %v2183
    %v2952 = vpack.c.b16 %v2200, %v2184
    %v2953 = vpack.c.b16 %v2201, %v2185
    %v2954 = vpack.c.b16 %v2202, %v2186
    %v2955 = vpack.c.b16 %v2203, %v2187
    %v2956 = vpack.c.b16 %v2204, %v2188
    %v2957 = vpack.c.b16 %v2205, %v2189
    %v2958 = vpack.c.b16 %v2206, %v2190
    %v2959 = vpack.c.b16 %v2207, %v2191
    %v2960 = vpack.c.b16 %v2208, %v2192
    %v2961 = vpack.c.b16 %v2209, %v2193
    %v2962 = vpack.c.b16 %v2210, %v2194
    %v2963 = vpack.c.b16 %v2227, %v2211
    %v2964 = vpack.c.b16 %v2228, %v2212
    %v2965 = vpack.c.b16 %v2229, %v2213
    %v2966 = vpack.c.b16 %v2230, %v2214
    %v2967 = vpack.c.b16 %v2231, %v2215
    %v2968 = vpack.c.b16 %v2232, %v2216
    %v2969 = vpack.c.b16 %v2233, %v2217
    %v2970 = vpack.c.b16 %v2234, %v2218
    %v2971 = vpack.c.b16 %v2235, %v2219
    %v2972 = vpack.c.b16 %v2236, %v2220
    %v2973 = vpack.c.b16 %v2237, %v2221
    %v2974 = vpack.c.b16 %v2238, %v2222
    %v2975 = vpack.c.b16 %v2239, %v2223
    %v2976 = vpack.c.b16 %v2240, %v2224
    %v2977 = vpack.c.b16 %v2241, %v2225
    %v2978 = vpack.c.b16 %v2242, %v2226
    %v2979 = vpack.c.b16 %v2259, %v2243
    %v2980 = vpack.c.b16 %v2260, %v2244
    %v2981 = vpack.c.b16 %v2261, %v2245
    %v2982 = vpack.c.b16 %v2262, %v2246
    %v2983 = vpack.c.b16 %v2263, %v2247
    %v2984 = vpack.c.b16 %v2264, %v2248
    %v2985 = vpack.c.b16 %v2265, %v2249
    %v2986 = vpack.c.b16 %v2266, %v2250
    %v2987 = vpack.c.b16 %v2267, %v2251
    %v2988 = vpack.c.b16 %v2268, %v2252
    %v2989 = vpack.c.b16 %v2269, %v2253
    %v2990 = vpack.c.b16 %v2270, %v2254
    %v2991 = vpack.c.b16 %v2271, %v2255
    %v2992 = vpack.c.b16 %v2272, %v2256
    %v2993 = vpack.c.b16 %v2273, %v2257
    %v2994 = vpack.c.b16 %v2274, %v2258
    %v2995 = vpack.c.b16 %v2291, %v2275
    %v2996 = vpack.c.b16 %v2292, %v2276
    %v2997 = vpack.c.b16 %v2293, %v2277
    %v2998 = vpack.c.b16 %v2294, %v2278
    %v2999 = vpack.c.b16 %v2295, %v2279
    %v3000 = vpack.c.b16 %v2296, %v2280
    %v3001 = vpack.c.b16 %v2297, %v2281
    %v3002 = vpack.c.b16 %v2298, %v2282
    %v3003 = vpack.c.b16 %v2299, %v2283
    %v3004 = vpack.c.b16 %v2300, %v2284
    %v3005 = vpack.c.b16 %v2301, %v2285
    %v3006 = vpack.c.b16 %v2302, %v2286
    %v3007 = vpack.c.b16 %v2303, %v2287
    %v3008 = vpack.c.b16 %v2304, %v2288
    %v3009 = vpack.c.b16 %v2305, %v2289
    %v3010 = vpack.c.b16 %v2306, %v2290
    %v3011 = vpack.c.b16 %v2323, %v2307
    %v3012 = vpack.c.b16 %v2324, %v2308
    %v3013 = vpack.c.b16 %v2325, %v2309
    %v3014 = vpack.c.b16 %v2326, %v2310
    %v3015 = vpack.c.b16 %v2327, %v2311
    %v3016 = vpack.c.b16 %v2328, %v2312
    %v3017 = vpack.c.b16 %v2329, %v2313
    %v3018 = vpack.c.b16 %v2330, %v2314
    %v3019 = vpack.c.b16 %v2331, %v2315
    %v3020 = vpack.c.b16 %v2332, %v2316
    %v3021 = vpack.c.b16 %v2333, %v2317
    %v3022 = vpack.c.b16 %v2334, %v2318
    %v3023 = vpack.c.b16 %v2335, %v2319
    %v3024 = vpack.c.b16 %v2336, %v2320
    %v3025 = vpack.c.b16 %v2337, %v2321
    %v3026 = vpack.c.b16 %v2338, %v2322
    %v3027 = vpack.c.b16 %v2355, %v2339
    %v3028 = vpack.c.b16 %v2356, %v2340
    %v3029 = vpack.c.b16 %v2357, %v2341
    %v3030 = vpack.c.b16 %v2358, %v2342
    %v3031 = vpack.c.b16 %v2359, %v2343
    %v3032 = vpack.c.b16 %v2360, %v2344
    %v3033 = vpack.c.b16 %v2361, %v2345
    %v3034 = vpack.c.b16 %v2362, %v2346
    %v3035 = vpack.c.b16 %v2363, %v2347
    %v3036 = vpack.c.b16 %v2364, %v2348
    %v3037 = vpack.c.b16 %v2365, %v2349
    %v3038 = vpack.c.b16 %v2366, %v2350
    %v3039 = vpack.c.b16 %v2367, %v2351
    %v3040 = vpack.c.b16 %v2368, %v2352
    %v3041 = vpack.c.b16 %v2369, %v2353
    %v3042 = vpack.c.b16 %v2370, %v2354
    %v3043 = vpack.c.b16 %v2387, %v2371
    %v3044 = vpack.c.b16 %v2388, %v2372
    %v3045 = vpack.c.b16 %v2389, %v2373
    %v3046 = vpack.c.b16 %v2390, %v2374
    %v3047 = vpack.c.b16 %v2391, %v2375
    %v3048 = vpack.c.b16 %v2392, %v2376
    %v3049 = vpack.c.b16 %v2393, %v2377
    %v3050 = vpack.c.b16 %v2394, %v2378
    %v3051 = vpack.c.b16 %v2395, %v2379
    %v3052 = vpack.c.b16 %v2396, %v2380
    %v3053 = vpack.c.b16 %v2397, %v2381
    %v3054 = vpack.c.b16 %v2398, %v2382
    %v3055 = vpack.c.b16 %v2399, %v2383
    %v3056 = vpack.c.b16 %v2400, %v2384
    %v3057 = vpack.c.b16 %v2401, %v2385
    %v3058 = vpack.c.b16 %v2402, %v2386
    %v3059 = vpack.c.b16 %v2419, %v2403
    %v3060 = vpack.c.b16 %v2420, %v2404
    %v3061 = vpack.c.b16 %v2421, %v2405
    %v3062 = vpack.c.b16 %v2422, %v2406
    %v3063 = vpack.c.b16 %v2423, %v2407
    %v3064 = vpack.c.b16 %v2424, %v2408
    %v3065 = vpack.c.b16 %v2425, %v2409
    %v3066 = vpack.c.b16 %v2426, %v2410
    %v3067 = vpack.c.b16 %v2427, %v2411
    %v3068 = vpack.c.b16 %v2428, %v2412
    %v3069 = vpack.c.b16 %v2429, %v2413
    %v3070 = vpack.c.b16 %v2430, %v2414
    %v3071 = vpack.c.b16 %v2431, %v2415
    %v3072 = vpack.c.b16 %v2432, %v2416
    %v3073 = vpack.c.b16 %v2433, %v2417
    %v3074 = vpack.c.b16 %v2434, %v2418
    %v3075 = vpack.c.b16 %v2451, %v2435
    %v3076 = vpack.c.b16 %v2452, %v2436
    %v3077 = vpack.c.b16 %v2453, %v2437
    %v3078 = vpack.c.b16 %v2454, %v2438
    %v3079 = vpack.c.b16 %v2455, %v2439
    %v3080 = vpack.c.b16 %v2456, %v2440
    %v3081 = vpack.c.b16 %v2457, %v2441
    %v3082 = vpack.c.b16 %v2458, %v2442
    %v3083 = vpack.c.b16 %v2459, %v2443
    %v3084 = vpack.c.b16 %v2460, %v2444
    %v3085 = vpack.c.b16 %v2461, %v2445
    %v3086 = vpack.c.b16 %v2462, %v2446
    %v3087 = vpack.c.b16 %v2463, %v2447
    %v3088 = vpack.c.b16 %v2464, %v2448
    %v3089 = vpack.c.b16 %v2465, %v2449
    %v3090 = vpack.c.b16 %v2466, %v2450
    %v3091 = vpack.c.b16 %v2483, %v2467
    %v3092 = vpack.c.b16 %v2484, %v2468
    %v3093 = vpack.c.b16 %v2485, %v2469
    %v3094 = vpack.c.b16 %v2486, %v2470
    %v3095 = vpack.c.b16 %v2487, %v2471
    %v3096 = vpack.c.b16 %v2488, %v2472
    %v3097 = vpack.c.b16 %v2489, %v2473
    %v3098 = vpack.c.b16 %v2490, %v2474
    %v3099 = vpack.c.b16 %v2491, %v2475
    %v3100 = vpack.c.b16 %v2492, %v2476
    %v3101 = vpack.c.b16 %v2493, %v2477
    %v3102 = vpack.c.b16 %v2494, %v2478
    %v3103 = vpack.c.b16 %v2495, %v2479
    %v3104 = vpack.c.b16 %v2496, %v2480
    %v3105 = vpack.c.b16 %v2497, %v2481
    %v3106 = vpack.c.b16 %v2498, %v2482
    %v3107 = vpack.c.b16 %v2515, %v2499
    %v3108 = vpack.c.b16 %v2516, %v2500
    %v3109 = vpack.c.b16 %v2517, %v2501
    %v3110 = vpack.c.b16 %v2518, %v2502
    %v3111 = vpack.c.b16 %v2519, %v2503
    %v3112 = vpack.c.b16 %v2520, %v2504
    %v3113 = vpack.c.b16 %v2521, %v2505
    %v3114 = vpack.c.b16 %v2522, %v2506
    %v3115 = vpack.c.b16 %v2523, %v2507
    %v3116 = vpack.c.b16 %v2524, %v2508
    %v3117 = vpack.c.b16 %v2525, %v2509
    %v3118 = vpack.c.b16 %v2526, %v2510
    %v3119 = vpack.c.b16 %v2527, %v2511
    %v3120 = vpack.c.b16 %v2528, %v2512
    %v3121 = vpack.c.b16 %v2529, %v2513
    %v3122 = vpack.c.b16 %v2530, %v2514
    %v3123 = vpack.c.b16 %v2547, %v2531
    %v3124 = vpack.c.b16 %v2548, %v2532
    %v3125 = vpack.c.b16 %v2549, %v2533
    %v3126 = vpack.c.b16 %v2550, %v2534
    %v3127 = vpack.c.b16 %v2551, %v2535
    %v3128 = vpack.c.b16 %v2552, %v2536
    %v3129 = vpack.c.b16 %v2553, %v2537
    %v3130 = vpack.c.b16 %v2554, %v2538
    %v3131 = vpack.c.b16 %v2555, %v2539
    %v3132 = vpack.c.b16 %v2556, %v2540
    %v3133 = vpack.c.b16 %v2557, %v2541
    %v3134 = vpack.c.b16 %v2558, %v2542
    %v3135 = vpack.c.b16 %v2559, %v2543
    %v3136 = vpack.c.b16 %v2560, %v2544
    %v3137 = vpack.c.b16 %v2561, %v2545
    %v3138 = vpack.c.b16 %v2562, %v2546
    %v3139 = vpack.c.b16 %v2579, %v2563
    %v3140 = vpack.c.b16 %v2580, %v2564
    %v3141 = vpack.c.b16 %v2581, %v2565
    %v3142 = vpack.c.b16 %v2582, %v2566
    %v3143 = vpack.c.b16 %v2583, %v2567
    %v3144 = vpack.c.b16 %v2584, %v2568
    %v3145 = vpack.c.b16 %v2585, %v2569
    %v3146 = vpack.c.b16 %v2586, %v2570
    %v3147 = vpack.c.b16 %v2587, %v2571
    %v3148 = vpack.c.b16 %v2588, %v2572
    %v3149 = vpack.c.b16 %v2589, %v2573
    %v3150 = vpack.c.b16 %v2590, %v2574
    %v3151 = vpack.c.b16 %v2591, %v2575
    %v3152 = vpack.c.b16 %v2592, %v2576
    %v3153 = vpack.c.b16 %v2593, %v2577
    %v3154 = vpack.c.b16 %v2594, %v2578
    %v3155 = vpack.c.b16 %v2611, %v2595
    %v3156 = vpack.c.b16 %v2612, %v2596
    %v3157 = vpack.c.b16 %v2613, %v2597
    %v3158 = vpack.c.b16 %v2614, %v2598
    %v3159 = vpack.c.b16 %v2615, %v2599
    %v3160 = vpack.c.b16 %v2616, %v2600
    %v3161 = vpack.c.b16 %v2617, %v2601
    %v3162 = vpack.c.b16 %v2618, %v2602
    %v3163 = vpack.c.b16 %v2619, %v2603
    %v3164 = vpack.c.b16 %v2620, %v2604
    %v3165 = vpack.c.b16 %v2621, %v2605
    %v3166 = vpack.c.b16 %v2622, %v2606
    %v3167 = vpack.c.b16 %v2623, %v2607
    %v3168 = vpack.c.b16 %v2624, %v2608
    %v3169 = vpack.c.b16 %v2625, %v2609
    %v3170 = vpack.c.b16 %v2626, %v2610
    %v3171 = vpack.c.b16 %v2643, %v2627
    %v3172 = vpack.c.b16 %v2644, %v2628
    %v3173 = vpack.c.b16 %v2645, %v2629
    %v3174 = vpack.c.b16 %v2646, %v2630
    %v3175 = vpack.c.b16 %v2647, %v2631
    %v3176 = vpack.c.b16 %v2648, %v2632
    %v3177 = vpack.c.b16 %v2649, %v2633
    %v3178 = vpack.c.b16 %v2650, %v2634
    %v3179 = vpack.c.b16 %v2651, %v2635
    %v3180 = vpack.c.b16 %v2652, %v2636
    %v3181 = vpack.c.b16 %v2653, %v2637
    %v3182 = vpack.c.b16 %v2654, %v2638
    %v3183 = vpack.c.b16 %v2655, %v2639
    %v3184 = vpack.c.b16 %v2656, %v2640
    %v3185 = vpack.c.b16 %v2657, %v2641
    %v3186 = vpack.c.b16 %v2658, %v2642
    %v3187 = vpack.c.b16 %v2675, %v2659
    %v3188 = vpack.c.b16 %v2676, %v2660
    %v3189 = vpack.c.b16 %v2677, %v2661
    %v3190 = vpack.c.b16 %v2678, %v2662
    %v3191 = vpack.c.b16 %v2679, %v2663
    %v3192 = vpack.c.b16 %v2680, %v2664
    %v3193 = vpack.c.b16 %v2681, %v2665
    %v3194 = vpack.c.b16 %v2682, %v2666
    %v3195 = vpack.c.b16 %v2683, %v2667
    %v3196 = vpack.c.b16 %v2684, %v2668
    %v3197 = vpack.c.b16 %v2685, %v2669
    %v3198 = vpack.c.b16 %v2686, %v2670
    %v3199 = vpack.c.b16 %v2687, %v2671
    %v3200 = vpack.c.b16 %v2688, %v2672
    %v3201 = vpack.c.b16 %v2689, %v2673
    %v3202 = vpack.c.b16 %v2690, %v2674
    %3715 = vmatpush.bf16.msra.mxu0 %v2803
    %3716 = vmatpush.bf16.msra.mxu0 %v2787
    %3717 = vmatpush.bf16.msra.mxu0 %v2771
    %3718 = vmatpush.bf16.msra.mxu0 %v2755
    %3719 = vmatpush.bf16.msra.mxu0 %v2739
    %3720 = vmatpush.bf16.msra.mxu0 %v2723
    %3721 = vmatpush.bf16.msra.mxu0 %v2707
    %3722 = vmatpush.bf16.msra.mxu0 %v2691
    %3723 = vmatmul.bf16.gmra.mxu0 %v603
    %v3724 = vpop.f32.mrf.mxu0
    %v3725 = vadd.f32 %v1123, %v3724
    %v3726 = vpop.f32.mrf.mxu0
    %3727 = vdwg.mxu0
    %3728 = vmatpush.bf16.msra.mxu0 %v2931
    %3729 = vmatpush.bf16.msra.mxu0 %v2915
    %3730 = vmatpush.bf16.msra.mxu0 %v2899
    %3731 = vmatpush.bf16.msra.mxu0 %v2883
    %3732 = vmatpush.bf16.msra.mxu0 %v2867
    %3733 = vmatpush.bf16.msra.mxu0 %v2851
    %3734 = vmatpush.bf16.msra.mxu0 %v2835
    %3735 = vmatpush.bf16.msra.mxu0 %v2819
    %3736 = vmatmul.bf16.gmra.mxu0 %v604
    %v3737 = vpop.f32.mrf.mxu0
    %v3738 = vadd.f32 %v3725, %v3737
    %v3739 = vpop.f32.mrf.mxu0
    %3740 = vdwg.mxu0
    %3741 = vmatpush.bf16.msra.mxu0 %v3059
    %3742 = vmatpush.bf16.msra.mxu0 %v3043
    %3743 = vmatpush.bf16.msra.mxu0 %v3027
    %3744 = vmatpush.bf16.msra.mxu0 %v3011
    %3745 = vmatpush.bf16.msra.mxu0 %v2995
    %3746 = vmatpush.bf16.msra.mxu0 %v2979
    %3747 = vmatpush.bf16.msra.mxu0 %v2963
    %3748 = vmatpush.bf16.msra.mxu0 %v2947
    %3749 = vmatmul.bf16.gmra.mxu0 %v605
    %v3750 = vpop.f32.mrf.mxu0
    %v3751 = vadd.f32 %v3738, %v3750
    %v3752 = vpop.f32.mrf.mxu0
    %3753 = vdwg.mxu0
    %3754 = vmatpush.bf16.msra.mxu0 %v3187
    %3755 = vmatpush.bf16.msra.mxu0 %v3171
    %3756 = vmatpush.bf16.msra.mxu0 %v3155
    %3757 = vmatpush.bf16.msra.mxu0 %v3139
    %3758 = vmatpush.bf16.msra.mxu0 %v3123
    %3759 = vmatpush.bf16.msra.mxu0 %v3107
    %3760 = vmatpush.bf16.msra.mxu0 %v3091
    %3761 = vmatpush.bf16.msra.mxu0 %v3075
    %3762 = vmatmul.bf16.gmra.mxu0 %v606
    %v3763 = vpop.f32.mrf.mxu0
    %v3764 = vadd.f32 %v3751, %v3763
    %v3765 = vpop.f32.mrf.mxu0
    %3766 = vdwg.mxu0
    %3767 = vmatpush.bf16.msra.mxu0 %v2804
    %3768 = vmatpush.bf16.msra.mxu0 %v2788
    %3769 = vmatpush.bf16.msra.mxu0 %v2772
    %3770 = vmatpush.bf16.msra.mxu0 %v2756
    %3771 = vmatpush.bf16.msra.mxu0 %v2740
    %3772 = vmatpush.bf16.msra.mxu0 %v2724
    %3773 = vmatpush.bf16.msra.mxu0 %v2708
    %3774 = vmatpush.bf16.msra.mxu0 %v2692
    %3775 = vmatmul.bf16.gmra.mxu0 %v603
    %v3776 = vpop.f32.mrf.mxu0
    %v3777 = vadd.f32 %v1124, %v3776
    %v3778 = vpop.f32.mrf.mxu0
    %3779 = vdwg.mxu0
    %3780 = vmatpush.bf16.msra.mxu0 %v2932
    %3781 = vmatpush.bf16.msra.mxu0 %v2916
    %3782 = vmatpush.bf16.msra.mxu0 %v2900
    %3783 = vmatpush.bf16.msra.mxu0 %v2884
    %3784 = vmatpush.bf16.msra.mxu0 %v2868
    %3785 = vmatpush.bf16.msra.mxu0 %v2852
    %3786 = vmatpush.bf16.msra.mxu0 %v2836
    %3787 = vmatpush.bf16.msra.mxu0 %v2820
    %3788 = vmatmul.bf16.gmra.mxu0 %v604
    %v3789 = vpop.f32.mrf.mxu0
    %v3790 = vadd.f32 %v3777, %v3789
    %v3791 = vpop.f32.mrf.mxu0
    %3792 = vdwg.mxu0
    %3793 = vmatpush.bf16.msra.mxu0 %v3060
    %3794 = vmatpush.bf16.msra.mxu0 %v3044
    %3795 = vmatpush.bf16.msra.mxu0 %v3028
    %3796 = vmatpush.bf16.msra.mxu0 %v3012
    %3797 = vmatpush.bf16.msra.mxu0 %v2996
    %3798 = vmatpush.bf16.msra.mxu0 %v2980
    %3799 = vmatpush.bf16.msra.mxu0 %v2964
    %3800 = vmatpush.bf16.msra.mxu0 %v2948
    %3801 = vmatmul.bf16.gmra.mxu0 %v605
    %v3802 = vpop.f32.mrf.mxu0
    %v3803 = vadd.f32 %v3790, %v3802
    %v3804 = vpop.f32.mrf.mxu0
    %3805 = vdwg.mxu0
    %3806 = vmatpush.bf16.msra.mxu0 %v3188
    %3807 = vmatpush.bf16.msra.mxu0 %v3172
    %3808 = vmatpush.bf16.msra.mxu0 %v3156
    %3809 = vmatpush.bf16.msra.mxu0 %v3140
    %3810 = vmatpush.bf16.msra.mxu0 %v3124
    %3811 = vmatpush.bf16.msra.mxu0 %v3108
    %3812 = vmatpush.bf16.msra.mxu0 %v3092
    %3813 = vmatpush.bf16.msra.mxu0 %v3076
    %3814 = vmatmul.bf16.gmra.mxu0 %v606
    %v3815 = vpop.f32.mrf.mxu0
    %v3816 = vadd.f32 %v3803, %v3815
    %v3817 = vpop.f32.mrf.mxu0
    %3818 = vdwg.mxu0
    %3819 = vmatpush.bf16.msra.mxu0 %v2805
    %3820 = vmatpush.bf16.msra.mxu0 %v2789
    %3821 = vmatpush.bf16.msra.mxu0 %v2773
    %3822 = vmatpush.bf16.msra.mxu0 %v2757
    %3823 = vmatpush.bf16.msra.mxu0 %v2741
    %3824 = vmatpush.bf16.msra.mxu0 %v2725
    %3825 = vmatpush.bf16.msra.mxu0 %v2709
    %3826 = vmatpush.bf16.msra.mxu0 %v2693
    %3827 = vmatmul.bf16.gmra.mxu0 %v603
    %v3828 = vpop.f32.mrf.mxu0
    %v3829 = vadd.f32 %v1125, %v3828
    %v3830 = vpop.f32.mrf.mxu0
    %3831 = vdwg.mxu0
    %3832 = vmatpush.bf16.msra.mxu0 %v2933
    %3833 = vmatpush.bf16.msra.mxu0 %v2917
    %3834 = vmatpush.bf16.msra.mxu0 %v2901
    %3835 = vmatpush.bf16.msra.mxu0 %v2885
    %3836 = vmatpush.bf16.msra.mxu0 %v2869
    %3837 = vmatpush.bf16.msra.mxu0 %v2853
    %3838 = vmatpush.bf16.msra.mxu0 %v2837
    %3839 = vmatpush.bf16.msra.mxu0 %v2821
    %3840 = vmatmul.bf16.gmra.mxu0 %v604
    %v3841 = vpop.f32.mrf.mxu0
    %v3842 = vadd.f32 %v3829, %v3841
    %v3843 = vpop.f32.mrf.mxu0
    %3844 = vdwg.mxu0
    %3845 = vmatpush.bf16.msra.mxu0 %v3061
    %3846 = vmatpush.bf16.msra.mxu0 %v3045
    %3847 = vmatpush.bf16.msra.mxu0 %v3029
    %3848 = vmatpush.bf16.msra.mxu0 %v3013
    %3849 = vmatpush.bf16.msra.mxu0 %v2997
    %3850 = vmatpush.bf16.msra.mxu0 %v2981
    %3851 = vmatpush.bf16.msra.mxu0 %v2965
    %3852 = vmatpush.bf16.msra.mxu0 %v2949
    %3853 = vmatmul.bf16.gmra.mxu0 %v605
    %v3854 = vpop.f32.mrf.mxu0
    %v3855 = vadd.f32 %v3842, %v3854
    %v3856 = vpop.f32.mrf.mxu0
    %3857 = vdwg.mxu0
    %3858 = vmatpush.bf16.msra.mxu0 %v3189
    %3859 = vmatpush.bf16.msra.mxu0 %v3173
    %3860 = vmatpush.bf16.msra.mxu0 %v3157
    %3861 = vmatpush.bf16.msra.mxu0 %v3141
    %3862 = vmatpush.bf16.msra.mxu0 %v3125
    %3863 = vmatpush.bf16.msra.mxu0 %v3109
    %3864 = vmatpush.bf16.msra.mxu0 %v3093
    %3865 = vmatpush.bf16.msra.mxu0 %v3077
    %3866 = vmatmul.bf16.gmra.mxu0 %v606
    %v3867 = vpop.f32.mrf.mxu0
    %v3868 = vadd.f32 %v3855, %v3867
    %v3869 = vpop.f32.mrf.mxu0
    %3870 = vdwg.mxu0
    %3871 = vmatpush.bf16.msra.mxu0 %v2806
    %3872 = vmatpush.bf16.msra.mxu0 %v2790
    %3873 = vmatpush.bf16.msra.mxu0 %v2774
    %3874 = vmatpush.bf16.msra.mxu0 %v2758
    %3875 = vmatpush.bf16.msra.mxu0 %v2742
    %3876 = vmatpush.bf16.msra.mxu0 %v2726
    %3877 = vmatpush.bf16.msra.mxu0 %v2710
    %3878 = vmatpush.bf16.msra.mxu0 %v2694
    %3879 = vmatmul.bf16.gmra.mxu0 %v603
    %v3880 = vpop.f32.mrf.mxu0
    %v3881 = vadd.f32 %v1126, %v3880
    %v3882 = vpop.f32.mrf.mxu0
    %3883 = vdwg.mxu0
    %3884 = vmatpush.bf16.msra.mxu0 %v2934
    %3885 = vmatpush.bf16.msra.mxu0 %v2918
    %3886 = vmatpush.bf16.msra.mxu0 %v2902
    %3887 = vmatpush.bf16.msra.mxu0 %v2886
    %3888 = vmatpush.bf16.msra.mxu0 %v2870
    %3889 = vmatpush.bf16.msra.mxu0 %v2854
    %3890 = vmatpush.bf16.msra.mxu0 %v2838
    %3891 = vmatpush.bf16.msra.mxu0 %v2822
    %3892 = vmatmul.bf16.gmra.mxu0 %v604
    %v3893 = vpop.f32.mrf.mxu0
    %v3894 = vadd.f32 %v3881, %v3893
    %v3895 = vpop.f32.mrf.mxu0
    %3896 = vdwg.mxu0
    %3897 = vmatpush.bf16.msra.mxu0 %v3062
    %3898 = vmatpush.bf16.msra.mxu0 %v3046
    %3899 = vmatpush.bf16.msra.mxu0 %v3030
    %3900 = vmatpush.bf16.msra.mxu0 %v3014
    %3901 = vmatpush.bf16.msra.mxu0 %v2998
    %3902 = vmatpush.bf16.msra.mxu0 %v2982
    %3903 = vmatpush.bf16.msra.mxu0 %v2966
    %3904 = vmatpush.bf16.msra.mxu0 %v2950
    %3905 = vmatmul.bf16.gmra.mxu0 %v605
    %v3906 = vpop.f32.mrf.mxu0
    %v3907 = vadd.f32 %v3894, %v3906
    %v3908 = vpop.f32.mrf.mxu0
    %3909 = vdwg.mxu0
    %3910 = vmatpush.bf16.msra.mxu0 %v3190
    %3911 = vmatpush.bf16.msra.mxu0 %v3174
    %3912 = vmatpush.bf16.msra.mxu0 %v3158
    %3913 = vmatpush.bf16.msra.mxu0 %v3142
    %3914 = vmatpush.bf16.msra.mxu0 %v3126
    %3915 = vmatpush.bf16.msra.mxu0 %v3110
    %3916 = vmatpush.bf16.msra.mxu0 %v3094
    %3917 = vmatpush.bf16.msra.mxu0 %v3078
    %3918 = vmatmul.bf16.gmra.mxu0 %v606
    %v3919 = vpop.f32.mrf.mxu0
    %v3920 = vadd.f32 %v3907, %v3919
    %v3921 = vpop.f32.mrf.mxu0
    %3922 = vdwg.mxu0
    %3923 = vmatpush.bf16.msra.mxu0 %v2807
    %3924 = vmatpush.bf16.msra.mxu0 %v2791
    %3925 = vmatpush.bf16.msra.mxu0 %v2775
    %3926 = vmatpush.bf16.msra.mxu0 %v2759
    %3927 = vmatpush.bf16.msra.mxu0 %v2743
    %3928 = vmatpush.bf16.msra.mxu0 %v2727
    %3929 = vmatpush.bf16.msra.mxu0 %v2711
    %3930 = vmatpush.bf16.msra.mxu0 %v2695
    %3931 = vmatmul.bf16.gmra.mxu0 %v603
    %v3932 = vpop.f32.mrf.mxu0
    %v3933 = vadd.f32 %v1127, %v3932
    %v3934 = vpop.f32.mrf.mxu0
    %3935 = vdwg.mxu0
    %3936 = vmatpush.bf16.msra.mxu0 %v2935
    %3937 = vmatpush.bf16.msra.mxu0 %v2919
    %3938 = vmatpush.bf16.msra.mxu0 %v2903
    %3939 = vmatpush.bf16.msra.mxu0 %v2887
    %3940 = vmatpush.bf16.msra.mxu0 %v2871
    %3941 = vmatpush.bf16.msra.mxu0 %v2855
    %3942 = vmatpush.bf16.msra.mxu0 %v2839
    %3943 = vmatpush.bf16.msra.mxu0 %v2823
    %3944 = vmatmul.bf16.gmra.mxu0 %v604
    %v3945 = vpop.f32.mrf.mxu0
    %v3946 = vadd.f32 %v3933, %v3945
    %v3947 = vpop.f32.mrf.mxu0
    %3948 = vdwg.mxu0
    %3949 = vmatpush.bf16.msra.mxu0 %v3063
    %3950 = vmatpush.bf16.msra.mxu0 %v3047
    %3951 = vmatpush.bf16.msra.mxu0 %v3031
    %3952 = vmatpush.bf16.msra.mxu0 %v3015
    %3953 = vmatpush.bf16.msra.mxu0 %v2999
    %3954 = vmatpush.bf16.msra.mxu0 %v2983
    %3955 = vmatpush.bf16.msra.mxu0 %v2967
    %3956 = vmatpush.bf16.msra.mxu0 %v2951
    %3957 = vmatmul.bf16.gmra.mxu0 %v605
    %v3958 = vpop.f32.mrf.mxu0
    %v3959 = vadd.f32 %v3946, %v3958
    %v3960 = vpop.f32.mrf.mxu0
    %3961 = vdwg.mxu0
    %3962 = vmatpush.bf16.msra.mxu0 %v3191
    %3963 = vmatpush.bf16.msra.mxu0 %v3175
    %3964 = vmatpush.bf16.msra.mxu0 %v3159
    %3965 = vmatpush.bf16.msra.mxu0 %v3143
    %3966 = vmatpush.bf16.msra.mxu0 %v3127
    %3967 = vmatpush.bf16.msra.mxu0 %v3111
    %3968 = vmatpush.bf16.msra.mxu0 %v3095
    %3969 = vmatpush.bf16.msra.mxu0 %v3079
    %3970 = vmatmul.bf16.gmra.mxu0 %v606
    %v3971 = vpop.f32.mrf.mxu0
    %v3972 = vadd.f32 %v3959, %v3971
    %v3973 = vpop.f32.mrf.mxu0
    %3974 = vdwg.mxu0
    %3975 = vmatpush.bf16.msra.mxu0 %v2808
    %3976 = vmatpush.bf16.msra.mxu0 %v2792
    %3977 = vmatpush.bf16.msra.mxu0 %v2776
    %3978 = vmatpush.bf16.msra.mxu0 %v2760
    %3979 = vmatpush.bf16.msra.mxu0 %v2744
    %3980 = vmatpush.bf16.msra.mxu0 %v2728
    %3981 = vmatpush.bf16.msra.mxu0 %v2712
    %3982 = vmatpush.bf16.msra.mxu0 %v2696
    %3983 = vmatmul.bf16.gmra.mxu0 %v603
    %v3984 = vpop.f32.mrf.mxu0
    %v3985 = vadd.f32 %v1128, %v3984
    %v3986 = vpop.f32.mrf.mxu0
    %3987 = vdwg.mxu0
    %3988 = vmatpush.bf16.msra.mxu0 %v2936
    %3989 = vmatpush.bf16.msra.mxu0 %v2920
    %3990 = vmatpush.bf16.msra.mxu0 %v2904
    %3991 = vmatpush.bf16.msra.mxu0 %v2888
    %3992 = vmatpush.bf16.msra.mxu0 %v2872
    %3993 = vmatpush.bf16.msra.mxu0 %v2856
    %3994 = vmatpush.bf16.msra.mxu0 %v2840
    %3995 = vmatpush.bf16.msra.mxu0 %v2824
    %3996 = vmatmul.bf16.gmra.mxu0 %v604
    %v3997 = vpop.f32.mrf.mxu0
    %v3998 = vadd.f32 %v3985, %v3997
    %v3999 = vpop.f32.mrf.mxu0
    %4000 = vdwg.mxu0
    %4001 = vmatpush.bf16.msra.mxu0 %v3064
    %4002 = vmatpush.bf16.msra.mxu0 %v3048
    %4003 = vmatpush.bf16.msra.mxu0 %v3032
    %4004 = vmatpush.bf16.msra.mxu0 %v3016
    %4005 = vmatpush.bf16.msra.mxu0 %v3000
    %4006 = vmatpush.bf16.msra.mxu0 %v2984
    %4007 = vmatpush.bf16.msra.mxu0 %v2968
    %4008 = vmatpush.bf16.msra.mxu0 %v2952
    %4009 = vmatmul.bf16.gmra.mxu0 %v605
    %v4010 = vpop.f32.mrf.mxu0
    %v4011 = vadd.f32 %v3998, %v4010
    %v4012 = vpop.f32.mrf.mxu0
    %4013 = vdwg.mxu0
    %4014 = vmatpush.bf16.msra.mxu0 %v3192
    %4015 = vmatpush.bf16.msra.mxu0 %v3176
    %4016 = vmatpush.bf16.msra.mxu0 %v3160
    %4017 = vmatpush.bf16.msra.mxu0 %v3144
    %4018 = vmatpush.bf16.msra.mxu0 %v3128
    %4019 = vmatpush.bf16.msra.mxu0 %v3112
    %4020 = vmatpush.bf16.msra.mxu0 %v3096
    %4021 = vmatpush.bf16.msra.mxu0 %v3080
    %4022 = vmatmul.bf16.gmra.mxu0 %v606
    %v4023 = vpop.f32.mrf.mxu0
    %v4024 = vadd.f32 %v4011, %v4023
    %v4025 = vpop.f32.mrf.mxu0
    %4026 = vdwg.mxu0
    %4027 = vmatpush.bf16.msra.mxu0 %v2809
    %4028 = vmatpush.bf16.msra.mxu0 %v2793
    %4029 = vmatpush.bf16.msra.mxu0 %v2777
    %4030 = vmatpush.bf16.msra.mxu0 %v2761
    %4031 = vmatpush.bf16.msra.mxu0 %v2745
    %4032 = vmatpush.bf16.msra.mxu0 %v2729
    %4033 = vmatpush.bf16.msra.mxu0 %v2713
    %4034 = vmatpush.bf16.msra.mxu0 %v2697
    %4035 = vmatmul.bf16.gmra.mxu0 %v603
    %v4036 = vpop.f32.mrf.mxu0
    %v4037 = vadd.f32 %v1129, %v4036
    %v4038 = vpop.f32.mrf.mxu0
    %4039 = vdwg.mxu0
    %4040 = vmatpush.bf16.msra.mxu0 %v2937
    %4041 = vmatpush.bf16.msra.mxu0 %v2921
    %4042 = vmatpush.bf16.msra.mxu0 %v2905
    %4043 = vmatpush.bf16.msra.mxu0 %v2889
    %4044 = vmatpush.bf16.msra.mxu0 %v2873
    %4045 = vmatpush.bf16.msra.mxu0 %v2857
    %4046 = vmatpush.bf16.msra.mxu0 %v2841
    %4047 = vmatpush.bf16.msra.mxu0 %v2825
    %4048 = vmatmul.bf16.gmra.mxu0 %v604
    %v4049 = vpop.f32.mrf.mxu0
    %v4050 = vadd.f32 %v4037, %v4049
    %v4051 = vpop.f32.mrf.mxu0
    %4052 = vdwg.mxu0
    %4053 = vmatpush.bf16.msra.mxu0 %v3065
    %4054 = vmatpush.bf16.msra.mxu0 %v3049
    %4055 = vmatpush.bf16.msra.mxu0 %v3033
    %4056 = vmatpush.bf16.msra.mxu0 %v3017
    %4057 = vmatpush.bf16.msra.mxu0 %v3001
    %4058 = vmatpush.bf16.msra.mxu0 %v2985
    %4059 = vmatpush.bf16.msra.mxu0 %v2969
    %4060 = vmatpush.bf16.msra.mxu0 %v2953
    %4061 = vmatmul.bf16.gmra.mxu0 %v605
    %v4062 = vpop.f32.mrf.mxu0
    %v4063 = vadd.f32 %v4050, %v4062
    %v4064 = vpop.f32.mrf.mxu0
    %4065 = vdwg.mxu0
    %4066 = vmatpush.bf16.msra.mxu0 %v3193
    %4067 = vmatpush.bf16.msra.mxu0 %v3177
    %4068 = vmatpush.bf16.msra.mxu0 %v3161
    %4069 = vmatpush.bf16.msra.mxu0 %v3145
    %4070 = vmatpush.bf16.msra.mxu0 %v3129
    %4071 = vmatpush.bf16.msra.mxu0 %v3113
    %4072 = vmatpush.bf16.msra.mxu0 %v3097
    %4073 = vmatpush.bf16.msra.mxu0 %v3081
    %4074 = vmatmul.bf16.gmra.mxu0 %v606
    %v4075 = vpop.f32.mrf.mxu0
    %v4076 = vadd.f32 %v4063, %v4075
    %v4077 = vpop.f32.mrf.mxu0
    %4078 = vdwg.mxu0
    %4079 = vmatpush.bf16.msra.mxu0 %v2810
    %4080 = vmatpush.bf16.msra.mxu0 %v2794
    %4081 = vmatpush.bf16.msra.mxu0 %v2778
    %4082 = vmatpush.bf16.msra.mxu0 %v2762
    %4083 = vmatpush.bf16.msra.mxu0 %v2746
    %4084 = vmatpush.bf16.msra.mxu0 %v2730
    %4085 = vmatpush.bf16.msra.mxu0 %v2714
    %4086 = vmatpush.bf16.msra.mxu0 %v2698
    %4087 = vmatmul.bf16.gmra.mxu0 %v603
    %v4088 = vpop.f32.mrf.mxu0
    %v4089 = vadd.f32 %v1130, %v4088
    %v4090 = vpop.f32.mrf.mxu0
    %4091 = vdwg.mxu0
    %4092 = vmatpush.bf16.msra.mxu0 %v2938
    %4093 = vmatpush.bf16.msra.mxu0 %v2922
    %4094 = vmatpush.bf16.msra.mxu0 %v2906
    %4095 = vmatpush.bf16.msra.mxu0 %v2890
    %4096 = vmatpush.bf16.msra.mxu0 %v2874
    %4097 = vmatpush.bf16.msra.mxu0 %v2858
    %4098 = vmatpush.bf16.msra.mxu0 %v2842
    %4099 = vmatpush.bf16.msra.mxu0 %v2826
    %4100 = vmatmul.bf16.gmra.mxu0 %v604
    %v4101 = vpop.f32.mrf.mxu0
    %v4102 = vadd.f32 %v4089, %v4101
    %v4103 = vpop.f32.mrf.mxu0
    %4104 = vdwg.mxu0
    %4105 = vmatpush.bf16.msra.mxu0 %v3066
    %4106 = vmatpush.bf16.msra.mxu0 %v3050
    %4107 = vmatpush.bf16.msra.mxu0 %v3034
    %4108 = vmatpush.bf16.msra.mxu0 %v3018
    %4109 = vmatpush.bf16.msra.mxu0 %v3002
    %4110 = vmatpush.bf16.msra.mxu0 %v2986
    %4111 = vmatpush.bf16.msra.mxu0 %v2970
    %4112 = vmatpush.bf16.msra.mxu0 %v2954
    %4113 = vmatmul.bf16.gmra.mxu0 %v605
    %v4114 = vpop.f32.mrf.mxu0
    %v4115 = vadd.f32 %v4102, %v4114
    %v4116 = vpop.f32.mrf.mxu0
    %4117 = vdwg.mxu0
    %4118 = vmatpush.bf16.msra.mxu0 %v3194
    %4119 = vmatpush.bf16.msra.mxu0 %v3178
    %4120 = vmatpush.bf16.msra.mxu0 %v3162
    %4121 = vmatpush.bf16.msra.mxu0 %v3146
    %4122 = vmatpush.bf16.msra.mxu0 %v3130
    %4123 = vmatpush.bf16.msra.mxu0 %v3114
    %4124 = vmatpush.bf16.msra.mxu0 %v3098
    %4125 = vmatpush.bf16.msra.mxu0 %v3082
    %4126 = vmatmul.bf16.gmra.mxu0 %v606
    %v4127 = vpop.f32.mrf.mxu0
    %v4128 = vadd.f32 %v4115, %v4127
    %v4129 = vpop.f32.mrf.mxu0
    %4130 = vdwg.mxu0
    %4131 = vmatpush.bf16.msra.mxu0 %v2811
    %4132 = vmatpush.bf16.msra.mxu0 %v2795
    %4133 = vmatpush.bf16.msra.mxu0 %v2779
    %4134 = vmatpush.bf16.msra.mxu0 %v2763
    %4135 = vmatpush.bf16.msra.mxu0 %v2747
    %4136 = vmatpush.bf16.msra.mxu0 %v2731
    %4137 = vmatpush.bf16.msra.mxu0 %v2715
    %4138 = vmatpush.bf16.msra.mxu0 %v2699
    %4139 = vmatmul.bf16.gmra.mxu0 %v603
    %v4140 = vpop.f32.mrf.mxu0
    %v4141 = vadd.f32 %v1131, %v4140
    %v4142 = vpop.f32.mrf.mxu0
    %4143 = vdwg.mxu0
    %4144 = vmatpush.bf16.msra.mxu0 %v2939
    %4145 = vmatpush.bf16.msra.mxu0 %v2923
    %4146 = vmatpush.bf16.msra.mxu0 %v2907
    %4147 = vmatpush.bf16.msra.mxu0 %v2891
    %4148 = vmatpush.bf16.msra.mxu0 %v2875
    %4149 = vmatpush.bf16.msra.mxu0 %v2859
    %4150 = vmatpush.bf16.msra.mxu0 %v2843
    %4151 = vmatpush.bf16.msra.mxu0 %v2827
    %4152 = vmatmul.bf16.gmra.mxu0 %v604
    %v4153 = vpop.f32.mrf.mxu0
    %v4154 = vadd.f32 %v4141, %v4153
    %v4155 = vpop.f32.mrf.mxu0
    %4156 = vdwg.mxu0
    %4157 = vmatpush.bf16.msra.mxu0 %v3067
    %4158 = vmatpush.bf16.msra.mxu0 %v3051
    %4159 = vmatpush.bf16.msra.mxu0 %v3035
    %4160 = vmatpush.bf16.msra.mxu0 %v3019
    %4161 = vmatpush.bf16.msra.mxu0 %v3003
    %4162 = vmatpush.bf16.msra.mxu0 %v2987
    %4163 = vmatpush.bf16.msra.mxu0 %v2971
    %4164 = vmatpush.bf16.msra.mxu0 %v2955
    %4165 = vmatmul.bf16.gmra.mxu0 %v605
    %v4166 = vpop.f32.mrf.mxu0
    %v4167 = vadd.f32 %v4154, %v4166
    %v4168 = vpop.f32.mrf.mxu0
    %4169 = vdwg.mxu0
    %4170 = vmatpush.bf16.msra.mxu0 %v3195
    %4171 = vmatpush.bf16.msra.mxu0 %v3179
    %4172 = vmatpush.bf16.msra.mxu0 %v3163
    %4173 = vmatpush.bf16.msra.mxu0 %v3147
    %4174 = vmatpush.bf16.msra.mxu0 %v3131
    %4175 = vmatpush.bf16.msra.mxu0 %v3115
    %4176 = vmatpush.bf16.msra.mxu0 %v3099
    %4177 = vmatpush.bf16.msra.mxu0 %v3083
    %4178 = vmatmul.bf16.gmra.mxu0 %v606
    %v4179 = vpop.f32.mrf.mxu0
    %v4180 = vadd.f32 %v4167, %v4179
    %v4181 = vpop.f32.mrf.mxu0
    %4182 = vdwg.mxu0
    %4183 = vmatpush.bf16.msra.mxu0 %v2812
    %4184 = vmatpush.bf16.msra.mxu0 %v2796
    %4185 = vmatpush.bf16.msra.mxu0 %v2780
    %4186 = vmatpush.bf16.msra.mxu0 %v2764
    %4187 = vmatpush.bf16.msra.mxu0 %v2748
    %4188 = vmatpush.bf16.msra.mxu0 %v2732
    %4189 = vmatpush.bf16.msra.mxu0 %v2716
    %4190 = vmatpush.bf16.msra.mxu0 %v2700
    %4191 = vmatmul.bf16.gmra.mxu0 %v603
    %v4192 = vpop.f32.mrf.mxu0
    %v4193 = vadd.f32 %v1132, %v4192
    %v4194 = vpop.f32.mrf.mxu0
    %4195 = vdwg.mxu0
    %4196 = vmatpush.bf16.msra.mxu0 %v2940
    %4197 = vmatpush.bf16.msra.mxu0 %v2924
    %4198 = vmatpush.bf16.msra.mxu0 %v2908
    %4199 = vmatpush.bf16.msra.mxu0 %v2892
    %4200 = vmatpush.bf16.msra.mxu0 %v2876
    %4201 = vmatpush.bf16.msra.mxu0 %v2860
    %4202 = vmatpush.bf16.msra.mxu0 %v2844
    %4203 = vmatpush.bf16.msra.mxu0 %v2828
    %4204 = vmatmul.bf16.gmra.mxu0 %v604
    %v4205 = vpop.f32.mrf.mxu0
    %v4206 = vadd.f32 %v4193, %v4205
    %v4207 = vpop.f32.mrf.mxu0
    %4208 = vdwg.mxu0
    %4209 = vmatpush.bf16.msra.mxu0 %v3068
    %4210 = vmatpush.bf16.msra.mxu0 %v3052
    %4211 = vmatpush.bf16.msra.mxu0 %v3036
    %4212 = vmatpush.bf16.msra.mxu0 %v3020
    %4213 = vmatpush.bf16.msra.mxu0 %v3004
    %4214 = vmatpush.bf16.msra.mxu0 %v2988
    %4215 = vmatpush.bf16.msra.mxu0 %v2972
    %4216 = vmatpush.bf16.msra.mxu0 %v2956
    %4217 = vmatmul.bf16.gmra.mxu0 %v605
    %v4218 = vpop.f32.mrf.mxu0
    %v4219 = vadd.f32 %v4206, %v4218
    %v4220 = vpop.f32.mrf.mxu0
    %4221 = vdwg.mxu0
    %4222 = vmatpush.bf16.msra.mxu0 %v3196
    %4223 = vmatpush.bf16.msra.mxu0 %v3180
    %4224 = vmatpush.bf16.msra.mxu0 %v3164
    %4225 = vmatpush.bf16.msra.mxu0 %v3148
    %4226 = vmatpush.bf16.msra.mxu0 %v3132
    %4227 = vmatpush.bf16.msra.mxu0 %v3116
    %4228 = vmatpush.bf16.msra.mxu0 %v3100
    %4229 = vmatpush.bf16.msra.mxu0 %v3084
    %4230 = vmatmul.bf16.gmra.mxu0 %v606
    %v4231 = vpop.f32.mrf.mxu0
    %v4232 = vadd.f32 %v4219, %v4231
    %v4233 = vpop.f32.mrf.mxu0
    %4234 = vdwg.mxu0
    %4235 = vmatpush.bf16.msra.mxu0 %v2813
    %4236 = vmatpush.bf16.msra.mxu0 %v2797
    %4237 = vmatpush.bf16.msra.mxu0 %v2781
    %4238 = vmatpush.bf16.msra.mxu0 %v2765
    %4239 = vmatpush.bf16.msra.mxu0 %v2749
    %4240 = vmatpush.bf16.msra.mxu0 %v2733
    %4241 = vmatpush.bf16.msra.mxu0 %v2717
    %4242 = vmatpush.bf16.msra.mxu0 %v2701
    %4243 = vmatmul.bf16.gmra.mxu0 %v603
    %v4244 = vpop.f32.mrf.mxu0
    %v4245 = vadd.f32 %v1133, %v4244
    %v4246 = vpop.f32.mrf.mxu0
    %4247 = vdwg.mxu0
    %4248 = vmatpush.bf16.msra.mxu0 %v2941
    %4249 = vmatpush.bf16.msra.mxu0 %v2925
    %4250 = vmatpush.bf16.msra.mxu0 %v2909
    %4251 = vmatpush.bf16.msra.mxu0 %v2893
    %4252 = vmatpush.bf16.msra.mxu0 %v2877
    %4253 = vmatpush.bf16.msra.mxu0 %v2861
    %4254 = vmatpush.bf16.msra.mxu0 %v2845
    %4255 = vmatpush.bf16.msra.mxu0 %v2829
    %4256 = vmatmul.bf16.gmra.mxu0 %v604
    %v4257 = vpop.f32.mrf.mxu0
    %v4258 = vadd.f32 %v4245, %v4257
    %v4259 = vpop.f32.mrf.mxu0
    %4260 = vdwg.mxu0
    %4261 = vmatpush.bf16.msra.mxu0 %v3069
    %4262 = vmatpush.bf16.msra.mxu0 %v3053
    %4263 = vmatpush.bf16.msra.mxu0 %v3037
    %4264 = vmatpush.bf16.msra.mxu0 %v3021
    %4265 = vmatpush.bf16.msra.mxu0 %v3005
    %4266 = vmatpush.bf16.msra.mxu0 %v2989
    %4267 = vmatpush.bf16.msra.mxu0 %v2973
    %4268 = vmatpush.bf16.msra.mxu0 %v2957
    %4269 = vmatmul.bf16.gmra.mxu0 %v605
    %v4270 = vpop.f32.mrf.mxu0
    %v4271 = vadd.f32 %v4258, %v4270
    %v4272 = vpop.f32.mrf.mxu0
    %4273 = vdwg.mxu0
    %4274 = vmatpush.bf16.msra.mxu0 %v3197
    %4275 = vmatpush.bf16.msra.mxu0 %v3181
    %4276 = vmatpush.bf16.msra.mxu0 %v3165
    %4277 = vmatpush.bf16.msra.mxu0 %v3149
    %4278 = vmatpush.bf16.msra.mxu0 %v3133
    %4279 = vmatpush.bf16.msra.mxu0 %v3117
    %4280 = vmatpush.bf16.msra.mxu0 %v3101
    %4281 = vmatpush.bf16.msra.mxu0 %v3085
    %4282 = vmatmul.bf16.gmra.mxu0 %v606
    %v4283 = vpop.f32.mrf.mxu0
    %v4284 = vadd.f32 %v4271, %v4283
    %v4285 = vpop.f32.mrf.mxu0
    %4286 = vdwg.mxu0
    %4287 = vmatpush.bf16.msra.mxu0 %v2814
    %4288 = vmatpush.bf16.msra.mxu0 %v2798
    %4289 = vmatpush.bf16.msra.mxu0 %v2782
    %4290 = vmatpush.bf16.msra.mxu0 %v2766
    %4291 = vmatpush.bf16.msra.mxu0 %v2750
    %4292 = vmatpush.bf16.msra.mxu0 %v2734
    %4293 = vmatpush.bf16.msra.mxu0 %v2718
    %4294 = vmatpush.bf16.msra.mxu0 %v2702
    %4295 = vmatmul.bf16.gmra.mxu0 %v603
    %v4296 = vpop.f32.mrf.mxu0
    %v4297 = vadd.f32 %v1134, %v4296
    %v4298 = vpop.f32.mrf.mxu0
    %4299 = vdwg.mxu0
    %4300 = vmatpush.bf16.msra.mxu0 %v2942
    %4301 = vmatpush.bf16.msra.mxu0 %v2926
    %4302 = vmatpush.bf16.msra.mxu0 %v2910
    %4303 = vmatpush.bf16.msra.mxu0 %v2894
    %4304 = vmatpush.bf16.msra.mxu0 %v2878
    %4305 = vmatpush.bf16.msra.mxu0 %v2862
    %4306 = vmatpush.bf16.msra.mxu0 %v2846
    %4307 = vmatpush.bf16.msra.mxu0 %v2830
    %4308 = vmatmul.bf16.gmra.mxu0 %v604
    %v4309 = vpop.f32.mrf.mxu0
    %v4310 = vadd.f32 %v4297, %v4309
    %v4311 = vpop.f32.mrf.mxu0
    %4312 = vdwg.mxu0
    %4313 = vmatpush.bf16.msra.mxu0 %v3070
    %4314 = vmatpush.bf16.msra.mxu0 %v3054
    %4315 = vmatpush.bf16.msra.mxu0 %v3038
    %4316 = vmatpush.bf16.msra.mxu0 %v3022
    %4317 = vmatpush.bf16.msra.mxu0 %v3006
    %4318 = vmatpush.bf16.msra.mxu0 %v2990
    %4319 = vmatpush.bf16.msra.mxu0 %v2974
    %4320 = vmatpush.bf16.msra.mxu0 %v2958
    %4321 = vmatmul.bf16.gmra.mxu0 %v605
    %v4322 = vpop.f32.mrf.mxu0
    %v4323 = vadd.f32 %v4310, %v4322
    %v4324 = vpop.f32.mrf.mxu0
    %4325 = vdwg.mxu0
    %4326 = vmatpush.bf16.msra.mxu0 %v3198
    %4327 = vmatpush.bf16.msra.mxu0 %v3182
    %4328 = vmatpush.bf16.msra.mxu0 %v3166
    %4329 = vmatpush.bf16.msra.mxu0 %v3150
    %4330 = vmatpush.bf16.msra.mxu0 %v3134
    %4331 = vmatpush.bf16.msra.mxu0 %v3118
    %4332 = vmatpush.bf16.msra.mxu0 %v3102
    %4333 = vmatpush.bf16.msra.mxu0 %v3086
    %4334 = vmatmul.bf16.gmra.mxu0 %v606
    %v4335 = vpop.f32.mrf.mxu0
    %v4336 = vadd.f32 %v4323, %v4335
    %v4337 = vpop.f32.mrf.mxu0
    %4338 = vdwg.mxu0
    %4339 = vmatpush.bf16.msra.mxu0 %v2815
    %4340 = vmatpush.bf16.msra.mxu0 %v2799
    %4341 = vmatpush.bf16.msra.mxu0 %v2783
    %4342 = vmatpush.bf16.msra.mxu0 %v2767
    %4343 = vmatpush.bf16.msra.mxu0 %v2751
    %4344 = vmatpush.bf16.msra.mxu0 %v2735
    %4345 = vmatpush.bf16.msra.mxu0 %v2719
    %4346 = vmatpush.bf16.msra.mxu0 %v2703
    %4347 = vmatmul.bf16.gmra.mxu0 %v603
    %v4348 = vpop.f32.mrf.mxu0
    %v4349 = vadd.f32 %v1135, %v4348
    %v4350 = vpop.f32.mrf.mxu0
    %4351 = vdwg.mxu0
    %4352 = vmatpush.bf16.msra.mxu0 %v2943
    %4353 = vmatpush.bf16.msra.mxu0 %v2927
    %4354 = vmatpush.bf16.msra.mxu0 %v2911
    %4355 = vmatpush.bf16.msra.mxu0 %v2895
    %4356 = vmatpush.bf16.msra.mxu0 %v2879
    %4357 = vmatpush.bf16.msra.mxu0 %v2863
    %4358 = vmatpush.bf16.msra.mxu0 %v2847
    %4359 = vmatpush.bf16.msra.mxu0 %v2831
    %4360 = vmatmul.bf16.gmra.mxu0 %v604
    %v4361 = vpop.f32.mrf.mxu0
    %v4362 = vadd.f32 %v4349, %v4361
    %v4363 = vpop.f32.mrf.mxu0
    %4364 = vdwg.mxu0
    %4365 = vmatpush.bf16.msra.mxu0 %v3071
    %4366 = vmatpush.bf16.msra.mxu0 %v3055
    %4367 = vmatpush.bf16.msra.mxu0 %v3039
    %4368 = vmatpush.bf16.msra.mxu0 %v3023
    %4369 = vmatpush.bf16.msra.mxu0 %v3007
    %4370 = vmatpush.bf16.msra.mxu0 %v2991
    %4371 = vmatpush.bf16.msra.mxu0 %v2975
    %4372 = vmatpush.bf16.msra.mxu0 %v2959
    %4373 = vmatmul.bf16.gmra.mxu0 %v605
    %v4374 = vpop.f32.mrf.mxu0
    %v4375 = vadd.f32 %v4362, %v4374
    %v4376 = vpop.f32.mrf.mxu0
    %4377 = vdwg.mxu0
    %4378 = vmatpush.bf16.msra.mxu0 %v3199
    %4379 = vmatpush.bf16.msra.mxu0 %v3183
    %4380 = vmatpush.bf16.msra.mxu0 %v3167
    %4381 = vmatpush.bf16.msra.mxu0 %v3151
    %4382 = vmatpush.bf16.msra.mxu0 %v3135
    %4383 = vmatpush.bf16.msra.mxu0 %v3119
    %4384 = vmatpush.bf16.msra.mxu0 %v3103
    %4385 = vmatpush.bf16.msra.mxu0 %v3087
    %4386 = vmatmul.bf16.gmra.mxu0 %v606
    %v4387 = vpop.f32.mrf.mxu0
    %v4388 = vadd.f32 %v4375, %v4387
    %v4389 = vpop.f32.mrf.mxu0
    %4390 = vdwg.mxu0
    %4391 = vmatpush.bf16.msra.mxu0 %v2816
    %4392 = vmatpush.bf16.msra.mxu0 %v2800
    %4393 = vmatpush.bf16.msra.mxu0 %v2784
    %4394 = vmatpush.bf16.msra.mxu0 %v2768
    %4395 = vmatpush.bf16.msra.mxu0 %v2752
    %4396 = vmatpush.bf16.msra.mxu0 %v2736
    %4397 = vmatpush.bf16.msra.mxu0 %v2720
    %4398 = vmatpush.bf16.msra.mxu0 %v2704
    %4399 = vmatmul.bf16.gmra.mxu0 %v603
    %v4400 = vpop.f32.mrf.mxu0
    %v4401 = vadd.f32 %v1136, %v4400
    %v4402 = vpop.f32.mrf.mxu0
    %4403 = vdwg.mxu0
    %4404 = vmatpush.bf16.msra.mxu0 %v2944
    %4405 = vmatpush.bf16.msra.mxu0 %v2928
    %4406 = vmatpush.bf16.msra.mxu0 %v2912
    %4407 = vmatpush.bf16.msra.mxu0 %v2896
    %4408 = vmatpush.bf16.msra.mxu0 %v2880
    %4409 = vmatpush.bf16.msra.mxu0 %v2864
    %4410 = vmatpush.bf16.msra.mxu0 %v2848
    %4411 = vmatpush.bf16.msra.mxu0 %v2832
    %4412 = vmatmul.bf16.gmra.mxu0 %v604
    %v4413 = vpop.f32.mrf.mxu0
    %v4414 = vadd.f32 %v4401, %v4413
    %v4415 = vpop.f32.mrf.mxu0
    %4416 = vdwg.mxu0
    %4417 = vmatpush.bf16.msra.mxu0 %v3072
    %4418 = vmatpush.bf16.msra.mxu0 %v3056
    %4419 = vmatpush.bf16.msra.mxu0 %v3040
    %4420 = vmatpush.bf16.msra.mxu0 %v3024
    %4421 = vmatpush.bf16.msra.mxu0 %v3008
    %4422 = vmatpush.bf16.msra.mxu0 %v2992
    %4423 = vmatpush.bf16.msra.mxu0 %v2976
    %4424 = vmatpush.bf16.msra.mxu0 %v2960
    %4425 = vmatmul.bf16.gmra.mxu0 %v605
    %v4426 = vpop.f32.mrf.mxu0
    %v4427 = vadd.f32 %v4414, %v4426
    %v4428 = vpop.f32.mrf.mxu0
    %4429 = vdwg.mxu0
    %4430 = vmatpush.bf16.msra.mxu0 %v3200
    %4431 = vmatpush.bf16.msra.mxu0 %v3184
    %4432 = vmatpush.bf16.msra.mxu0 %v3168
    %4433 = vmatpush.bf16.msra.mxu0 %v3152
    %4434 = vmatpush.bf16.msra.mxu0 %v3136
    %4435 = vmatpush.bf16.msra.mxu0 %v3120
    %4436 = vmatpush.bf16.msra.mxu0 %v3104
    %4437 = vmatpush.bf16.msra.mxu0 %v3088
    %4438 = vmatmul.bf16.gmra.mxu0 %v606
    %v4439 = vpop.f32.mrf.mxu0
    %v4440 = vadd.f32 %v4427, %v4439
    %v4441 = vpop.f32.mrf.mxu0
    %4442 = vdwg.mxu0
    %4443 = vmatpush.bf16.msra.mxu0 %v2817
    %4444 = vmatpush.bf16.msra.mxu0 %v2801
    %4445 = vmatpush.bf16.msra.mxu0 %v2785
    %4446 = vmatpush.bf16.msra.mxu0 %v2769
    %4447 = vmatpush.bf16.msra.mxu0 %v2753
    %4448 = vmatpush.bf16.msra.mxu0 %v2737
    %4449 = vmatpush.bf16.msra.mxu0 %v2721
    %4450 = vmatpush.bf16.msra.mxu0 %v2705
    %4451 = vmatmul.bf16.gmra.mxu0 %v603
    %v4452 = vpop.f32.mrf.mxu0
    %v4453 = vadd.f32 %v1137, %v4452
    %v4454 = vpop.f32.mrf.mxu0
    %4455 = vdwg.mxu0
    %4456 = vmatpush.bf16.msra.mxu0 %v2945
    %4457 = vmatpush.bf16.msra.mxu0 %v2929
    %4458 = vmatpush.bf16.msra.mxu0 %v2913
    %4459 = vmatpush.bf16.msra.mxu0 %v2897
    %4460 = vmatpush.bf16.msra.mxu0 %v2881
    %4461 = vmatpush.bf16.msra.mxu0 %v2865
    %4462 = vmatpush.bf16.msra.mxu0 %v2849
    %4463 = vmatpush.bf16.msra.mxu0 %v2833
    %4464 = vmatmul.bf16.gmra.mxu0 %v604
    %v4465 = vpop.f32.mrf.mxu0
    %v4466 = vadd.f32 %v4453, %v4465
    %v4467 = vpop.f32.mrf.mxu0
    %4468 = vdwg.mxu0
    %4469 = vmatpush.bf16.msra.mxu0 %v3073
    %4470 = vmatpush.bf16.msra.mxu0 %v3057
    %4471 = vmatpush.bf16.msra.mxu0 %v3041
    %4472 = vmatpush.bf16.msra.mxu0 %v3025
    %4473 = vmatpush.bf16.msra.mxu0 %v3009
    %4474 = vmatpush.bf16.msra.mxu0 %v2993
    %4475 = vmatpush.bf16.msra.mxu0 %v2977
    %4476 = vmatpush.bf16.msra.mxu0 %v2961
    %4477 = vmatmul.bf16.gmra.mxu0 %v605
    %v4478 = vpop.f32.mrf.mxu0
    %v4479 = vadd.f32 %v4466, %v4478
    %v4480 = vpop.f32.mrf.mxu0
    %4481 = vdwg.mxu0
    %4482 = vmatpush.bf16.msra.mxu0 %v3201
    %4483 = vmatpush.bf16.msra.mxu0 %v3185
    %4484 = vmatpush.bf16.msra.mxu0 %v3169
    %4485 = vmatpush.bf16.msra.mxu0 %v3153
    %4486 = vmatpush.bf16.msra.mxu0 %v3137
    %4487 = vmatpush.bf16.msra.mxu0 %v3121
    %4488 = vmatpush.bf16.msra.mxu0 %v3105
    %4489 = vmatpush.bf16.msra.mxu0 %v3089
    %4490 = vmatmul.bf16.gmra.mxu0 %v606
    %v4491 = vpop.f32.mrf.mxu0
    %v4492 = vadd.f32 %v4479, %v4491
    %v4493 = vpop.f32.mrf.mxu0
    %4494 = vdwg.mxu0
    %4495 = vmatpush.bf16.msra.mxu0 %v2818
    %4496 = vmatpush.bf16.msra.mxu0 %v2802
    %4497 = vmatpush.bf16.msra.mxu0 %v2786
    %4498 = vmatpush.bf16.msra.mxu0 %v2770
    %4499 = vmatpush.bf16.msra.mxu0 %v2754
    %4500 = vmatpush.bf16.msra.mxu0 %v2738
    %4501 = vmatpush.bf16.msra.mxu0 %v2722
    %4502 = vmatpush.bf16.msra.mxu0 %v2706
    %4503 = vmatmul.bf16.gmra.mxu0 %v603
    %v4504 = vpop.f32.mrf.mxu0
    %v4505 = vadd.f32 %v1138, %v4504
    %v4506 = vpop.f32.mrf.mxu0
    %4507 = vdwg.mxu0
    %4508 = vmatpush.bf16.msra.mxu0 %v2946
    %4509 = vmatpush.bf16.msra.mxu0 %v2930
    %4510 = vmatpush.bf16.msra.mxu0 %v2914
    %4511 = vmatpush.bf16.msra.mxu0 %v2898
    %4512 = vmatpush.bf16.msra.mxu0 %v2882
    %4513 = vmatpush.bf16.msra.mxu0 %v2866
    %4514 = vmatpush.bf16.msra.mxu0 %v2850
    %4515 = vmatpush.bf16.msra.mxu0 %v2834
    %4516 = vmatmul.bf16.gmra.mxu0 %v604
    %v4517 = vpop.f32.mrf.mxu0
    %v4518 = vadd.f32 %v4505, %v4517
    %v4519 = vpop.f32.mrf.mxu0
    %4520 = vdwg.mxu0
    %4521 = vmatpush.bf16.msra.mxu0 %v3074
    %4522 = vmatpush.bf16.msra.mxu0 %v3058
    %4523 = vmatpush.bf16.msra.mxu0 %v3042
    %4524 = vmatpush.bf16.msra.mxu0 %v3026
    %4525 = vmatpush.bf16.msra.mxu0 %v3010
    %4526 = vmatpush.bf16.msra.mxu0 %v2994
    %4527 = vmatpush.bf16.msra.mxu0 %v2978
    %4528 = vmatpush.bf16.msra.mxu0 %v2962
    %4529 = vmatmul.bf16.gmra.mxu0 %v605
    %v4530 = vpop.f32.mrf.mxu0
    %v4531 = vadd.f32 %v4518, %v4530
    %v4532 = vpop.f32.mrf.mxu0
    %4533 = vdwg.mxu0
    %4534 = vmatpush.bf16.msra.mxu0 %v3202
    %4535 = vmatpush.bf16.msra.mxu0 %v3186
    %4536 = vmatpush.bf16.msra.mxu0 %v3170
    %4537 = vmatpush.bf16.msra.mxu0 %v3154
    %4538 = vmatpush.bf16.msra.mxu0 %v3138
    %4539 = vmatpush.bf16.msra.mxu0 %v3122
    %4540 = vmatpush.bf16.msra.mxu0 %v3106
    %4541 = vmatpush.bf16.msra.mxu0 %v3090
    %4542 = vmatmul.bf16.gmra.mxu0 %v606
    %v4543 = vpop.f32.mrf.mxu0
    %v4544 = vadd.f32 %v4531, %v4543
    %v4545 = vpop.f32.mrf.mxu0
    %4546 = vdwg.mxu0
    %4547 = vst [vmem:[#allocation11] sm:$0xff] %v3764
    %4548 = vst [vmem:[#allocation11 + $0x8] sm:$0xff] %v3816
    %4549 = vst [vmem:[#allocation11 + $0x10] sm:$0xff] %v3868
    %4550 = vst [vmem:[#allocation11 + $0x18] sm:$0xff] %v3920
    %4551 = vst [vmem:[#allocation11 + $0x20] sm:$0xff] %v3972
    %4552 = vst [vmem:[#allocation11 + $0x28] sm:$0xff] %v4024
    %4553 = vst [vmem:[#allocation11 + $0x30] sm:$0xff] %v4076
    %4554 = vst [vmem:[#allocation11 + $0x38] sm:$0xff] %v4128
    %4555 = vst [vmem:[#allocation11 + $0x40] sm:$0xff] %v4180
    %4556 = vst [vmem:[#allocation11 + $0x48] sm:$0xff] %v4232
    %4557 = vst [vmem:[#allocation11 + $0x50] sm:$0xff] %v4284
    %4558 = vst [vmem:[#allocation11 + $0x58] sm:$0xff] %v4336
    %4559 = vst [vmem:[#allocation11 + $0x60] sm:$0xff] %v4388
    %4560 = vst [vmem:[#allocation11 + $0x68] sm:$0xff] %v4440
    %4561 = vst [vmem:[#allocation11 + $0x70] sm:$0xff] %v4492
    %4562 = vst [vmem:[#allocation11 + $0x78] sm:$0xff] %v4544
    // Predicated region
    $region42: #{tpu_custom_call.1} parent=1 // pred_check
      _
    $region43: #{tpu_custom_call.1} parent=1 // pred_check_branch
      %4564 = sbr.rel (0) target = $region45
    $region44: #{tpu_custom_call.1} parent=1 // pred_region
      %4566 = vsyncadd [#allocation4], 0
      %s4568 = sshll.u32 [#allocation11], 4
      %s4569 = int_to_ptr.vmem [resolvable:$true] %s4568
      %s4570 = sshll.u32 %s5, 4
      %s4571 = int_to_ptr.hbm [resolvable:$true] %s4570
      %4573 = dma.vmem_to_hbm [thread:$0]  %s4569, 2048, %s4571, [#allocation4]
    $region45: #{tpu_custom_call.1} parent=1 // pred_fallthru
      _
    // Predicated region
    $region46: #{tpu_custom_call.1} parent=1 // pred_check
      _
    $region47: #{tpu_custom_call.1} parent=1 // pred_check_branch
      %4575 = sbr.rel (0) target = $region49
    $region48: #{tpu_custom_call.1} parent=1 // pred_region
      %4577 = dma.done [#allocation4], 2048
    $region49: #{tpu_custom_call.1} parent=1 // pred_fallthru
      _
    %4578 = vsyncpa [#allocation3], 1
    %4579 = vsyncpa [#allocation6], 1
    %4580 = vsyncpa [#allocation9], 1
    %4581 = vsyncpa [#allocation4], 1

</llo_original>
